<compile_context>
chip_gen: v7x
topology: tpu7x:2x2x1
jax: 0.10.0
libtpu: 0.0.40
codegen_flags: <defaults>
</compile_context>

<pallas_src>
import functools

import jax
import jax.numpy as jnp
from jax import lax
from jax.experimental import pallas as pl
from jax.experimental.pallas import tpu as pltpu


# ----------------------------------------------------------------------------- kernel
def _gelu(y):
    # tanh-approx GELU (EUP tanh); matches BERT gelu to ~1e-3
    return 0.5 * y * (1.0 + jnp.tanh(0.7978845608028654 * (y + 0.044715 * y * y * y)))


def _fused_forward_kernel(x_ref, am_ref, eg_ref, eb_ref,
                          wqkv_ref, bqkv_ref, wo_ref, bo_ref,
                          ln1g_ref, ln1b_ref, w1_ref, b1_ref,
                          w2_ref, b2_ref, ln2g_ref, ln2b_ref,
                          cw_ref, cb_ref, o_ref, *, num_heads):
    """Whole forward for ONE batch element (one grid step): emb-LN -> L layers -> classifier."""
    Hb = x_ref.shape[-1]
    L = wqkv_ref.shape[0]
    Dh = Hb // num_heads
    scale = 1.0 / float(Dh) ** 0.5

    def layernorm(h, g, b):
        mu = jnp.mean(h, axis=-1, keepdims=True)
        var = jnp.mean(jnp.square(h - mu), axis=-1, keepdims=True)
        return (h - mu) * lax.rsqrt(var + 1e-12) * g + b

    am = am_ref[0]                                            # (1, S) additive attention mask
    # ---- embedding LayerNorm fused as prologue
    x = layernorm(x_ref[0], eg_ref[...], eb_ref[...])         # (S, Hb) f32

    # ---- L transformer layers, unrolled in-kernel (no per-layer launches / HBM traffic)
    for l in range(L):
        # fused QKV projection: one MXU pass with concatenated [Hb, 3*Hb] weight,
        # f32 accumulation, single cast of the whole activation to bf16.
        qkv = (jnp.dot(x.astype(jnp.bfloat16), wqkv_ref[l],
                       preferred_element_type=jnp.float32) + bqkv_ref[l]
               ).astype(jnp.bfloat16)                          # (S, 3*Hb) bf16

        # batched multi-head attention: stack heads into a leading batch dim and use
        # batched contractions (flash-attention style) instead of per-head dots.
        q = jnp.stack([qkv[:, h * Dh:(h + 1) * Dh] for h in range(num_heads)], axis=0)
        k = jnp.stack([qkv[:, Hb + h * Dh:Hb + (h + 1) * Dh] for h in range(num_heads)], axis=0)
        v = jnp.stack([qkv[:, 2 * Hb + h * Dh:2 * Hb + (h + 1) * Dh] for h in range(num_heads)], axis=0)

        s = jnp.einsum('nqd,nkd->nqk', q, k,
                       preferred_element_type=jnp.float32) * scale    # (NH, S, S) f32
        s = s + am                                                     # broadcast over heads/rows
        s = s - jnp.max(s, axis=-1, keepdims=True)
        p = jnp.exp(s)
        p = p * pl.reciprocal(jnp.sum(p, axis=-1, keepdims=True), approx=True)
        ctx = jnp.einsum('nqk,nkd->nqd', p.astype(jnp.bfloat16), v,
                         preferred_element_type=jnp.float32)           # (NH, S, Dh)
        ctx = jnp.concatenate([ctx[h] for h in range(num_heads)],
                              axis=-1).astype(jnp.bfloat16)            # (S, Hb) bf16

        # output projection + residual + LN1 (f32 elementwise)
        ao = jnp.dot(ctx, wo_ref[l], preferred_element_type=jnp.float32) + bo_ref[l]
        h1 = layernorm(x + ao, ln1g_ref[l], ln1b_ref[l])

        # FFN (gelu) + residual + LN2
        f = jnp.dot(h1.astype(jnp.bfloat16), w1_ref[l],
                    preferred_element_type=jnp.float32) + b1_ref[l]
        f = _gelu(f)
        f = jnp.dot(f.astype(jnp.bfloat16), w2_ref[l],
                    preferred_element_type=jnp.float32) + b2_ref[l]
        x = layernorm(h1 + f, ln2g_ref[l], ln2b_ref[l])

    # ---- classifier fused as epilogue; output is lane-dense (last dim = 128-multiple)
    o_ref[0] = jnp.dot(x.astype(jnp.bfloat16), cw_ref[...],
                       preferred_element_type=jnp.float32) + cb_ref[...]


# ----------------------------------------------------------------------------- wrapper
def fused_forward(emb, addmask, params, num_heads):
    """One pallas_call for the entire encoder + classifier. Grid over batch ("parallel")."""
    B, S, Hb = emb.shape
    L = params["wqkv"].shape[0]
    F = params["w1"].shape[2]
    CPAD = params["cls_w_pad"].shape[1]

    full = lambda shape: pl.BlockSpec(shape, lambda b: (0,) * len(shape))
    kernel = functools.partial(_fused_forward_kernel, num_heads=num_heads)

    return pl.pallas_call(
        kernel,
        grid=(B,),
        in_specs=[
            pl.BlockSpec((1, S, Hb), lambda b: (b, 0, 0)),   # summed embeddings (pre-LN)
            pl.BlockSpec((1, 1, S), lambda b: (b, 0, 0)),    # additive attention mask
            full((1, Hb)), full((1, Hb)),                    # embedding LN gamma/beta
            full((L, Hb, 3 * Hb)), full((L, 1, 3 * Hb)),     # fused QKV weight (bf16) / bias
            full((L, Hb, Hb)), full((L, 1, Hb)),             # O-proj weight (bf16) / bias
            full((L, 1, Hb)), full((L, 1, Hb)),              # LN1 gamma/beta
            full((L, Hb, F)), full((L, 1, F)),               # FFN w1 (bf16) / b1
            full((L, F, Hb)), full((L, 1, Hb)),              # FFN w2 (bf16) / b2
            full((L, 1, Hb)), full((L, 1, Hb)),              # LN2 gamma/beta
            full((Hb, CPAD)), full((1, CPAD)),               # classifier (lane-padded, bf16 weight)
        ],
        out_specs=pl.BlockSpec((1, S, CPAD), lambda b: (b, 0, 0)),
        out_shape=jax.ShapeDtypeStruct((B, S, CPAD), jnp.float32),
        compiler_params=pltpu.CompilerParams(
            dimension_semantics=("parallel",),               # v7x: one batch element per TC
            vmem_limit_bytes=32 * 1024 * 1024),
    )(emb, addmask, params["emb_ln_g"], params["emb_ln_b"],
      params["wqkv"], params["bqkv"], params["wo"], params["bo"],
      params["ln1_g"], params["ln1_b"], params["w1"], params["b1"],
      params["w2"], params["b2"], params["ln2_g"], params["ln2_b"],
      params["cls_w_pad"], params["cls_b_pad"])


# ----------------------------------------------------------------------------- model
def init_params(key, cfg):
    Hb = cfg["bert_hiddensize"]
    He = cfg["hidden_size"]
    V = cfg["vocab_size"]
    S = cfg["max_length"]
    C = cfg["class_num"]
    F = cfg["intermediate_size"]
    L = cfg["num_layers"]
    CPAD = 128 * ((C + 127) // 128)   # lane-dense classifier output width

    keys = iter(jax.random.split(key, 64))
    n = lambda shape, s=0.02: jax.random.normal(next(keys), shape, jnp.float32) * s

    tok_emb = n((V, He)).at[0].set(0.0)   # nn.Embedding(vocab, hidden, padding_idx=0) (dead branch)

    wqkv, wo, w1, w2 = [], [], [], []
    for _ in range(L):
        wqkv.append(jnp.concatenate([n((Hb, Hb)), n((Hb, Hb)), n((Hb, Hb))], axis=1))
        wo.append(n((Hb, Hb)))
        w1.append(n((Hb, F)))
        w2.append(n((F, Hb)))

    cls_w = n((Hb, C))
    cls_w_pad = jnp.zeros((Hb, CPAD), jnp.float32).at[:, :C].set(cls_w).astype(jnp.bfloat16)

    zeros = lambda shape: jnp.zeros(shape, jnp.float32)
    ones = lambda shape: jnp.ones(shape, jnp.float32)

    return dict(
        tok_emb=tok_emb,                        # nn.Embedding for the (discarded) LSTM branch
        word_emb=n((V, Hb)),                    # BERT word embeddings
        pos_emb=n((S, Hb)),                     # BERT position embeddings
        type_emb=n((2, Hb)),                    # BERT token-type embeddings
        emb_ln_g=ones((1, Hb)), emb_ln_b=zeros((1, Hb)),
        wqkv=jnp.stack(wqkv).astype(jnp.bfloat16), bqkv=zeros((L, 1, 3 * Hb)),
        wo=jnp.stack(wo).astype(jnp.bfloat16),     bo=zeros((L, 1, Hb)),
        ln1_g=ones((L, 1, Hb)), ln1_b=zeros((L, 1, Hb)),
        w1=jnp.stack(w1).astype(jnp.bfloat16), b1=zeros((L, 1, F)),
        w2=jnp.stack(w2).astype(jnp.bfloat16), b2=zeros((L, 1, Hb)),
        ln2_g=ones((L, 1, Hb)), ln2_b=zeros((L, 1, Hb)),
        cls_w_pad=cls_w_pad, cls_b_pad=zeros((1, CPAD)),   # classify_bert (lane-padded)
    )


def torch_model_forward(params, cfg, x, target=None, mask_id=None):
    B, S = x.shape
    C = cfg["class_num"]

    # Branch 1 of the reference forward: x1 = embedding(x); x1,_ = LSTM(x1).
    # Its result is never used by the reference forward; under jit it is DCE'd.
    _x1 = params["tok_emb"][x]
    # TODO(synk): BiLSTM over _x1 (sequential recurrence, dead code in reference forward) not implemented.

    if mask_id is None:
        mask_id = jnp.ones((B, S), jnp.int32)
    # additive attention mask precomputed once (0 = attend, -1e9 = masked), shaped (B, 1, S)
    addmask = ((1.0 - mask_id.astype(jnp.float32)) * (-1e9))[:, None, :]

    # BERT input embeddings (gathers + adds stay in plain JAX; XLA fuses them under jit)
    emb = (params["word_emb"][x]
           + params["pos_emb"][:S][None, :, :]
           + params["type_emb"][0][None, None, :])            # (B, S, Hb)

    logits_pad = fused_forward(emb, addmask, params, cfg["num_heads"])   # (B, S, 128) lane-dense
    predict = logits_pad[:, :, :C]

    # target is None and use_crf=False -> return raw logits
    # TODO(synk): CRF loss/decode and CrossEntropyLoss training paths not implemented (inference path only).
    return predict


# ----------------------------------------------------------------------------- main
if __name__ == "__main__":
    cfg = dict(
        hidden_size=16,
        vocab_size=30,
        max_length=8,
        class_num=9,
        num_layers=2,
        bert_hiddensize=32,
        intermediate_size=64,
        num_heads=4,
        use_crf=False,
    )
    B, S = 2, cfg["max_length"]

    key = jax.random.PRNGKey(0)
    k_param, k_tok = jax.random.split(key)
    params = init_params(k_param, cfg)

    x = jax.random.randint(k_tok, (B, S), 1, cfg["vocab_size"], dtype=jnp.int32)
    mask_id = jnp.ones((B, S), dtype=jnp.int32)

    fwd = jax.jit(lambda p, tok, m: torch_model_forward(p, cfg, tok, target=None, mask_id=m))
    predict = jax.block_until_ready(fwd(params, x, mask_id))

    assert predict.shape == (B, S, cfg["class_num"])
    assert bool(jnp.all(jnp.isfinite(predict)))
    print("KERNEL_OK")
</pallas_src>

<mosaic_0001>
module attributes {stable_mosaic.version = 11 : i64} {
  func.func @_fused_forward_kernel(%arg0: i32, %arg1: memref<1x8x32xf32, #tpu.memory_space<vmem>>, %arg2: memref<1x1x8xf32, #tpu.memory_space<vmem>>, %arg3: memref<1x32xf32, #tpu.memory_space<vmem>>, %arg4: memref<1x32xf32, #tpu.memory_space<vmem>>, %arg5: memref<2x32x96xbf16, #tpu.memory_space<vmem>>, %arg6: memref<2x1x96xf32, #tpu.memory_space<vmem>>, %arg7: memref<2x32x32xbf16, #tpu.memory_space<vmem>>, %arg8: memref<2x1x32xf32, #tpu.memory_space<vmem>>, %arg9: memref<2x1x32xf32, #tpu.memory_space<vmem>>, %arg10: memref<2x1x32xf32, #tpu.memory_space<vmem>>, %arg11: memref<2x32x64xbf16, #tpu.memory_space<vmem>>, %arg12: memref<2x1x64xf32, #tpu.memory_space<vmem>>, %arg13: memref<2x64x32xbf16, #tpu.memory_space<vmem>>, %arg14: memref<2x1x32xf32, #tpu.memory_space<vmem>>, %arg15: memref<2x1x32xf32, #tpu.memory_space<vmem>>, %arg16: memref<2x1x32xf32, #tpu.memory_space<vmem>>, %arg17: memref<32x128xbf16, #tpu.memory_space<vmem>>, %arg18: memref<1x128xf32, #tpu.memory_space<vmem>>, %arg19: memref<1x8x128xf32, #tpu.memory_space<vmem>>) attributes {dimension_semantics = [#tpu.dimension_semantics<parallel>], iteration_bounds = array<i64: 2>, scalar_prefetch = 0 : i64, scratch_operands = 0 : i64, tpu.core_type = #tpu.core_type<tc>, window_params = [{transform_indices = @transform_0, window_bounds = array<i64: 1, 8, 32>}, {transform_indices = @transform_1, window_bounds = array<i64: 1, 1, 8>}, {pipeline_mode = #tpu.pipeline_mode<synchronous>, transform_indices = @transform_2, window_bounds = array<i64: 1, 32>}, {pipeline_mode = #tpu.pipeline_mode<synchronous>, transform_indices = @transform_3, window_bounds = array<i64: 1, 32>}, {pipeline_mode = #tpu.pipeline_mode<synchronous>, transform_indices = @transform_4, window_bounds = array<i64: 2, 32, 96>}, {pipeline_mode = #tpu.pipeline_mode<synchronous>, transform_indices = @transform_5, window_bounds = array<i64: 2, 1, 96>}, {pipeline_mode = #tpu.pipeline_mode<synchronous>, transform_indices = @transform_6, window_bounds = array<i64: 2, 32, 32>}, {pipeline_mode = #tpu.pipeline_mode<synchronous>, transform_indices = @transform_7, window_bounds = array<i64: 2, 1, 32>}, {pipeline_mode = #tpu.pipeline_mode<synchronous>, transform_indices = @transform_8, window_bounds = array<i64: 2, 1, 32>}, {pipeline_mode = #tpu.pipeline_mode<synchronous>, transform_indices = @transform_9, window_bounds = array<i64: 2, 1, 32>}, {pipeline_mode = #tpu.pipeline_mode<synchronous>, transform_indices = @transform_10, window_bounds = array<i64: 2, 32, 64>}, {pipeline_mode = #tpu.pipeline_mode<synchronous>, transform_indices = @transform_11, window_bounds = array<i64: 2, 1, 64>}, {pipeline_mode = #tpu.pipeline_mode<synchronous>, transform_indices = @transform_12, window_bounds = array<i64: 2, 64, 32>}, {pipeline_mode = #tpu.pipeline_mode<synchronous>, transform_indices = @transform_13, window_bounds = array<i64: 2, 1, 32>}, {pipeline_mode = #tpu.pipeline_mode<synchronous>, transform_indices = @transform_14, window_bounds = array<i64: 2, 1, 32>}, {pipeline_mode = #tpu.pipeline_mode<synchronous>, transform_indices = @transform_15, window_bounds = array<i64: 2, 1, 32>}, {pipeline_mode = #tpu.pipeline_mode<synchronous>, transform_indices = @transform_16, window_bounds = array<i64: 32, 128>}, {pipeline_mode = #tpu.pipeline_mode<synchronous>, transform_indices = @transform_17, window_bounds = array<i64: 1, 128>}, {transform_indices = @transform_18, window_bounds = array<i64: 1, 8, 128>}]} {
    %c0 = arith.constant 0 : index
    %c0_0 = arith.constant 0 : index
    %c0_1 = arith.constant 0 : index
    %0 = vector.load %arg2[%c0, %c0_0, %c0_1] : memref<1x1x8xf32, #tpu.memory_space<vmem>>, vector<1x1x8xf32>
    %1 = vector.shape_cast %0 : vector<1x1x8xf32> to vector<1x8xf32>
    %c0_2 = arith.constant 0 : index
    %c0_3 = arith.constant 0 : index
    %c0_4 = arith.constant 0 : index
    %2 = vector.load %arg1[%c0_2, %c0_3, %c0_4] : memref<1x8x32xf32, #tpu.memory_space<vmem>>, vector<1x8x32xf32>
    %3 = vector.shape_cast %2 : vector<1x8x32xf32> to vector<8x32xf32>
    %c0_5 = arith.constant 0 : index
    %c0_6 = arith.constant 0 : index
    %4 = vector.load %arg3[%c0_5, %c0_6] : memref<1x32xf32, #tpu.memory_space<vmem>>, vector<1x32xf32>
    %c0_7 = arith.constant 0 : index
    %c0_8 = arith.constant 0 : index
    %5 = vector.load %arg4[%c0_7, %c0_8] : memref<1x32xf32, #tpu.memory_space<vmem>>, vector<1x32xf32>
    %cst = arith.constant dense<0.000000e+00> : vector<8xf32>
    %6 = vector.multi_reduction <add>, %3, %cst [1] : vector<8x32xf32> to vector<8xf32>
    %7 = vector.shape_cast %6 : vector<8xf32> to vector<8x1xf32>
    %cst_9 = arith.constant 3.200000e+01 : f32
    %8 = vector.broadcast %cst_9 : f32 to vector<8x1xf32>
    %9 = arith.divf %7, %8 : vector<8x1xf32>
    %10 = vector.broadcast %9 : vector<8x1xf32> to vector<8x32xf32>
    %11 = arith.subf %3, %10 : vector<8x32xf32>
    %12 = arith.mulf %11, %11 : vector<8x32xf32>
    %cst_10 = arith.constant dense<0.000000e+00> : vector<8xf32>
    %13 = vector.multi_reduction <add>, %12, %cst_10 [1] : vector<8x32xf32> to vector<8xf32>
    %14 = vector.shape_cast %13 : vector<8xf32> to vector<8x1xf32>
    %cst_11 = arith.constant 3.200000e+01 : f32
    %15 = vector.broadcast %cst_11 : f32 to vector<8x1xf32>
    %16 = arith.divf %14, %15 : vector<8x1xf32>
    %17 = vector.broadcast %9 : vector<8x1xf32> to vector<8x32xf32>
    %18 = arith.subf %3, %17 : vector<8x32xf32>
    %cst_12 = arith.constant 9.99999996E-13 : f32
    %19 = vector.broadcast %cst_12 : f32 to vector<8x1xf32>
    %20 = arith.addf %16, %19 : vector<8x1xf32>
    %21 = math.rsqrt %20 : vector<8x1xf32>
    %22 = vector.broadcast %21 : vector<8x1xf32> to vector<8x32xf32>
    %23 = arith.mulf %18, %22 : vector<8x32xf32>
    %24 = vector.broadcast %4 : vector<1x32xf32> to vector<8x32xf32>
    %25 = arith.mulf %23, %24 : vector<8x32xf32>
    %26 = vector.broadcast %5 : vector<1x32xf32> to vector<8x32xf32>
    %27 = arith.addf %25, %26 : vector<8x32xf32>
    %28 = arith.truncf %27 : vector<8x32xf32> to vector<8x32xbf16>
    %c0_13 = arith.constant 0 : index
    %c0_14 = arith.constant 0 : index
    %c0_15 = arith.constant 0 : index
    %29 = vector.load %arg5[%c0_13, %c0_14, %c0_15] : memref<2x32x96xbf16, #tpu.memory_space<vmem>>, vector<1x32x96xbf16>
    %30 = vector.shape_cast %29 : vector<1x32x96xbf16> to vector<32x96xbf16>
    %cst_16 = arith.constant dense<0.000000e+00> : vector<8x96xf32>
    %31 = tpu.matmul %28, %30, %cst_16 {dimension_numbers = #tpu.dot_dimension_numbers<[1], [0], [0], [1], [0, 0, 1, 1], [], []>} : vector<8x32xbf16>, vector<32x96xbf16>, vector<8x96xf32> -> vector<8x96xf32>
    %c0_17 = arith.constant 0 : index
    %c0_18 = arith.constant 0 : index
    %c0_19 = arith.constant 0 : index
    %32 = vector.load %arg6[%c0_17, %c0_18, %c0_19] : memref<2x1x96xf32, #tpu.memory_space<vmem>>, vector<1x1x96xf32>
    %33 = vector.shape_cast %32 : vector<1x1x96xf32> to vector<1x96xf32>
    %34 = vector.broadcast %33 : vector<1x96xf32> to vector<8x96xf32>
    %35 = arith.addf %31, %34 : vector<8x96xf32>
    %36 = arith.truncf %35 : vector<8x96xf32> to vector<8x96xbf16>
    %37 = vector.extract_strided_slice %36 {offsets = [0, 0], sizes = [8, 8], strides = [1, 1]} : vector<8x96xbf16> to vector<8x8xbf16>
    %38 = vector.extract_strided_slice %36 {offsets = [0, 8], sizes = [8, 8], strides = [1, 1]} : vector<8x96xbf16> to vector<8x8xbf16>
    %39 = vector.extract_strided_slice %36 {offsets = [0, 16], sizes = [8, 8], strides = [1, 1]} : vector<8x96xbf16> to vector<8x8xbf16>
    %40 = vector.extract_strided_slice %36 {offsets = [0, 24], sizes = [8, 8], strides = [1, 1]} : vector<8x96xbf16> to vector<8x8xbf16>
    %41 = vector.shape_cast %37 : vector<8x8xbf16> to vector<1x8x8xbf16>
    %42 = vector.shape_cast %38 : vector<8x8xbf16> to vector<1x8x8xbf16>
    %43 = vector.shape_cast %39 : vector<8x8xbf16> to vector<1x8x8xbf16>
    %44 = vector.shape_cast %40 : vector<8x8xbf16> to vector<1x8x8xbf16>
    %45 = tpu.concatenate %41, %42, %43, %44 in 0 : vector<1x8x8xbf16>, vector<1x8x8xbf16>, vector<1x8x8xbf16>, vector<1x8x8xbf16> -> vector<4x8x8xbf16>
    %46 = vector.extract_strided_slice %36 {offsets = [0, 32], sizes = [8, 8], strides = [1, 1]} : vector<8x96xbf16> to vector<8x8xbf16>
    %47 = vector.extract_strided_slice %36 {offsets = [0, 40], sizes = [8, 8], strides = [1, 1]} : vector<8x96xbf16> to vector<8x8xbf16>
    %48 = vector.extract_strided_slice %36 {offsets = [0, 48], sizes = [8, 8], strides = [1, 1]} : vector<8x96xbf16> to vector<8x8xbf16>
    %49 = vector.extract_strided_slice %36 {offsets = [0, 56], sizes = [8, 8], strides = [1, 1]} : vector<8x96xbf16> to vector<8x8xbf16>
    %50 = vector.shape_cast %46 : vector<8x8xbf16> to vector<1x8x8xbf16>
    %51 = vector.shape_cast %47 : vector<8x8xbf16> to vector<1x8x8xbf16>
    %52 = vector.shape_cast %48 : vector<8x8xbf16> to vector<1x8x8xbf16>
    %53 = vector.shape_cast %49 : vector<8x8xbf16> to vector<1x8x8xbf16>
    %54 = tpu.concatenate %50, %51, %52, %53 in 0 : vector<1x8x8xbf16>, vector<1x8x8xbf16>, vector<1x8x8xbf16>, vector<1x8x8xbf16> -> vector<4x8x8xbf16>
    %55 = vector.extract_strided_slice %36 {offsets = [0, 64], sizes = [8, 8], strides = [1, 1]} : vector<8x96xbf16> to vector<8x8xbf16>
    %56 = vector.extract_strided_slice %36 {offsets = [0, 72], sizes = [8, 8], strides = [1, 1]} : vector<8x96xbf16> to vector<8x8xbf16>
    %57 = vector.extract_strided_slice %36 {offsets = [0, 80], sizes = [8, 8], strides = [1, 1]} : vector<8x96xbf16> to vector<8x8xbf16>
    %58 = vector.extract_strided_slice %36 {offsets = [0, 88], sizes = [8, 8], strides = [1, 1]} : vector<8x96xbf16> to vector<8x8xbf16>
    %59 = vector.shape_cast %55 : vector<8x8xbf16> to vector<1x8x8xbf16>
    %60 = vector.shape_cast %56 : vector<8x8xbf16> to vector<1x8x8xbf16>
    %61 = vector.shape_cast %57 : vector<8x8xbf16> to vector<1x8x8xbf16>
    %62 = vector.shape_cast %58 : vector<8x8xbf16> to vector<1x8x8xbf16>
    %63 = tpu.concatenate %59, %60, %61, %62 in 0 : vector<1x8x8xbf16>, vector<1x8x8xbf16>, vector<1x8x8xbf16>, vector<1x8x8xbf16> -> vector<4x8x8xbf16>
    "tpu.trace_start"() <{level = 10 : i32, message = "nqd,nkd->nqk"}> : () -> ()
    %cst_20 = arith.constant dense<0.000000e+00> : vector<4x8x8xf32>
    %64 = tpu.matmul %45, %54, %cst_20 {dimension_numbers = #tpu.dot_dimension_numbers<[2], [2], [1], [1], [0, 0, 0, 1, 1, 1], [0], [0]>} : vector<4x8x8xbf16>, vector<4x8x8xbf16>, vector<4x8x8xf32> -> vector<4x8x8xf32>
    "tpu.trace_stop"() : () -> ()
    %cst_21 = arith.constant 0.353553385 : f32
    %65 = vector.broadcast %cst_21 : f32 to vector<4x8x8xf32>
    %66 = arith.mulf %64, %65 : vector<4x8x8xf32>
    %67 = vector.shape_cast %1 : vector<1x8xf32> to vector<1x1x8xf32>
    %68 = vector.broadcast %67 : vector<1x1x8xf32> to vector<4x8x8xf32>
    %69 = arith.addf %66, %68 : vector<4x8x8xf32>
    %cst_22 = arith.constant dense<0xFF800000> : vector<4x8xf32>
    %70 = vector.multi_reduction <maximumf>, %69, %cst_22 [2] : vector<4x8x8xf32> to vector<4x8xf32>
    %71 = vector.shape_cast %70 : vector<4x8xf32> to vector<4x8x1xf32>
    %72 = vector.broadcast %71 : vector<4x8x1xf32> to vector<4x8x8xf32>
    %73 = arith.subf %69, %72 : vector<4x8x8xf32>
    %74 = math.exp %73 : vector<4x8x8xf32>
    %cst_23 = arith.constant dense<0.000000e+00> : vector<4x8xf32>
    %75 = vector.multi_reduction <add>, %74, %cst_23 [2] : vector<4x8x8xf32> to vector<4x8xf32>
    %76 = vector.shape_cast %75 : vector<4x8xf32> to vector<4x8x1xf32>
    %77 = tpu.reciprocal %76 {approx = true} : vector<4x8x1xf32> -> vector<4x8x1xf32>
    %78 = vector.broadcast %77 : vector<4x8x1xf32> to vector<4x8x8xf32>
    %79 = arith.mulf %74, %78 : vector<4x8x8xf32>
    %80 = arith.truncf %79 : vector<4x8x8xf32> to vector<4x8x8xbf16>
    "tpu.trace_start"() <{level = 10 : i32, message = "nqk,nkd->nqd"}> : () -> ()
    %cst_24 = arith.constant dense<0.000000e+00> : vector<4x8x8xf32>
    %81 = tpu.matmul %80, %63, %cst_24 {dimension_numbers = #tpu.dot_dimension_numbers<[2], [1], [1], [2], [0, 0, 0, 1, 1, 2], [0], [0]>} : vector<4x8x8xbf16>, vector<4x8x8xbf16>, vector<4x8x8xf32> -> vector<4x8x8xf32>
    "tpu.trace_stop"() : () -> ()
    %82 = vector.extract_strided_slice %81 {offsets = [0, 0, 0], sizes = [1, 8, 8], strides = [1, 1, 1]} : vector<4x8x8xf32> to vector<1x8x8xf32>
    %83 = vector.shape_cast %82 : vector<1x8x8xf32> to vector<8x8xf32>
    %84 = vector.extract_strided_slice %81 {offsets = [1, 0, 0], sizes = [1, 8, 8], strides = [1, 1, 1]} : vector<4x8x8xf32> to vector<1x8x8xf32>
    %85 = vector.shape_cast %84 : vector<1x8x8xf32> to vector<8x8xf32>
    %86 = vector.extract_strided_slice %81 {offsets = [2, 0, 0], sizes = [1, 8, 8], strides = [1, 1, 1]} : vector<4x8x8xf32> to vector<1x8x8xf32>
    %87 = vector.shape_cast %86 : vector<1x8x8xf32> to vector<8x8xf32>
    %88 = vector.extract_strided_slice %81 {offsets = [3, 0, 0], sizes = [1, 8, 8], strides = [1, 1, 1]} : vector<4x8x8xf32> to vector<1x8x8xf32>
    %89 = vector.shape_cast %88 : vector<1x8x8xf32> to vector<8x8xf32>
    %90 = tpu.concatenate %83, %85, %87, %89 in 1 : vector<8x8xf32>, vector<8x8xf32>, vector<8x8xf32>, vector<8x8xf32> -> vector<8x32xf32>
    %91 = arith.truncf %90 : vector<8x32xf32> to vector<8x32xbf16>
    %c0_25 = arith.constant 0 : index
    %c0_26 = arith.constant 0 : index
    %c0_27 = arith.constant 0 : index
    %92 = vector.load %arg7[%c0_25, %c0_26, %c0_27] : memref<2x32x32xbf16, #tpu.memory_space<vmem>>, vector<1x32x32xbf16>
    %93 = vector.shape_cast %92 : vector<1x32x32xbf16> to vector<32x32xbf16>
    %cst_28 = arith.constant dense<0.000000e+00> : vector<8x32xf32>
    %94 = tpu.matmul %91, %93, %cst_28 {dimension_numbers = #tpu.dot_dimension_numbers<[1], [0], [0], [1], [0, 0, 1, 1], [], []>} : vector<8x32xbf16>, vector<32x32xbf16>, vector<8x32xf32> -> vector<8x32xf32>
    %c0_29 = arith.constant 0 : index
    %c0_30 = arith.constant 0 : index
    %c0_31 = arith.constant 0 : index
    %95 = vector.load %arg8[%c0_29, %c0_30, %c0_31] : memref<2x1x32xf32, #tpu.memory_space<vmem>>, vector<1x1x32xf32>
    %96 = vector.shape_cast %95 : vector<1x1x32xf32> to vector<1x32xf32>
    %97 = vector.broadcast %96 : vector<1x32xf32> to vector<8x32xf32>
    %98 = arith.addf %94, %97 : vector<8x32xf32>
    %99 = arith.addf %27, %98 : vector<8x32xf32>
    %c0_32 = arith.constant 0 : index
    %c0_33 = arith.constant 0 : index
    %c0_34 = arith.constant 0 : index
    %100 = vector.load %arg9[%c0_32, %c0_33, %c0_34] : memref<2x1x32xf32, #tpu.memory_space<vmem>>, vector<1x1x32xf32>
    %101 = vector.shape_cast %100 : vector<1x1x32xf32> to vector<1x32xf32>
    %c0_35 = arith.constant 0 : index
    %c0_36 = arith.constant 0 : index
    %c0_37 = arith.constant 0 : index
    %102 = vector.load %arg10[%c0_35, %c0_36, %c0_37] : memref<2x1x32xf32, #tpu.memory_space<vmem>>, vector<1x1x32xf32>
    %103 = vector.shape_cast %102 : vector<1x1x32xf32> to vector<1x32xf32>
    %cst_38 = arith.constant dense<0.000000e+00> : vector<8xf32>
    %104 = vector.multi_reduction <add>, %99, %cst_38 [1] : vector<8x32xf32> to vector<8xf32>
    %105 = vector.shape_cast %104 : vector<8xf32> to vector<8x1xf32>
    %cst_39 = arith.constant 3.200000e+01 : f32
    %106 = vector.broadcast %cst_39 : f32 to vector<8x1xf32>
    %107 = arith.divf %105, %106 : vector<8x1xf32>
    %108 = vector.broadcast %107 : vector<8x1xf32> to vector<8x32xf32>
    %109 = arith.subf %99, %108 : vector<8x32xf32>
    %110 = arith.mulf %109, %109 : vector<8x32xf32>
    %cst_40 = arith.constant dense<0.000000e+00> : vector<8xf32>
    %111 = vector.multi_reduction <add>, %110, %cst_40 [1] : vector<8x32xf32> to vector<8xf32>
    %112 = vector.shape_cast %111 : vector<8xf32> to vector<8x1xf32>
    %cst_41 = arith.constant 3.200000e+01 : f32
    %113 = vector.broadcast %cst_41 : f32 to vector<8x1xf32>
    %114 = arith.divf %112, %113 : vector<8x1xf32>
    %115 = vector.broadcast %107 : vector<8x1xf32> to vector<8x32xf32>
    %116 = arith.subf %99, %115 : vector<8x32xf32>
    %cst_42 = arith.constant 9.99999996E-13 : f32
    %117 = vector.broadcast %cst_42 : f32 to vector<8x1xf32>
    %118 = arith.addf %114, %117 : vector<8x1xf32>
    %119 = math.rsqrt %118 : vector<8x1xf32>
    %120 = vector.broadcast %119 : vector<8x1xf32> to vector<8x32xf32>
    %121 = arith.mulf %116, %120 : vector<8x32xf32>
    %122 = vector.broadcast %101 : vector<1x32xf32> to vector<8x32xf32>
    %123 = arith.mulf %121, %122 : vector<8x32xf32>
    %124 = vector.broadcast %103 : vector<1x32xf32> to vector<8x32xf32>
    %125 = arith.addf %123, %124 : vector<8x32xf32>
    %126 = arith.truncf %125 : vector<8x32xf32> to vector<8x32xbf16>
    %c0_43 = arith.constant 0 : index
    %c0_44 = arith.constant 0 : index
    %c0_45 = arith.constant 0 : index
    %127 = vector.load %arg11[%c0_43, %c0_44, %c0_45] : memref<2x32x64xbf16, #tpu.memory_space<vmem>>, vector<1x32x64xbf16>
    %128 = vector.shape_cast %127 : vector<1x32x64xbf16> to vector<32x64xbf16>
    %cst_46 = arith.constant dense<0.000000e+00> : vector<8x64xf32>
    %129 = tpu.matmul %126, %128, %cst_46 {dimension_numbers = #tpu.dot_dimension_numbers<[1], [0], [0], [1], [0, 0, 1, 1], [], []>} : vector<8x32xbf16>, vector<32x64xbf16>, vector<8x64xf32> -> vector<8x64xf32>
    %c0_47 = arith.constant 0 : index
    %c0_48 = arith.constant 0 : index
    %c0_49 = arith.constant 0 : index
    %130 = vector.load %arg12[%c0_47, %c0_48, %c0_49] : memref<2x1x64xf32, #tpu.memory_space<vmem>>, vector<1x1x64xf32>
    %131 = vector.shape_cast %130 : vector<1x1x64xf32> to vector<1x64xf32>
    %132 = vector.broadcast %131 : vector<1x64xf32> to vector<8x64xf32>
    %133 = arith.addf %129, %132 : vector<8x64xf32>
    %cst_50 = arith.constant 5.000000e-01 : f32
    %134 = vector.broadcast %cst_50 : f32 to vector<8x64xf32>
    %135 = arith.mulf %134, %133 : vector<8x64xf32>
    %cst_51 = arith.constant 4.471500e-02 : f32
    %136 = vector.broadcast %cst_51 : f32 to vector<8x64xf32>
    %137 = arith.mulf %136, %133 : vector<8x64xf32>
    %138 = arith.mulf %137, %133 : vector<8x64xf32>
    %139 = arith.mulf %138, %133 : vector<8x64xf32>
    %140 = arith.addf %133, %139 : vector<8x64xf32>
    %cst_52 = arith.constant 0.797884583 : f32
    %141 = vector.broadcast %cst_52 : f32 to vector<8x64xf32>
    %142 = arith.mulf %141, %140 : vector<8x64xf32>
    %143 = math.tanh %142 : vector<8x64xf32>
    %cst_53 = arith.constant 1.000000e+00 : f32
    %144 = vector.broadcast %cst_53 : f32 to vector<8x64xf32>
    %145 = arith.addf %144, %143 : vector<8x64xf32>
    %146 = arith.mulf %135, %145 : vector<8x64xf32>
    %147 = arith.truncf %146 : vector<8x64xf32> to vector<8x64xbf16>
    %c0_54 = arith.constant 0 : index
    %c0_55 = arith.constant 0 : index
    %c0_56 = arith.constant 0 : index
    %148 = vector.load %arg13[%c0_54, %c0_55, %c0_56] : memref<2x64x32xbf16, #tpu.memory_space<vmem>>, vector<1x64x32xbf16>
    %149 = vector.shape_cast %148 : vector<1x64x32xbf16> to vector<64x32xbf16>
    %cst_57 = arith.constant dense<0.000000e+00> : vector<8x32xf32>
    %150 = tpu.matmul %147, %149, %cst_57 {dimension_numbers = #tpu.dot_dimension_numbers<[1], [0], [0], [1], [0, 0, 1, 1], [], []>} : vector<8x64xbf16>, vector<64x32xbf16>, vector<8x32xf32> -> vector<8x32xf32>
    %c0_58 = arith.constant 0 : index
    %c0_59 = arith.constant 0 : index
    %c0_60 = arith.constant 0 : index
    %151 = vector.load %arg14[%c0_58, %c0_59, %c0_60] : memref<2x1x32xf32, #tpu.memory_space<vmem>>, vector<1x1x32xf32>
    %152 = vector.shape_cast %151 : vector<1x1x32xf32> to vector<1x32xf32>
    %153 = vector.broadcast %152 : vector<1x32xf32> to vector<8x32xf32>
    %154 = arith.addf %150, %153 : vector<8x32xf32>
    %155 = arith.addf %125, %154 : vector<8x32xf32>
    %c0_61 = arith.constant 0 : index
    %c0_62 = arith.constant 0 : index
    %c0_63 = arith.constant 0 : index
    %156 = vector.load %arg15[%c0_61, %c0_62, %c0_63] : memref<2x1x32xf32, #tpu.memory_space<vmem>>, vector<1x1x32xf32>
    %157 = vector.shape_cast %156 : vector<1x1x32xf32> to vector<1x32xf32>
    %c0_64 = arith.constant 0 : index
    %c0_65 = arith.constant 0 : index
    %c0_66 = arith.constant 0 : index
    %158 = vector.load %arg16[%c0_64, %c0_65, %c0_66] : memref<2x1x32xf32, #tpu.memory_space<vmem>>, vector<1x1x32xf32>
    %159 = vector.shape_cast %158 : vector<1x1x32xf32> to vector<1x32xf32>
    %cst_67 = arith.constant dense<0.000000e+00> : vector<8xf32>
    %160 = vector.multi_reduction <add>, %155, %cst_67 [1] : vector<8x32xf32> to vector<8xf32>
    %161 = vector.shape_cast %160 : vector<8xf32> to vector<8x1xf32>
    %cst_68 = arith.constant 3.200000e+01 : f32
    %162 = vector.broadcast %cst_68 : f32 to vector<8x1xf32>
    %163 = arith.divf %161, %162 : vector<8x1xf32>
    %164 = vector.broadcast %163 : vector<8x1xf32> to vector<8x32xf32>
    %165 = arith.subf %155, %164 : vector<8x32xf32>
    %166 = arith.mulf %165, %165 : vector<8x32xf32>
    %cst_69 = arith.constant dense<0.000000e+00> : vector<8xf32>
    %167 = vector.multi_reduction <add>, %166, %cst_69 [1] : vector<8x32xf32> to vector<8xf32>
    %168 = vector.shape_cast %167 : vector<8xf32> to vector<8x1xf32>
    %cst_70 = arith.constant 3.200000e+01 : f32
    %169 = vector.broadcast %cst_70 : f32 to vector<8x1xf32>
    %170 = arith.divf %168, %169 : vector<8x1xf32>
    %171 = vector.broadcast %163 : vector<8x1xf32> to vector<8x32xf32>
    %172 = arith.subf %155, %171 : vector<8x32xf32>
    %cst_71 = arith.constant 9.99999996E-13 : f32
    %173 = vector.broadcast %cst_71 : f32 to vector<8x1xf32>
    %174 = arith.addf %170, %173 : vector<8x1xf32>
    %175 = math.rsqrt %174 : vector<8x1xf32>
    %176 = vector.broadcast %175 : vector<8x1xf32> to vector<8x32xf32>
    %177 = arith.mulf %172, %176 : vector<8x32xf32>
    %178 = vector.broadcast %157 : vector<1x32xf32> to vector<8x32xf32>
    %179 = arith.mulf %177, %178 : vector<8x32xf32>
    %180 = vector.broadcast %159 : vector<1x32xf32> to vector<8x32xf32>
    %181 = arith.addf %179, %180 : vector<8x32xf32>
    %182 = arith.truncf %181 : vector<8x32xf32> to vector<8x32xbf16>
    %c1 = arith.constant 1 : index
    %c0_72 = arith.constant 0 : index
    %c0_73 = arith.constant 0 : index
    %183 = vector.load %arg5[%c1, %c0_72, %c0_73] : memref<2x32x96xbf16, #tpu.memory_space<vmem>>, vector<1x32x96xbf16>
    %184 = vector.shape_cast %183 : vector<1x32x96xbf16> to vector<32x96xbf16>
    %cst_74 = arith.constant dense<0.000000e+00> : vector<8x96xf32>
    %185 = tpu.matmul %182, %184, %cst_74 {dimension_numbers = #tpu.dot_dimension_numbers<[1], [0], [0], [1], [0, 0, 1, 1], [], []>} : vector<8x32xbf16>, vector<32x96xbf16>, vector<8x96xf32> -> vector<8x96xf32>
    %c1_75 = arith.constant 1 : index
    %c0_76 = arith.constant 0 : index
    %c0_77 = arith.constant 0 : index
    %186 = vector.load %arg6[%c1_75, %c0_76, %c0_77] : memref<2x1x96xf32, #tpu.memory_space<vmem>>, vector<1x1x96xf32>
    %187 = vector.shape_cast %186 : vector<1x1x96xf32> to vector<1x96xf32>
    %188 = vector.broadcast %187 : vector<1x96xf32> to vector<8x96xf32>
    %189 = arith.addf %185, %188 : vector<8x96xf32>
    %190 = arith.truncf %189 : vector<8x96xf32> to vector<8x96xbf16>
    %191 = vector.extract_strided_slice %190 {offsets = [0, 0], sizes = [8, 8], strides = [1, 1]} : vector<8x96xbf16> to vector<8x8xbf16>
    %192 = vector.extract_strided_slice %190 {offsets = [0, 8], sizes = [8, 8], strides = [1, 1]} : vector<8x96xbf16> to vector<8x8xbf16>
    %193 = vector.extract_strided_slice %190 {offsets = [0, 16], sizes = [8, 8], strides = [1, 1]} : vector<8x96xbf16> to vector<8x8xbf16>
    %194 = vector.extract_strided_slice %190 {offsets = [0, 24], sizes = [8, 8], strides = [1, 1]} : vector<8x96xbf16> to vector<8x8xbf16>
    %195 = vector.shape_cast %191 : vector<8x8xbf16> to vector<1x8x8xbf16>
    %196 = vector.shape_cast %192 : vector<8x8xbf16> to vector<1x8x8xbf16>
    %197 = vector.shape_cast %193 : vector<8x8xbf16> to vector<1x8x8xbf16>
    %198 = vector.shape_cast %194 : vector<8x8xbf16> to vector<1x8x8xbf16>
    %199 = tpu.concatenate %195, %196, %197, %198 in 0 : vector<1x8x8xbf16>, vector<1x8x8xbf16>, vector<1x8x8xbf16>, vector<1x8x8xbf16> -> vector<4x8x8xbf16>
    %200 = vector.extract_strided_slice %190 {offsets = [0, 32], sizes = [8, 8], strides = [1, 1]} : vector<8x96xbf16> to vector<8x8xbf16>
    %201 = vector.extract_strided_slice %190 {offsets = [0, 40], sizes = [8, 8], strides = [1, 1]} : vector<8x96xbf16> to vector<8x8xbf16>
    %202 = vector.extract_strided_slice %190 {offsets = [0, 48], sizes = [8, 8], strides = [1, 1]} : vector<8x96xbf16> to vector<8x8xbf16>
    %203 = vector.extract_strided_slice %190 {offsets = [0, 56], sizes = [8, 8], strides = [1, 1]} : vector<8x96xbf16> to vector<8x8xbf16>
    %204 = vector.shape_cast %200 : vector<8x8xbf16> to vector<1x8x8xbf16>
    %205 = vector.shape_cast %201 : vector<8x8xbf16> to vector<1x8x8xbf16>
    %206 = vector.shape_cast %202 : vector<8x8xbf16> to vector<1x8x8xbf16>
    %207 = vector.shape_cast %203 : vector<8x8xbf16> to vector<1x8x8xbf16>
    %208 = tpu.concatenate %204, %205, %206, %207 in 0 : vector<1x8x8xbf16>, vector<1x8x8xbf16>, vector<1x8x8xbf16>, vector<1x8x8xbf16> -> vector<4x8x8xbf16>
    %209 = vector.extract_strided_slice %190 {offsets = [0, 64], sizes = [8, 8], strides = [1, 1]} : vector<8x96xbf16> to vector<8x8xbf16>
    %210 = vector.extract_strided_slice %190 {offsets = [0, 72], sizes = [8, 8], strides = [1, 1]} : vector<8x96xbf16> to vector<8x8xbf16>
    %211 = vector.extract_strided_slice %190 {offsets = [0, 80], sizes = [8, 8], strides = [1, 1]} : vector<8x96xbf16> to vector<8x8xbf16>
    %212 = vector.extract_strided_slice %190 {offsets = [0, 88], sizes = [8, 8], strides = [1, 1]} : vector<8x96xbf16> to vector<8x8xbf16>
    %213 = vector.shape_cast %209 : vector<8x8xbf16> to vector<1x8x8xbf16>
    %214 = vector.shape_cast %210 : vector<8x8xbf16> to vector<1x8x8xbf16>
    %215 = vector.shape_cast %211 : vector<8x8xbf16> to vector<1x8x8xbf16>
    %216 = vector.shape_cast %212 : vector<8x8xbf16> to vector<1x8x8xbf16>
    %217 = tpu.concatenate %213, %214, %215, %216 in 0 : vector<1x8x8xbf16>, vector<1x8x8xbf16>, vector<1x8x8xbf16>, vector<1x8x8xbf16> -> vector<4x8x8xbf16>
    "tpu.trace_start"() <{level = 10 : i32, message = "nqd,nkd->nqk"}> : () -> ()
    %cst_78 = arith.constant dense<0.000000e+00> : vector<4x8x8xf32>
    %218 = tpu.matmul %199, %208, %cst_78 {dimension_numbers = #tpu.dot_dimension_numbers<[2], [2], [1], [1], [0, 0, 0, 1, 1, 1], [0], [0]>} : vector<4x8x8xbf16>, vector<4x8x8xbf16>, vector<4x8x8xf32> -> vector<4x8x8xf32>
    "tpu.trace_stop"() : () -> ()
    %cst_79 = arith.constant 0.353553385 : f32
    %219 = vector.broadcast %cst_79 : f32 to vector<4x8x8xf32>
    %220 = arith.mulf %218, %219 : vector<4x8x8xf32>
    %221 = vector.shape_cast %1 : vector<1x8xf32> to vector<1x1x8xf32>
    %222 = vector.broadcast %221 : vector<1x1x8xf32> to vector<4x8x8xf32>
    %223 = arith.addf %220, %222 : vector<4x8x8xf32>
    %cst_80 = arith.constant dense<0xFF800000> : vector<4x8xf32>
    %224 = vector.multi_reduction <maximumf>, %223, %cst_80 [2] : vector<4x8x8xf32> to vector<4x8xf32>
    %225 = vector.shape_cast %224 : vector<4x8xf32> to vector<4x8x1xf32>
    %226 = vector.broadcast %225 : vector<4x8x1xf32> to vector<4x8x8xf32>
    %227 = arith.subf %223, %226 : vector<4x8x8xf32>
    %228 = math.exp %227 : vector<4x8x8xf32>
    %cst_81 = arith.constant dense<0.000000e+00> : vector<4x8xf32>
    %229 = vector.multi_reduction <add>, %228, %cst_81 [2] : vector<4x8x8xf32> to vector<4x8xf32>
    %230 = vector.shape_cast %229 : vector<4x8xf32> to vector<4x8x1xf32>
    %231 = tpu.reciprocal %230 {approx = true} : vector<4x8x1xf32> -> vector<4x8x1xf32>
    %232 = vector.broadcast %231 : vector<4x8x1xf32> to vector<4x8x8xf32>
    %233 = arith.mulf %228, %232 : vector<4x8x8xf32>
    %234 = arith.truncf %233 : vector<4x8x8xf32> to vector<4x8x8xbf16>
    "tpu.trace_start"() <{level = 10 : i32, message = "nqk,nkd->nqd"}> : () -> ()
    %cst_82 = arith.constant dense<0.000000e+00> : vector<4x8x8xf32>
    %235 = tpu.matmul %234, %217, %cst_82 {dimension_numbers = #tpu.dot_dimension_numbers<[2], [1], [1], [2], [0, 0, 0, 1, 1, 2], [0], [0]>} : vector<4x8x8xbf16>, vector<4x8x8xbf16>, vector<4x8x8xf32> -> vector<4x8x8xf32>
    "tpu.trace_stop"() : () -> ()
    %236 = vector.extract_strided_slice %235 {offsets = [0, 0, 0], sizes = [1, 8, 8], strides = [1, 1, 1]} : vector<4x8x8xf32> to vector<1x8x8xf32>
    %237 = vector.shape_cast %236 : vector<1x8x8xf32> to vector<8x8xf32>
    %238 = vector.extract_strided_slice %235 {offsets = [1, 0, 0], sizes = [1, 8, 8], strides = [1, 1, 1]} : vector<4x8x8xf32> to vector<1x8x8xf32>
    %239 = vector.shape_cast %238 : vector<1x8x8xf32> to vector<8x8xf32>
    %240 = vector.extract_strided_slice %235 {offsets = [2, 0, 0], sizes = [1, 8, 8], strides = [1, 1, 1]} : vector<4x8x8xf32> to vector<1x8x8xf32>
    %241 = vector.shape_cast %240 : vector<1x8x8xf32> to vector<8x8xf32>
    %242 = vector.extract_strided_slice %235 {offsets = [3, 0, 0], sizes = [1, 8, 8], strides = [1, 1, 1]} : vector<4x8x8xf32> to vector<1x8x8xf32>
    %243 = vector.shape_cast %242 : vector<1x8x8xf32> to vector<8x8xf32>
    %244 = tpu.concatenate %237, %239, %241, %243 in 1 : vector<8x8xf32>, vector<8x8xf32>, vector<8x8xf32>, vector<8x8xf32> -> vector<8x32xf32>
    %245 = arith.truncf %244 : vector<8x32xf32> to vector<8x32xbf16>
    %c1_83 = arith.constant 1 : index
    %c0_84 = arith.constant 0 : index
    %c0_85 = arith.constant 0 : index
    %246 = vector.load %arg7[%c1_83, %c0_84, %c0_85] : memref<2x32x32xbf16, #tpu.memory_space<vmem>>, vector<1x32x32xbf16>
    %247 = vector.shape_cast %246 : vector<1x32x32xbf16> to vector<32x32xbf16>
    %cst_86 = arith.constant dense<0.000000e+00> : vector<8x32xf32>
    %248 = tpu.matmul %245, %247, %cst_86 {dimension_numbers = #tpu.dot_dimension_numbers<[1], [0], [0], [1], [0, 0, 1, 1], [], []>} : vector<8x32xbf16>, vector<32x32xbf16>, vector<8x32xf32> -> vector<8x32xf32>
    %c1_87 = arith.constant 1 : index
    %c0_88 = arith.constant 0 : index
    %c0_89 = arith.constant 0 : index
    %249 = vector.load %arg8[%c1_87, %c0_88, %c0_89] : memref<2x1x32xf32, #tpu.memory_space<vmem>>, vector<1x1x32xf32>
    %250 = vector.shape_cast %249 : vector<1x1x32xf32> to vector<1x32xf32>
    %251 = vector.broadcast %250 : vector<1x32xf32> to vector<8x32xf32>
    %252 = arith.addf %248, %251 : vector<8x32xf32>
    %253 = arith.addf %181, %252 : vector<8x32xf32>
    %c1_90 = arith.constant 1 : index
    %c0_91 = arith.constant 0 : index
    %c0_92 = arith.constant 0 : index
    %254 = vector.load %arg9[%c1_90, %c0_91, %c0_92] : memref<2x1x32xf32, #tpu.memory_space<vmem>>, vector<1x1x32xf32>
    %255 = vector.shape_cast %254 : vector<1x1x32xf32> to vector<1x32xf32>
    %c1_93 = arith.constant 1 : index
    %c0_94 = arith.constant 0 : index
    %c0_95 = arith.constant 0 : index
    %256 = vector.load %arg10[%c1_93, %c0_94, %c0_95] : memref<2x1x32xf32, #tpu.memory_space<vmem>>, vector<1x1x32xf32>
    %257 = vector.shape_cast %256 : vector<1x1x32xf32> to vector<1x32xf32>
    %cst_96 = arith.constant dense<0.000000e+00> : vector<8xf32>
    %258 = vector.multi_reduction <add>, %253, %cst_96 [1] : vector<8x32xf32> to vector<8xf32>
    %259 = vector.shape_cast %258 : vector<8xf32> to vector<8x1xf32>
    %cst_97 = arith.constant 3.200000e+01 : f32
    %260 = vector.broadcast %cst_97 : f32 to vector<8x1xf32>
    %261 = arith.divf %259, %260 : vector<8x1xf32>
    %262 = vector.broadcast %261 : vector<8x1xf32> to vector<8x32xf32>
    %263 = arith.subf %253, %262 : vector<8x32xf32>
    %264 = arith.mulf %263, %263 : vector<8x32xf32>
    %cst_98 = arith.constant dense<0.000000e+00> : vector<8xf32>
    %265 = vector.multi_reduction <add>, %264, %cst_98 [1] : vector<8x32xf32> to vector<8xf32>
    %266 = vector.shape_cast %265 : vector<8xf32> to vector<8x1xf32>
    %cst_99 = arith.constant 3.200000e+01 : f32
    %267 = vector.broadcast %cst_99 : f32 to vector<8x1xf32>
    %268 = arith.divf %266, %267 : vector<8x1xf32>
    %269 = vector.broadcast %261 : vector<8x1xf32> to vector<8x32xf32>
    %270 = arith.subf %253, %269 : vector<8x32xf32>
    %cst_100 = arith.constant 9.99999996E-13 : f32
    %271 = vector.broadcast %cst_100 : f32 to vector<8x1xf32>
    %272 = arith.addf %268, %271 : vector<8x1xf32>
    %273 = math.rsqrt %272 : vector<8x1xf32>
    %274 = vector.broadcast %273 : vector<8x1xf32> to vector<8x32xf32>
    %275 = arith.mulf %270, %274 : vector<8x32xf32>
    %276 = vector.broadcast %255 : vector<1x32xf32> to vector<8x32xf32>
    %277 = arith.mulf %275, %276 : vector<8x32xf32>
    %278 = vector.broadcast %257 : vector<1x32xf32> to vector<8x32xf32>
    %279 = arith.addf %277, %278 : vector<8x32xf32>
    %280 = arith.truncf %279 : vector<8x32xf32> to vector<8x32xbf16>
    %c1_101 = arith.constant 1 : index
    %c0_102 = arith.constant 0 : index
    %c0_103 = arith.constant 0 : index
    %281 = vector.load %arg11[%c1_101, %c0_102, %c0_103] : memref<2x32x64xbf16, #tpu.memory_space<vmem>>, vector<1x32x64xbf16>
    %282 = vector.shape_cast %281 : vector<1x32x64xbf16> to vector<32x64xbf16>
    %cst_104 = arith.constant dense<0.000000e+00> : vector<8x64xf32>
    %283 = tpu.matmul %280, %282, %cst_104 {dimension_numbers = #tpu.dot_dimension_numbers<[1], [0], [0], [1], [0, 0, 1, 1], [], []>} : vector<8x32xbf16>, vector<32x64xbf16>, vector<8x64xf32> -> vector<8x64xf32>
    %c1_105 = arith.constant 1 : index
    %c0_106 = arith.constant 0 : index
    %c0_107 = arith.constant 0 : index
    %284 = vector.load %arg12[%c1_105, %c0_106, %c0_107] : memref<2x1x64xf32, #tpu.memory_space<vmem>>, vector<1x1x64xf32>
    %285 = vector.shape_cast %284 : vector<1x1x64xf32> to vector<1x64xf32>
    %286 = vector.broadcast %285 : vector<1x64xf32> to vector<8x64xf32>
    %287 = arith.addf %283, %286 : vector<8x64xf32>
    %cst_108 = arith.constant 5.000000e-01 : f32
    %288 = vector.broadcast %cst_108 : f32 to vector<8x64xf32>
    %289 = arith.mulf %288, %287 : vector<8x64xf32>
    %cst_109 = arith.constant 4.471500e-02 : f32
    %290 = vector.broadcast %cst_109 : f32 to vector<8x64xf32>
    %291 = arith.mulf %290, %287 : vector<8x64xf32>
    %292 = arith.mulf %291, %287 : vector<8x64xf32>
    %293 = arith.mulf %292, %287 : vector<8x64xf32>
    %294 = arith.addf %287, %293 : vector<8x64xf32>
    %cst_110 = arith.constant 0.797884583 : f32
    %295 = vector.broadcast %cst_110 : f32 to vector<8x64xf32>
    %296 = arith.mulf %295, %294 : vector<8x64xf32>
    %297 = math.tanh %296 : vector<8x64xf32>
    %cst_111 = arith.constant 1.000000e+00 : f32
    %298 = vector.broadcast %cst_111 : f32 to vector<8x64xf32>
    %299 = arith.addf %298, %297 : vector<8x64xf32>
    %300 = arith.mulf %289, %299 : vector<8x64xf32>
    %301 = arith.truncf %300 : vector<8x64xf32> to vector<8x64xbf16>
    %c1_112 = arith.constant 1 : index
    %c0_113 = arith.constant 0 : index
    %c0_114 = arith.constant 0 : index
    %302 = vector.load %arg13[%c1_112, %c0_113, %c0_114] : memref<2x64x32xbf16, #tpu.memory_space<vmem>>, vector<1x64x32xbf16>
    %303 = vector.shape_cast %302 : vector<1x64x32xbf16> to vector<64x32xbf16>
    %cst_115 = arith.constant dense<0.000000e+00> : vector<8x32xf32>
    %304 = tpu.matmul %301, %303, %cst_115 {dimension_numbers = #tpu.dot_dimension_numbers<[1], [0], [0], [1], [0, 0, 1, 1], [], []>} : vector<8x64xbf16>, vector<64x32xbf16>, vector<8x32xf32> -> vector<8x32xf32>
    %c1_116 = arith.constant 1 : index
    %c0_117 = arith.constant 0 : index
    %c0_118 = arith.constant 0 : index
    %305 = vector.load %arg14[%c1_116, %c0_117, %c0_118] : memref<2x1x32xf32, #tpu.memory_space<vmem>>, vector<1x1x32xf32>
    %306 = vector.shape_cast %305 : vector<1x1x32xf32> to vector<1x32xf32>
    %307 = vector.broadcast %306 : vector<1x32xf32> to vector<8x32xf32>
    %308 = arith.addf %304, %307 : vector<8x32xf32>
    %309 = arith.addf %279, %308 : vector<8x32xf32>
    %c1_119 = arith.constant 1 : index
    %c0_120 = arith.constant 0 : index
    %c0_121 = arith.constant 0 : index
    %310 = vector.load %arg15[%c1_119, %c0_120, %c0_121] : memref<2x1x32xf32, #tpu.memory_space<vmem>>, vector<1x1x32xf32>
    %311 = vector.shape_cast %310 : vector<1x1x32xf32> to vector<1x32xf32>
    %c1_122 = arith.constant 1 : index
    %c0_123 = arith.constant 0 : index
    %c0_124 = arith.constant 0 : index
    %312 = vector.load %arg16[%c1_122, %c0_123, %c0_124] : memref<2x1x32xf32, #tpu.memory_space<vmem>>, vector<1x1x32xf32>
    %313 = vector.shape_cast %312 : vector<1x1x32xf32> to vector<1x32xf32>
    %cst_125 = arith.constant dense<0.000000e+00> : vector<8xf32>
    %314 = vector.multi_reduction <add>, %309, %cst_125 [1] : vector<8x32xf32> to vector<8xf32>
    %315 = vector.shape_cast %314 : vector<8xf32> to vector<8x1xf32>
    %cst_126 = arith.constant 3.200000e+01 : f32
    %316 = vector.broadcast %cst_126 : f32 to vector<8x1xf32>
    %317 = arith.divf %315, %316 : vector<8x1xf32>
    %318 = vector.broadcast %317 : vector<8x1xf32> to vector<8x32xf32>
    %319 = arith.subf %309, %318 : vector<8x32xf32>
    %320 = arith.mulf %319, %319 : vector<8x32xf32>
    %cst_127 = arith.constant dense<0.000000e+00> : vector<8xf32>
    %321 = vector.multi_reduction <add>, %320, %cst_127 [1] : vector<8x32xf32> to vector<8xf32>
    %322 = vector.shape_cast %321 : vector<8xf32> to vector<8x1xf32>
    %cst_128 = arith.constant 3.200000e+01 : f32
    %323 = vector.broadcast %cst_128 : f32 to vector<8x1xf32>
    %324 = arith.divf %322, %323 : vector<8x1xf32>
    %325 = vector.broadcast %317 : vector<8x1xf32> to vector<8x32xf32>
    %326 = arith.subf %309, %325 : vector<8x32xf32>
    %cst_129 = arith.constant 9.99999996E-13 : f32
    %327 = vector.broadcast %cst_129 : f32 to vector<8x1xf32>
    %328 = arith.addf %324, %327 : vector<8x1xf32>
    %329 = math.rsqrt %328 : vector<8x1xf32>
    %330 = vector.broadcast %329 : vector<8x1xf32> to vector<8x32xf32>
    %331 = arith.mulf %326, %330 : vector<8x32xf32>
    %332 = vector.broadcast %311 : vector<1x32xf32> to vector<8x32xf32>
    %333 = arith.mulf %331, %332 : vector<8x32xf32>
    %334 = vector.broadcast %313 : vector<1x32xf32> to vector<8x32xf32>
    %335 = arith.addf %333, %334 : vector<8x32xf32>
    %336 = arith.truncf %335 : vector<8x32xf32> to vector<8x32xbf16>
    %c0_130 = arith.constant 0 : index
    %c0_131 = arith.constant 0 : index
    %337 = vector.load %arg17[%c0_130, %c0_131] : memref<32x128xbf16, #tpu.memory_space<vmem>>, vector<32x128xbf16>
    %cst_132 = arith.constant dense<0.000000e+00> : vector<8x128xf32>
    %338 = tpu.matmul %336, %337, %cst_132 {dimension_numbers = #tpu.dot_dimension_numbers<[1], [0], [0], [1], [0, 0, 1, 1], [], []>} : vector<8x32xbf16>, vector<32x128xbf16>, vector<8x128xf32> -> vector<8x128xf32>
    %c0_133 = arith.constant 0 : index
    %c0_134 = arith.constant 0 : index
    %339 = vector.load %arg18[%c0_133, %c0_134] : memref<1x128xf32, #tpu.memory_space<vmem>>, vector<1x128xf32>
    %340 = vector.broadcast %339 : vector<1x128xf32> to vector<8x128xf32>
    %341 = arith.addf %338, %340 : vector<8x128xf32>
    %c0_135 = arith.constant 0 : index
    %c0_136 = arith.constant 0 : index
    %c0_137 = arith.constant 0 : index
    %342 = vector.load %arg19[%c0_135, %c0_136, %c0_137] : memref<1x8x128xf32, #tpu.memory_space<vmem>>, vector<1x8x128xf32>
    %343 = vector.shape_cast %342 : vector<1x8x128xf32> to vector<8x128xf32>
    %344 = vector.shape_cast %341 : vector<8x128xf32> to vector<1x8x128xf32>
    tpu.vector_store %arg19[%c0_135, %c0_136, %c0_137], %344 {strides = array<i32>} : memref<1x8x128xf32, #tpu.memory_space<vmem>>, vector<1x8x128xf32>,
    return
  }
  func.func @transform_0(%arg0: i32) -> (i32, i32, i32) {
    %c0_i32 = arith.constant 0 : i32
    %c0_i32_0 = arith.constant 0 : i32
    %c0_i32_1 = arith.constant 0 : i32
    return %arg0, %c0_i32, %c0_i32_0 : i32, i32, i32
  }
  func.func @transform_1(%arg0: i32) -> (i32, i32, i32) {
    %c0_i32 = arith.constant 0 : i32
    %c0_i32_0 = arith.constant 0 : i32
    %c0_i32_1 = arith.constant 0 : i32
    return %arg0, %c0_i32, %c0_i32_0 : i32, i32, i32
  }
  func.func @transform_2(%arg0: i32) -> (i32, i32) {
    %c0_i32 = arith.constant 0 : i32
    %c0_i32_0 = arith.constant 0 : i32
    %c0_i32_1 = arith.constant 0 : i32
    return %c0_i32, %c0_i32_0 : i32, i32
  }
  func.func @transform_3(%arg0: i32) -> (i32, i32) {
    %c0_i32 = arith.constant 0 : i32
    %c0_i32_0 = arith.constant 0 : i32
    %c0_i32_1 = arith.constant 0 : i32
    return %c0_i32, %c0_i32_0 : i32, i32
  }
  func.func @transform_4(%arg0: i32) -> (i32, i32, i32) {
    %c0_i32 = arith.constant 0 : i32
    %c0_i32_0 = arith.constant 0 : i32
    %c0_i32_1 = arith.constant 0 : i32
    %c0_i32_2 = arith.constant 0 : i32
    return %c0_i32, %c0_i32_0, %c0_i32_1 : i32, i32, i32
  }
  func.func @transform_5(%arg0: i32) -> (i32, i32, i32) {
    %c0_i32 = arith.constant 0 : i32
    %c0_i32_0 = arith.constant 0 : i32
    %c0_i32_1 = arith.constant 0 : i32
    %c0_i32_2 = arith.constant 0 : i32
    return %c0_i32, %c0_i32_0, %c0_i32_1 : i32, i32, i32
  }
  func.func @transform_6(%arg0: i32) -> (i32, i32, i32) {
    %c0_i32 = arith.constant 0 : i32
    %c0_i32_0 = arith.constant 0 : i32
    %c0_i32_1 = arith.constant 0 : i32
    %c0_i32_2 = arith.constant 0 : i32
    return %c0_i32, %c0_i32_0, %c0_i32_1 : i32, i32, i32
  }
  func.func @transform_7(%arg0: i32) -> (i32, i32, i32) {
    %c0_i32 = arith.constant 0 : i32
    %c0_i32_0 = arith.constant 0 : i32
    %c0_i32_1 = arith.constant 0 : i32
    %c0_i32_2 = arith.constant 0 : i32
    return %c0_i32, %c0_i32_0, %c0_i32_1 : i32, i32, i32
  }
  func.func @transform_8(%arg0: i32) -> (i32, i32, i32) {
    %c0_i32 = arith.constant 0 : i32
    %c0_i32_0 = arith.constant 0 : i32
    %c0_i32_1 = arith.constant 0 : i32
    %c0_i32_2 = arith.constant 0 : i32
    return %c0_i32, %c0_i32_0, %c0_i32_1 : i32, i32, i32
  }
  func.func @transform_9(%arg0: i32) -> (i32, i32, i32) {
    %c0_i32 = arith.constant 0 : i32
    %c0_i32_0 = arith.constant 0 : i32
    %c0_i32_1 = arith.constant 0 : i32
    %c0_i32_2 = arith.constant 0 : i32
    return %c0_i32, %c0_i32_0, %c0_i32_1 : i32, i32, i32
  }
  func.func @transform_10(%arg0: i32) -> (i32, i32, i32) {
    %c0_i32 = arith.constant 0 : i32
    %c0_i32_0 = arith.constant 0 : i32
    %c0_i32_1 = arith.constant 0 : i32
    %c0_i32_2 = arith.constant 0 : i32
    return %c0_i32, %c0_i32_0, %c0_i32_1 : i32, i32, i32
  }
  func.func @transform_11(%arg0: i32) -> (i32, i32, i32) {
    %c0_i32 = arith.constant 0 : i32
    %c0_i32_0 = arith.constant 0 : i32
    %c0_i32_1 = arith.constant 0 : i32
    %c0_i32_2 = arith.constant 0 : i32
    return %c0_i32, %c0_i32_0, %c0_i32_1 : i32, i32, i32
  }
  func.func @transform_12(%arg0: i32) -> (i32, i32, i32) {
    %c0_i32 = arith.constant 0 : i32
    %c0_i32_0 = arith.constant 0 : i32
    %c0_i32_1 = arith.constant 0 : i32
    %c0_i32_2 = arith.constant 0 : i32
    return %c0_i32, %c0_i32_0, %c0_i32_1 : i32, i32, i32
  }
  func.func @transform_13(%arg0: i32) -> (i32, i32, i32) {
    %c0_i32 = arith.constant 0 : i32
    %c0_i32_0 = arith.constant 0 : i32
    %c0_i32_1 = arith.constant 0 : i32
    %c0_i32_2 = arith.constant 0 : i32
    return %c0_i32, %c0_i32_0, %c0_i32_1 : i32, i32, i32
  }
  func.func @transform_14(%arg0: i32) -> (i32, i32, i32) {
    %c0_i32 = arith.constant 0 : i32
    %c0_i32_0 = arith.constant 0 : i32
    %c0_i32_1 = arith.constant 0 : i32
    %c0_i32_2 = arith.constant 0 : i32
    return %c0_i32, %c0_i32_0, %c0_i32_1 : i32, i32, i32
  }
  func.func @transform_15(%arg0: i32) -> (i32, i32, i32) {
    %c0_i32 = arith.constant 0 : i32
    %c0_i32_0 = arith.constant 0 : i32
    %c0_i32_1 = arith.constant 0 : i32
    %c0_i32_2 = arith.constant 0 : i32
    return %c0_i32, %c0_i32_0, %c0_i32_1 : i32, i32, i32
  }
  func.func @transform_16(%arg0: i32) -> (i32, i32) {
    %c0_i32 = arith.constant 0 : i32
    %c0_i32_0 = arith.constant 0 : i32
    %c0_i32_1 = arith.constant 0 : i32
    return %c0_i32, %c0_i32_0 : i32, i32
  }
  func.func @transform_17(%arg0: i32) -> (i32, i32) {
    %c0_i32 = arith.constant 0 : i32
    %c0_i32_0 = arith.constant 0 : i32
    %c0_i32_1 = arith.constant 0 : i32
    return %c0_i32, %c0_i32_0 : i32, i32
  }
  func.func @transform_18(%arg0: i32) -> (i32, i32, i32) {
    %c0_i32 = arith.constant 0 : i32
    %c0_i32_0 = arith.constant 0 : i32
    %c0_i32_1 = arith.constant 0 : i32
    return %arg0, %c0_i32, %c0_i32_0 : i32, i32, i32
  }
}

</mosaic_0001>

<llo_original>
// kernel: _lambda_.1
$region0: #{_lambda_.1}
  #allocation0 [shape = 'u32[]', space=smem, size = 0x4, offset = 0x4, fixed_abs, tag = 'smem constant byte address 0x4 - core index']
  #allocation1 [shape = 'u32[144,128]{1,0:T(1,128)}', space=vmem, size = 0x12000, scoped, tag = 'internal scratch']
  %s0 = inlined_call_operand.vmem [shape: f32[2,8,32], index: 0, kind: input, shape index: {}]
  %s1 = inlined_call_operand.vmem [shape: f32[2,1,8], index: 1, kind: input, shape index: {}]
  %s2 = inlined_call_operand.vmem [shape: f32[1,32], index: 2, kind: input, shape index: {}]
  %s3 = inlined_call_operand.vmem [shape: f32[1,32], index: 3, kind: input, shape index: {}]
  %s4 = inlined_call_operand.vmem [shape: bf16[2,32,96], index: 4, kind: input, shape index: {}]
  %s5 = inlined_call_operand.vmem [shape: f32[2,1,96], index: 5, kind: input, shape index: {}]
  %s6 = inlined_call_operand.vmem [shape: bf16[2,32,32], index: 6, kind: input, shape index: {}]
  %s7 = inlined_call_operand.vmem [shape: f32[2,1,32], index: 7, kind: input, shape index: {}]
  %s8 = inlined_call_operand.vmem [shape: f32[2,1,32], index: 8, kind: input, shape index: {}]
  %s9 = inlined_call_operand.vmem [shape: f32[2,1,32], index: 9, kind: input, shape index: {}]
  %s10 = inlined_call_operand.vmem [shape: bf16[2,32,64], index: 10, kind: input, shape index: {}]
  %s11 = inlined_call_operand.vmem [shape: f32[2,1,64], index: 11, kind: input, shape index: {}]
  %s12 = inlined_call_operand.vmem [shape: bf16[2,64,32], index: 12, kind: input, shape index: {}]
  %s13 = inlined_call_operand.vmem [shape: f32[2,1,32], index: 13, kind: input, shape index: {}]
  %s14 = inlined_call_operand.vmem [shape: f32[2,1,32], index: 14, kind: input, shape index: {}]
  %s15 = inlined_call_operand.vmem [shape: f32[2,1,32], index: 15, kind: input, shape index: {}]
  %s16 = inlined_call_operand.vmem [shape: bf16[32,128], index: 16, kind: input, shape index: {}]
  %s17 = inlined_call_operand.vmem [shape: f32[1,128], index: 17, kind: input, shape index: {}]
  %s18 = inlined_call_operand.hbm [shape: f32[2,8,128], index: 18, kind: output, shape index: {}]
  %s19 = sld [smem:[#allocation0]]
  $region105: #{_lambda_.1} parent=0
    _
  %s21 = ssub.s32 1, %s19
  %s22 = scalar_select 0, %s21, %s19
  $region1: #{_lambda_.1} parent=0
    #allocation2 [shape = 'u8[8192]{0}', space=vmem, size = 0x2000, scoped, tag = 'output window, operand 0']
    #allocation3 [shape = 's32[2]{0}', space=sflag, size = 0x8, scoped, tag = 'scoped memory for _lambda_.1']
    %23 = vsyncpa [#allocation3], 0
    %s24 = scalar_lea.sflag [#allocation3], 1
    %25 = vsyncpa %s24, 0
    loop: start=0, step=1, limit=4
    $region2: #{_lambda_.1} parent=1 // loop_pre_header
      _
    $region3: #{_lambda_.1} parent=1 // loop_header
      %s27 = sphi 0, %s31
      %p28 = scmp.ge.s32.totalorder %s27, 4
      %s37 = sphi 0, %s39
      %s40 = sphi 0, %s37
      %s41 = sphi 0, %s40
      %s57 = sphi 0, %s41
      %s63 = sphi 0, %s65
      %s66 = sphi 0, %s63
      %s67 = sphi 0, %s66
      %s83 = sphi 0, %s67
      %s87 = sphi 0, %s87
      %s89 = sphi 0, %s87
      %s90 = sphi 0, %s89
      %s104 = sphi 0, %s90
      %s108 = sphi 0, %s108
      %s110 = sphi 0, %s108
      %s111 = sphi 0, %s110
      %s125 = sphi 0, %s111
      %s129 = sphi 0, %s129
      %s131 = sphi 0, %s129
      %s132 = sphi 0, %s131
      %s146 = sphi 0, %s132
      %s150 = sphi 0, %s150
      %s152 = sphi 0, %s150
      %s153 = sphi 0, %s152
      %s167 = sphi 0, %s153
      %s171 = sphi 0, %s171
      %s173 = sphi 0, %s171
      %s174 = sphi 0, %s173
      %s188 = sphi 0, %s174
      %s192 = sphi 0, %s192
      %s194 = sphi 0, %s192
      %s195 = sphi 0, %s194
      %s209 = sphi 0, %s195
      %s213 = sphi 0, %s213
      %s215 = sphi 0, %s213
      %s216 = sphi 0, %s215
      %s230 = sphi 0, %s216
      %s234 = sphi 0, %s234
      %s236 = sphi 0, %s234
      %s237 = sphi 0, %s236
      %s251 = sphi 0, %s237
      %s255 = sphi 0, %s255
      %s257 = sphi 0, %s255
      %s258 = sphi 0, %s257
      %s272 = sphi 0, %s258
      %s276 = sphi 0, %s276
      %s278 = sphi 0, %s276
      %s279 = sphi 0, %s278
      %s293 = sphi 0, %s279
      %s297 = sphi 0, %s297
      %s299 = sphi 0, %s297
      %s300 = sphi 0, %s299
      %s314 = sphi 0, %s300
      %s318 = sphi 0, %s318
      %s320 = sphi 0, %s318
      %s321 = sphi 0, %s320
      %s335 = sphi 0, %s321
      %s339 = sphi 0, %s339
      %s341 = sphi 0, %s339
      %s342 = sphi 0, %s341
      %s356 = sphi 0, %s342
      %s360 = sphi 0, %s360
      %s362 = sphi 0, %s360
      %s363 = sphi 0, %s362
      %s377 = sphi 0, %s363
      %s381 = sphi 0, %s381
      %s383 = sphi 0, %s381
      %s384 = sphi 0, %s383
      %s398 = sphi 0, %s384
      %s402 = sphi 0, %s402
      %s404 = sphi 0, %s402
      %s405 = sphi 0, %s404
      %s419 = sphi 0, %s405
      %s425 = sphi 0, %s427
      %s428 = sphi 0, %s425
      %s429 = sphi 0, %s428
      %s445 = sphi 0, %s429
    $region4: #{_lambda_.1} parent=1 // loop_header_branch
      %30 = sbr.rel (%p28) target = $region8
    $region5: #{_lambda_.1} parent=1 // loop_body
      %s32 = ssub.s32 %s27, 1
      %s33 = ssub.s32 %s27, 2
      %s34 = sadd.s32 %s27, 1
      %s35 = ssub.s32 %s27, %s34
      %p36 = scmp.eq.s32.totalorder %s35, 0
      %s38 = sadd.s32 %s37, 1
      %s39 = scalar_select %p36, %s37, %s38
      %p42 = pneg %p36
      %p43 = scmp.eq.s32.totalorder %s27, 1
      %p44 = por %p42, %p43
      %p45 = scmp.ne.s32.totalorder %s37, %s40
      %p46 = scmp.eq.s32.totalorder %s27, 0
      %p47 = por %p45, %p46
      %p48 = scmp.ne.s32.totalorder %s37, %s40
      %p49 = scmp.eq.s32.totalorder %s32, 1
      %p50 = por %p48, %p49
      %p51 = scmp.ne.s32.totalorder %s40, %s41
      %p52 = scmp.eq.s32.totalorder %s32, 0
      %p53 = por %p51, %p52
      %p54 = scmp.ne.s32.totalorder %s40, %s41
      %p55 = scmp.eq.s32.totalorder %s33, 1
      %p56 = por %p54, %p55
      %p58 = scmp.ne.s32.totalorder %s41, %s57
      %p59 = scmp.eq.s32.totalorder %s33, 0
      %p60 = por %p58, %p59
      %s61 = ssub.s32 %s27, %s34
      %p62 = scmp.eq.s32.totalorder %s61, 0
      %s64 = sadd.s32 %s63, 1
      %s65 = scalar_select %p62, %s63, %s64
      %p68 = pneg %p62
      %p69 = scmp.eq.s32.totalorder %s27, 1
      %p70 = por %p68, %p69
      %p71 = scmp.ne.s32.totalorder %s63, %s66
      %p72 = scmp.eq.s32.totalorder %s27, 0
      %p73 = por %p71, %p72
      %p74 = scmp.ne.s32.totalorder %s63, %s66
      %p75 = scmp.eq.s32.totalorder %s32, 1
      %p76 = por %p74, %p75
      %p77 = scmp.ne.s32.totalorder %s66, %s67
      %p78 = scmp.eq.s32.totalorder %s32, 0
      %p79 = por %p77, %p78
      %p80 = scmp.ne.s32.totalorder %s66, %s67
      %p81 = scmp.eq.s32.totalorder %s33, 1
      %p82 = por %p80, %p81
      %p84 = scmp.ne.s32.totalorder %s67, %s83
      %p85 = scmp.eq.s32.totalorder %s33, 0
      %p86 = por %p84, %p85
      %s88 = sadd.s32 %s87, 1
      %p91 = scmp.eq.s32.totalorder %s27, 1
      %p92 = scmp.ne.s32.totalorder %s87, %s89
      %p93 = scmp.eq.s32.totalorder %s27, 0
      %p94 = por %p92, %p93
      %p95 = scmp.ne.s32.totalorder %s87, %s89
      %p96 = scmp.eq.s32.totalorder %s32, 1
      %p97 = por %p95, %p96
      %p98 = scmp.ne.s32.totalorder %s89, %s90
      %p99 = scmp.eq.s32.totalorder %s32, 0
      %p100 = por %p98, %p99
      %p101 = scmp.ne.s32.totalorder %s89, %s90
      %p102 = scmp.eq.s32.totalorder %s33, 1
      %p103 = por %p101, %p102
      %p105 = scmp.ne.s32.totalorder %s90, %s104
      %p106 = scmp.eq.s32.totalorder %s33, 0
      %p107 = por %p105, %p106
      %s109 = sadd.s32 %s108, 1
      %p112 = scmp.eq.s32.totalorder %s27, 1
      %p113 = scmp.ne.s32.totalorder %s108, %s110
      %p114 = scmp.eq.s32.totalorder %s27, 0
      %p115 = por %p113, %p114
      %p116 = scmp.ne.s32.totalorder %s108, %s110
      %p117 = scmp.eq.s32.totalorder %s32, 1
      %p118 = por %p116, %p117
      %p119 = scmp.ne.s32.totalorder %s110, %s111
      %p120 = scmp.eq.s32.totalorder %s32, 0
      %p121 = por %p119, %p120
      %p122 = scmp.ne.s32.totalorder %s110, %s111
      %p123 = scmp.eq.s32.totalorder %s33, 1
      %p124 = por %p122, %p123
      %p126 = scmp.ne.s32.totalorder %s111, %s125
      %p127 = scmp.eq.s32.totalorder %s33, 0
      %p128 = por %p126, %p127
      %s130 = sadd.s32 %s129, 1
      %p133 = scmp.eq.s32.totalorder %s27, 1
      %p134 = scmp.ne.s32.totalorder %s129, %s131
      %p135 = scmp.eq.s32.totalorder %s27, 0
      %p136 = por %p134, %p135
      %p137 = scmp.ne.s32.totalorder %s129, %s131
      %p138 = scmp.eq.s32.totalorder %s32, 1
      %p139 = por %p137, %p138
      %p140 = scmp.ne.s32.totalorder %s131, %s132
      %p141 = scmp.eq.s32.totalorder %s32, 0
      %p142 = por %p140, %p141
      %p143 = scmp.ne.s32.totalorder %s131, %s132
      %p144 = scmp.eq.s32.totalorder %s33, 1
      %p145 = por %p143, %p144
      %p147 = scmp.ne.s32.totalorder %s132, %s146
      %p148 = scmp.eq.s32.totalorder %s33, 0
      %p149 = por %p147, %p148
      %s151 = sadd.s32 %s150, 1
      %p154 = scmp.eq.s32.totalorder %s27, 1
      %p155 = scmp.ne.s32.totalorder %s150, %s152
      %p156 = scmp.eq.s32.totalorder %s27, 0
      %p157 = por %p155, %p156
      %p158 = scmp.ne.s32.totalorder %s150, %s152
      %p159 = scmp.eq.s32.totalorder %s32, 1
      %p160 = por %p158, %p159
      %p161 = scmp.ne.s32.totalorder %s152, %s153
      %p162 = scmp.eq.s32.totalorder %s32, 0
      %p163 = por %p161, %p162
      %p164 = scmp.ne.s32.totalorder %s152, %s153
      %p165 = scmp.eq.s32.totalorder %s33, 1
      %p166 = por %p164, %p165
      %p168 = scmp.ne.s32.totalorder %s153, %s167
      %p169 = scmp.eq.s32.totalorder %s33, 0
      %p170 = por %p168, %p169
      %s172 = sadd.s32 %s171, 1
      %p175 = scmp.eq.s32.totalorder %s27, 1
      %p176 = scmp.ne.s32.totalorder %s171, %s173
      %p177 = scmp.eq.s32.totalorder %s27, 0
      %p178 = por %p176, %p177
      %p179 = scmp.ne.s32.totalorder %s171, %s173
      %p180 = scmp.eq.s32.totalorder %s32, 1
      %p181 = por %p179, %p180
      %p182 = scmp.ne.s32.totalorder %s173, %s174
      %p183 = scmp.eq.s32.totalorder %s32, 0
      %p184 = por %p182, %p183
      %p185 = scmp.ne.s32.totalorder %s173, %s174
      %p186 = scmp.eq.s32.totalorder %s33, 1
      %p187 = por %p185, %p186
      %p189 = scmp.ne.s32.totalorder %s174, %s188
      %p190 = scmp.eq.s32.totalorder %s33, 0
      %p191 = por %p189, %p190
      %s193 = sadd.s32 %s192, 1
      %p196 = scmp.eq.s32.totalorder %s27, 1
      %p197 = scmp.ne.s32.totalorder %s192, %s194
      %p198 = scmp.eq.s32.totalorder %s27, 0
      %p199 = por %p197, %p198
      %p200 = scmp.ne.s32.totalorder %s192, %s194
      %p201 = scmp.eq.s32.totalorder %s32, 1
      %p202 = por %p200, %p201
      %p203 = scmp.ne.s32.totalorder %s194, %s195
      %p204 = scmp.eq.s32.totalorder %s32, 0
      %p205 = por %p203, %p204
      %p206 = scmp.ne.s32.totalorder %s194, %s195
      %p207 = scmp.eq.s32.totalorder %s33, 1
      %p208 = por %p206, %p207
      %p210 = scmp.ne.s32.totalorder %s195, %s209
      %p211 = scmp.eq.s32.totalorder %s33, 0
      %p212 = por %p210, %p211
      %s214 = sadd.s32 %s213, 1
      %p217 = scmp.eq.s32.totalorder %s27, 1
      %p218 = scmp.ne.s32.totalorder %s213, %s215
      %p219 = scmp.eq.s32.totalorder %s27, 0
      %p220 = por %p218, %p219
      %p221 = scmp.ne.s32.totalorder %s213, %s215
      %p222 = scmp.eq.s32.totalorder %s32, 1
      %p223 = por %p221, %p222
      %p224 = scmp.ne.s32.totalorder %s215, %s216
      %p225 = scmp.eq.s32.totalorder %s32, 0
      %p226 = por %p224, %p225
      %p227 = scmp.ne.s32.totalorder %s215, %s216
      %p228 = scmp.eq.s32.totalorder %s33, 1
      %p229 = por %p227, %p228
      %p231 = scmp.ne.s32.totalorder %s216, %s230
      %p232 = scmp.eq.s32.totalorder %s33, 0
      %p233 = por %p231, %p232
      %s235 = sadd.s32 %s234, 1
      %p238 = scmp.eq.s32.totalorder %s27, 1
      %p239 = scmp.ne.s32.totalorder %s234, %s236
      %p240 = scmp.eq.s32.totalorder %s27, 0
      %p241 = por %p239, %p240
      %p242 = scmp.ne.s32.totalorder %s234, %s236
      %p243 = scmp.eq.s32.totalorder %s32, 1
      %p244 = por %p242, %p243
      %p245 = scmp.ne.s32.totalorder %s236, %s237
      %p246 = scmp.eq.s32.totalorder %s32, 0
      %p247 = por %p245, %p246
      %p248 = scmp.ne.s32.totalorder %s236, %s237
      %p249 = scmp.eq.s32.totalorder %s33, 1
      %p250 = por %p248, %p249
      %p252 = scmp.ne.s32.totalorder %s237, %s251
      %p253 = scmp.eq.s32.totalorder %s33, 0
      %p254 = por %p252, %p253
      %s256 = sadd.s32 %s255, 1
      %p259 = scmp.eq.s32.totalorder %s27, 1
      %p260 = scmp.ne.s32.totalorder %s255, %s257
      %p261 = scmp.eq.s32.totalorder %s27, 0
      %p262 = por %p260, %p261
      %p263 = scmp.ne.s32.totalorder %s255, %s257
      %p264 = scmp.eq.s32.totalorder %s32, 1
      %p265 = por %p263, %p264
      %p266 = scmp.ne.s32.totalorder %s257, %s258
      %p267 = scmp.eq.s32.totalorder %s32, 0
      %p268 = por %p266, %p267
      %p269 = scmp.ne.s32.totalorder %s257, %s258
      %p270 = scmp.eq.s32.totalorder %s33, 1
      %p271 = por %p269, %p270
      %p273 = scmp.ne.s32.totalorder %s258, %s272
      %p274 = scmp.eq.s32.totalorder %s33, 0
      %p275 = por %p273, %p274
      %s277 = sadd.s32 %s276, 1
      %p280 = scmp.eq.s32.totalorder %s27, 1
      %p281 = scmp.ne.s32.totalorder %s276, %s278
      %p282 = scmp.eq.s32.totalorder %s27, 0
      %p283 = por %p281, %p282
      %p284 = scmp.ne.s32.totalorder %s276, %s278
      %p285 = scmp.eq.s32.totalorder %s32, 1
      %p286 = por %p284, %p285
      %p287 = scmp.ne.s32.totalorder %s278, %s279
      %p288 = scmp.eq.s32.totalorder %s32, 0
      %p289 = por %p287, %p288
      %p290 = scmp.ne.s32.totalorder %s278, %s279
      %p291 = scmp.eq.s32.totalorder %s33, 1
      %p292 = por %p290, %p291
      %p294 = scmp.ne.s32.totalorder %s279, %s293
      %p295 = scmp.eq.s32.totalorder %s33, 0
      %p296 = por %p294, %p295
      %s298 = sadd.s32 %s297, 1
      %p301 = scmp.eq.s32.totalorder %s27, 1
      %p302 = scmp.ne.s32.totalorder %s297, %s299
      %p303 = scmp.eq.s32.totalorder %s27, 0
      %p304 = por %p302, %p303
      %p305 = scmp.ne.s32.totalorder %s297, %s299
      %p306 = scmp.eq.s32.totalorder %s32, 1
      %p307 = por %p305, %p306
      %p308 = scmp.ne.s32.totalorder %s299, %s300
      %p309 = scmp.eq.s32.totalorder %s32, 0
      %p310 = por %p308, %p309
      %p311 = scmp.ne.s32.totalorder %s299, %s300
      %p312 = scmp.eq.s32.totalorder %s33, 1
      %p313 = por %p311, %p312
      %p315 = scmp.ne.s32.totalorder %s300, %s314
      %p316 = scmp.eq.s32.totalorder %s33, 0
      %p317 = por %p315, %p316
      %s319 = sadd.s32 %s318, 1
      %p322 = scmp.eq.s32.totalorder %s27, 1
      %p323 = scmp.ne.s32.totalorder %s318, %s320
      %p324 = scmp.eq.s32.totalorder %s27, 0
      %p325 = por %p323, %p324
      %p326 = scmp.ne.s32.totalorder %s318, %s320
      %p327 = scmp.eq.s32.totalorder %s32, 1
      %p328 = por %p326, %p327
      %p329 = scmp.ne.s32.totalorder %s320, %s321
      %p330 = scmp.eq.s32.totalorder %s32, 0
      %p331 = por %p329, %p330
      %p332 = scmp.ne.s32.totalorder %s320, %s321
      %p333 = scmp.eq.s32.totalorder %s33, 1
      %p334 = por %p332, %p333
      %p336 = scmp.ne.s32.totalorder %s321, %s335
      %p337 = scmp.eq.s32.totalorder %s33, 0
      %p338 = por %p336, %p337
      %s340 = sadd.s32 %s339, 1
      %p343 = scmp.eq.s32.totalorder %s27, 1
      %p344 = scmp.ne.s32.totalorder %s339, %s341
      %p345 = scmp.eq.s32.totalorder %s27, 0
      %p346 = por %p344, %p345
      %p347 = scmp.ne.s32.totalorder %s339, %s341
      %p348 = scmp.eq.s32.totalorder %s32, 1
      %p349 = por %p347, %p348
      %p350 = scmp.ne.s32.totalorder %s341, %s342
      %p351 = scmp.eq.s32.totalorder %s32, 0
      %p352 = por %p350, %p351
      %p353 = scmp.ne.s32.totalorder %s341, %s342
      %p354 = scmp.eq.s32.totalorder %s33, 1
      %p355 = por %p353, %p354
      %p357 = scmp.ne.s32.totalorder %s342, %s356
      %p358 = scmp.eq.s32.totalorder %s33, 0
      %p359 = por %p357, %p358
      %s361 = sadd.s32 %s360, 1
      %p364 = scmp.eq.s32.totalorder %s27, 1
      %p365 = scmp.ne.s32.totalorder %s360, %s362
      %p366 = scmp.eq.s32.totalorder %s27, 0
      %p367 = por %p365, %p366
      %p368 = scmp.ne.s32.totalorder %s360, %s362
      %p369 = scmp.eq.s32.totalorder %s32, 1
      %p370 = por %p368, %p369
      %p371 = scmp.ne.s32.totalorder %s362, %s363
      %p372 = scmp.eq.s32.totalorder %s32, 0
      %p373 = por %p371, %p372
      %p374 = scmp.ne.s32.totalorder %s362, %s363
      %p375 = scmp.eq.s32.totalorder %s33, 1
      %p376 = por %p374, %p375
      %p378 = scmp.ne.s32.totalorder %s363, %s377
      %p379 = scmp.eq.s32.totalorder %s33, 0
      %p380 = por %p378, %p379
      %s382 = sadd.s32 %s381, 1
      %p385 = scmp.eq.s32.totalorder %s27, 1
      %p386 = scmp.ne.s32.totalorder %s381, %s383
      %p387 = scmp.eq.s32.totalorder %s27, 0
      %p388 = por %p386, %p387
      %p389 = scmp.ne.s32.totalorder %s381, %s383
      %p390 = scmp.eq.s32.totalorder %s32, 1
      %p391 = por %p389, %p390
      %p392 = scmp.ne.s32.totalorder %s383, %s384
      %p393 = scmp.eq.s32.totalorder %s32, 0
      %p394 = por %p392, %p393
      %p395 = scmp.ne.s32.totalorder %s383, %s384
      %p396 = scmp.eq.s32.totalorder %s33, 1
      %p397 = por %p395, %p396
      %p399 = scmp.ne.s32.totalorder %s384, %s398
      %p400 = scmp.eq.s32.totalorder %s33, 0
      %p401 = por %p399, %p400
      %s403 = sadd.s32 %s402, 1
      %p406 = scmp.eq.s32.totalorder %s27, 1
      %p407 = scmp.ne.s32.totalorder %s402, %s404
      %p408 = scmp.eq.s32.totalorder %s27, 0
      %p409 = por %p407, %p408
      %p410 = scmp.ne.s32.totalorder %s402, %s404
      %p411 = scmp.eq.s32.totalorder %s32, 1
      %p412 = por %p410, %p411
      %p413 = scmp.ne.s32.totalorder %s404, %s405
      %p414 = scmp.eq.s32.totalorder %s32, 0
      %p415 = por %p413, %p414
      %p416 = scmp.ne.s32.totalorder %s404, %s405
      %p417 = scmp.eq.s32.totalorder %s33, 1
      %p418 = por %p416, %p417
      %p420 = scmp.ne.s32.totalorder %s405, %s419
      %p421 = scmp.eq.s32.totalorder %s33, 0
      %p422 = por %p420, %p421
      %s423 = ssub.s32 %s27, %s34
      %p424 = scmp.eq.s32.totalorder %s423, 0
      %s426 = sadd.s32 %s425, 1
      %s427 = scalar_select %p424, %s425, %s426
      %p430 = pneg %p424
      %p431 = scmp.eq.s32.totalorder %s27, 1
      %p432 = por %p430, %p431
      %p433 = scmp.ne.s32.totalorder %s425, %s428
      %p434 = scmp.eq.s32.totalorder %s27, 0
      %p435 = por %p433, %p434
      %p436 = scmp.ne.s32.totalorder %s425, %s428
      %p437 = scmp.eq.s32.totalorder %s32, 1
      %p438 = por %p436, %p437
      %p439 = scmp.ne.s32.totalorder %s428, %s429
      %p440 = scmp.eq.s32.totalorder %s32, 0
      %p441 = por %p439, %p440
      %p442 = scmp.ne.s32.totalorder %s428, %s429
      %p443 = scmp.eq.s32.totalorder %s33, 1
      %p444 = por %p442, %p443
      %p446 = scmp.ne.s32.totalorder %s429, %s445
      %p447 = scmp.eq.s32.totalorder %s33, 0
      %p448 = por %p446, %p447
      %p449 = scmp.le.s32.totalorder 1, %s27
      %p450 = scmp.lt.s32.totalorder %s27, 3
      %p451 = pnand %p449, %p450
      %p452 = pneg %p451
      // Predicated region
      $region9: #{_lambda_.1} parent=5 // pred_check
        _
      $region10: #{_lambda_.1} parent=5 // pred_check_branch
        %454 = sbr.rel (%p451) target = $region12
      $region11: #{_lambda_.1} parent=5 // pred_region
        %s455 = ssub.s32 %s27, 1
        // Predicated region
        $region13: #{_lambda_.1} parent=11 // pred_check
          %p456 = pneg %p100
        $region14: #{_lambda_.1} parent=11 // pred_check_branch
          %458 = sbr.rel (%p456) target = $region16
        $region15: #{_lambda_.1} parent=11 // pred_region
          _
        $region16: #{_lambda_.1} parent=11 // pred_fallthru
          _
        // Predicated region
        $region17: #{_lambda_.1} parent=11 // pred_check
          %p459 = pneg %p121
        $region18: #{_lambda_.1} parent=11 // pred_check_branch
          %461 = sbr.rel (%p459) target = $region20
        $region19: #{_lambda_.1} parent=11 // pred_region
          _
        $region20: #{_lambda_.1} parent=11 // pred_fallthru
          _
        // Predicated region
        $region21: #{_lambda_.1} parent=11 // pred_check
          %p462 = pneg %p142
        $region22: #{_lambda_.1} parent=11 // pred_check_branch
          %464 = sbr.rel (%p462) target = $region24
        $region23: #{_lambda_.1} parent=11 // pred_region
          _
        $region24: #{_lambda_.1} parent=11 // pred_fallthru
          _
        // Predicated region
        $region25: #{_lambda_.1} parent=11 // pred_check
          %p465 = pneg %p163
        $region26: #{_lambda_.1} parent=11 // pred_check_branch
          %467 = sbr.rel (%p465) target = $region28
        $region27: #{_lambda_.1} parent=11 // pred_region
          _
        $region28: #{_lambda_.1} parent=11 // pred_fallthru
          _
        // Predicated region
        $region29: #{_lambda_.1} parent=11 // pred_check
          %p468 = pneg %p184
        $region30: #{_lambda_.1} parent=11 // pred_check_branch
          %470 = sbr.rel (%p468) target = $region32
        $region31: #{_lambda_.1} parent=11 // pred_region
          _
        $region32: #{_lambda_.1} parent=11 // pred_fallthru
          _
        // Predicated region
        $region33: #{_lambda_.1} parent=11 // pred_check
          %p471 = pneg %p205
        $region34: #{_lambda_.1} parent=11 // pred_check_branch
          %473 = sbr.rel (%p471) target = $region36
        $region35: #{_lambda_.1} parent=11 // pred_region
          _
        $region36: #{_lambda_.1} parent=11 // pred_fallthru
          _
        // Predicated region
        $region37: #{_lambda_.1} parent=11 // pred_check
          %p474 = pneg %p226
        $region38: #{_lambda_.1} parent=11 // pred_check_branch
          %476 = sbr.rel (%p474) target = $region40
        $region39: #{_lambda_.1} parent=11 // pred_region
          _
        $region40: #{_lambda_.1} parent=11 // pred_fallthru
          _
        // Predicated region
        $region41: #{_lambda_.1} parent=11 // pred_check
          %p477 = pneg %p247
        $region42: #{_lambda_.1} parent=11 // pred_check_branch
          %479 = sbr.rel (%p477) target = $region44
        $region43: #{_lambda_.1} parent=11 // pred_region
          _
        $region44: #{_lambda_.1} parent=11 // pred_fallthru
          _
        // Predicated region
        $region45: #{_lambda_.1} parent=11 // pred_check
          %p480 = pneg %p268
        $region46: #{_lambda_.1} parent=11 // pred_check_branch
          %482 = sbr.rel (%p480) target = $region48
        $region47: #{_lambda_.1} parent=11 // pred_region
          _
        $region48: #{_lambda_.1} parent=11 // pred_fallthru
          _
        // Predicated region
        $region49: #{_lambda_.1} parent=11 // pred_check
          %p483 = pneg %p289
        $region50: #{_lambda_.1} parent=11 // pred_check_branch
          %485 = sbr.rel (%p483) target = $region52
        $region51: #{_lambda_.1} parent=11 // pred_region
          _
        $region52: #{_lambda_.1} parent=11 // pred_fallthru
          _
        // Predicated region
        $region53: #{_lambda_.1} parent=11 // pred_check
          %p486 = pneg %p310
        $region54: #{_lambda_.1} parent=11 // pred_check_branch
          %488 = sbr.rel (%p486) target = $region56
        $region55: #{_lambda_.1} parent=11 // pred_region
          _
        $region56: #{_lambda_.1} parent=11 // pred_fallthru
          _
        // Predicated region
        $region57: #{_lambda_.1} parent=11 // pred_check
          %p489 = pneg %p331
        $region58: #{_lambda_.1} parent=11 // pred_check_branch
          %491 = sbr.rel (%p489) target = $region60
        $region59: #{_lambda_.1} parent=11 // pred_region
          _
        $region60: #{_lambda_.1} parent=11 // pred_fallthru
          _
        // Predicated region
        $region61: #{_lambda_.1} parent=11 // pred_check
          %p492 = pneg %p352
        $region62: #{_lambda_.1} parent=11 // pred_check_branch
          %494 = sbr.rel (%p492) target = $region64
        $region63: #{_lambda_.1} parent=11 // pred_region
          _
        $region64: #{_lambda_.1} parent=11 // pred_fallthru
          _
        // Predicated region
        $region65: #{_lambda_.1} parent=11 // pred_check
          %p495 = pneg %p373
        $region66: #{_lambda_.1} parent=11 // pred_check_branch
          %497 = sbr.rel (%p495) target = $region68
        $region67: #{_lambda_.1} parent=11 // pred_region
          _
        $region68: #{_lambda_.1} parent=11 // pred_fallthru
          _
        // Predicated region
        $region69: #{_lambda_.1} parent=11 // pred_check
          %p498 = pneg %p394
        $region70: #{_lambda_.1} parent=11 // pred_check_branch
          %500 = sbr.rel (%p498) target = $region72
        $region71: #{_lambda_.1} parent=11 // pred_region
          _
        $region72: #{_lambda_.1} parent=11 // pred_fallthru
          _
        // Predicated region
        $region73: #{_lambda_.1} parent=11 // pred_check
          %p501 = pneg %p415
        $region74: #{_lambda_.1} parent=11 // pred_check_branch
          %503 = sbr.rel (%p501) target = $region76
        $region75: #{_lambda_.1} parent=11 // pred_region
          _
        $region76: #{_lambda_.1} parent=11 // pred_fallthru
          _
      $region12: #{_lambda_.1} parent=5 // pred_fallthru
        _
      %p504 = scmp.lt.s32.totalorder %s27, 2
      // Predicated region
      $region77: #{_lambda_.1} parent=5 // pred_check
        %p505 = pneg %p504
      $region78: #{_lambda_.1} parent=5 // pred_check_branch
        %507 = sbr.rel (%p505) target = $region80
      $region79: #{_lambda_.1} parent=5 // pred_region
        // Predicated region
        $region81: #{_lambda_.1} parent=79 // pred_check
          %p508 = pneg %p47
        $region82: #{_lambda_.1} parent=79 // pred_check_branch
          %510 = sbr.rel (%p508) target = $region84
        $region83: #{_lambda_.1} parent=79 // pred_region
          %p511 = scmp.lt.s32.totalorder %s27, 1
          %s512 = scalar_select %p511, %s27, 1
          %s513 = smul.addr %s512, 8
          %s514 = scalar_lea.vmem %s0, %s513
        $region84: #{_lambda_.1} parent=79 // pred_fallthru
          _
        // Predicated region
        $region85: #{_lambda_.1} parent=79 // pred_check
          %p515 = pneg %p73
        $region86: #{_lambda_.1} parent=79 // pred_check_branch
          %517 = sbr.rel (%p515) target = $region88
        $region87: #{_lambda_.1} parent=79 // pred_region
          %p518 = scmp.lt.s32.totalorder %s27, 1
          %s519 = scalar_select %p518, %s27, 1
          %s520 = scalar_lea.vmem %s1, %s519
        $region88: #{_lambda_.1} parent=79 // pred_fallthru
          _
      $region80: #{_lambda_.1} parent=5 // pred_fallthru
        _
      %p521 = scmp.le.s32.totalorder 1, %s27
      %p522 = scmp.lt.s32.totalorder %s27, 3
      %p523 = pnand %p521, %p522
      %p524 = pneg %p523
      // Predicated region
      $region89: #{_lambda_.1} parent=5 // pred_check
        _
      $region90: #{_lambda_.1} parent=5 // pred_check_branch
        %526 = sbr.rel (%p523) target = $region92
      $region91: #{_lambda_.1} parent=5 // pred_region
        %s527 = ssub.s32 %s27, 1
        %p528 = scmp.lt.s32.totalorder %s32, 1
        %s529 = scalar_select %p528, %s32, 1
        %s530 = smul.addr %s529, 8
        %s531 = scalar_lea.vmem %s0, %s530
        %p532 = pneg %p53
        %p533 = pneg %p50
        %p534 = scmp.lt.s32.totalorder %s32, 1
        %s535 = scalar_select %p534, %s32, 1
        %s536 = scalar_lea.vmem %s1, %s535
        %p537 = pneg %p79
        %p538 = pneg %p76
        %p539 = pneg %p100
        %p540 = pneg %p97
        %p541 = pneg %p121
        %p542 = pneg %p118
        %p543 = pneg %p142
        %p544 = pneg %p139
        %p545 = pneg %p163
        %p546 = pneg %p160
        %p547 = pneg %p184
        %p548 = pneg %p181
        %p549 = pneg %p205
        %p550 = pneg %p202
        %p551 = pneg %p226
        %p552 = pneg %p223
        %p553 = pneg %p247
        %p554 = pneg %p244
        %p555 = pneg %p268
        %p556 = pneg %p265
        %p557 = pneg %p289
        %p558 = pneg %p286
        %p559 = pneg %p310
        %p560 = pneg %p307
        %p561 = pneg %p331
        %p562 = pneg %p328
        %p563 = pneg %p352
        %p564 = pneg %p349
        %p565 = pneg %p373
        %p566 = pneg %p370
        %p567 = pneg %p394
        %p568 = pneg %p391
        %p569 = pneg %p415
        %p570 = pneg %p412
        %p571 = pneg %p441
        %p572 = pneg %p438
        %s573 = sand.u32 %s428, 1
        %s574 = scalar_lea.sflag [#allocation3], %s573
        %s575 = sand.u32 %s428, 1
        %s576 = smul.addr %s575, 8
        %s577 = scalar_lea.vmem [#allocation2], %s576
        %p578 = scmp.lt.s32.totalorder %s32, 1
        %s579 = scalar_select %p578, %s32, 1
        %s580 = smul.addr %s579, 8
        %s581 = scalar_lea.vmem %s0, %s580
        %p582 = scmp.lt.s32.totalorder %s32, 1
        %s583 = scalar_select %p582, %s32, 1
        %s584 = scalar_lea.vmem %s1, %s583
        %v586 = vld [vmem:[%s584] sm:$0x1]
        %v587 = vld [vmem:[%s581] sm:$0xff]
        %v588 = vld [vmem:[%s2] sm:$0x1]
        %v589 = vld [vmem:[%s3] sm:$0x1]
        %vm590 = vcmask 261120
        %v591 = vsel %vm590, %v587, 0.0
        %592 = vadd.xlane.f32.xlu0 %v591
        %v593 = vpop.xlane.xlu0 %592
        %v594 = vrcp.pop 32.0
        %v595 = vmul.f32 %v593, %v594
        %v596 = vsub.f32 %v587, %v595
        %v597 = vmul.f32 %v596, %v596
        %v598 = vsel %vm590, %v597, 0.0
        %599 = vadd.xlane.f32.xlu0 %v598
        %v600 = vpop.xlane.xlu0 %599
        %v601 = vmul.f32 %v600, %v594
        %v602 = vadd.f32 %v601, 1e-12
        %v603 = vrsqrt.pop %v602
        %v604 = vmul.f32 %v596, %v603
        %v606 = vlaneseq
        %v607 = vshrl.u32 %v606, 7
        %v608 = vsub.s32 0, %v607
        %v609 = vrot.slane %v588, %v608
        %v611 = vmul.f32 %v604, %v609
        %v613 = vlaneseq
        %v614 = vshrl.u32 %v613, 7
        %v615 = vsub.s32 0, %v614
        %v616 = vrot.slane %v589, %v615
        %v618 = vadd.f32 %v611, %v616
        %v619 = vpack.c.bf16 %v618, %v618
        %v620 = vld [vmem:[%s4] sm:$0xf]
        %v621 = vld [vmem:[%s4 + $0x4] sm:$0xf]
        %v622 = vld [vmem:[%s4 + $0x8] sm:$0xf]
        %v623 = vld [vmem:[%s4 + $0xc] sm:$0xf]
        %v624 = vld [vmem:[%s5] sm:$0x1]
        %v626 = vlaneseq
        %v627 = vshrl.u32 %v626, 7
        %v628 = vsub.s32 0, %v627
        %v629 = vrot.slane %v624, %v628
        %v635 = vunpack.c.l.b16 %v620
        %v636 = vunpack.c.l.b16 %v621
        %v637 = vunpack.c.l.b16 %v622
        %v638 = vunpack.c.l.b16 %v623
        %v639 = vpack.c.b16 %v636, %v635
        %v640 = vpack.c.b16 %v638, %v637
        %v644 = vsel %vm590, %v619, 0
        %646 = vmatprep.subr.bf16.mxu0 0
        %647 = vmatpush1.bf16.msra.mxu0 %v639
        %648 = vmatprep.subr.bf16.mxu0 0
        %649 = vmatpush1.bf16.msra.mxu0 %v640
        %650 = vmatprep.subr.bf16.mxu0 0
        %651 = vmatpush1.bf16.msra.mxu0 0
        %652 = vmatprep.subr.bf16.mxu0 0
        %653 = vmatpush1.bf16.msra.mxu0 0
        %654 = vmatprep.subr.bf16.mxu0 0
        %655 = vmatpush1.bf16.msra.mxu0 0
        %656 = vmatprep.subr.bf16.mxu0 0
        %657 = vmatpush1.bf16.msra.mxu0 0
        %658 = vmatprep.subr.bf16.mxu0 0
        %659 = vmatpush1.bf16.msra.mxu0 0
        %660 = vmatprep.subr.bf16.mxu0 0
        %661 = vmatpush1.bf16.msra.mxu0 0
        %662 = vmatprep.subr.bf16.mxu0 0
        %663 = vmatpush1.bf16.msra.mxu0 0
        %664 = vmatprep.subr.bf16.mxu0 0
        %665 = vmatpush1.bf16.msra.mxu0 0
        %666 = vmatprep.subr.bf16.mxu0 0
        %667 = vmatpush1.bf16.msra.mxu0 0
        %668 = vmatprep.subr.bf16.mxu0 0
        %669 = vmatpush1.bf16.msra.mxu0 0
        %670 = vmatprep.subr.bf16.mxu0 0
        %671 = vmatpush1.bf16.msra.mxu0 0
        %672 = vmatprep.subr.bf16.mxu0 0
        %673 = vmatpush1.bf16.msra.mxu0 0
        %674 = vmatprep.subr.bf16.mxu0 0
        %675 = vmatpush1.bf16.msra.mxu0 0
        %676 = vmatprep.subr.bf16.mxu0 0
        %677 = vmatpush1.bf16.msra.mxu0 0
        %678 = vmatprep.mubr.bf16.mxu0 0
        %679 = vmatmul.mubr.bf16.gmra.mrb[0].mxu0 %v644
        %v680 = vpop.f32.mrb[0].mxu0
        %v681 = vadd.f32 %v629, %v680
        %v682 = vpop.f32.mrb[0].mxu0
        %v683 = vpop.f32.mrb[0].mxu0
        %v684 = vpop.f32.mrb[0].mxu0
        %685 = vdwg.mxu0
        %v686 = vpack.c.bf16 %v681, %v681
        %688 = vrot.lane.b32.xlu0 %v686, 120
        %v689 = vpop.permute.xlu0 %688
        %690 = vrot.lane.b32.xlu0 %v686, 112
        %v691 = vpop.permute.xlu0 %690
        %692 = vrot.lane.b32.xlu0 %v686, 104
        %v693 = vpop.permute.xlu0 %692
        %694 = vrot.lane.b32.xlu0 %v686, 96
        %v695 = vpop.permute.xlu0 %694
        %vm696 = vcmask 64512
        %v698 = vsel %vm696, %v686, 0
        %v701 = vsel %vm696, %v695, 0
        %703 = vmatprep.subr.bf16.mxu0 0
        %704 = vmatpush1.bf16.xpose.msra.mxu0 %v701
        %705 = vmatprep.subr.bf16.mxu0 0
        %706 = vmatpush1.bf16.xpose.msra.mxu0 0
        %707 = vmatprep.subr.bf16.mxu0 0
        %708 = vmatpush1.bf16.xpose.msra.mxu0 0
        %709 = vmatprep.subr.bf16.mxu0 0
        %710 = vmatpush1.bf16.xpose.msra.mxu0 0
        %711 = vmatprep.subr.bf16.mxu0 0
        %712 = vmatpush1.bf16.xpose.msra.mxu0 0
        %713 = vmatprep.subr.bf16.mxu0 0
        %714 = vmatpush1.bf16.xpose.msra.mxu0 0
        %715 = vmatprep.subr.bf16.mxu0 0
        %716 = vmatpush1.bf16.xpose.msra.mxu0 0
        %717 = vmatprep.subr.bf16.mxu0 0
        %718 = vmatpush1.bf16.xpose.msra.mxu0 0
        %719 = vmatprep.subr.bf16.mxu0 0
        %720 = vmatpush1.bf16.xpose.msra.mxu0 0
        %721 = vmatprep.subr.bf16.mxu0 0
        %722 = vmatpush1.bf16.xpose.msra.mxu0 0
        %723 = vmatprep.subr.bf16.mxu0 0
        %724 = vmatpush1.bf16.xpose.msra.mxu0 0
        %725 = vmatprep.subr.bf16.mxu0 0
        %726 = vmatpush1.bf16.xpose.msra.mxu0 0
        %727 = vmatprep.subr.bf16.mxu0 0
        %728 = vmatpush1.bf16.xpose.msra.mxu0 0
        %729 = vmatprep.subr.bf16.mxu0 0
        %730 = vmatpush1.bf16.xpose.msra.mxu0 0
        %731 = vmatprep.subr.bf16.mxu0 0
        %732 = vmatpush1.bf16.xpose.msra.mxu0 0
        %733 = vmatprep.subr.bf16.mxu0 0
        %734 = vmatpush1.bf16.xpose.msra.mxu0 0
        %735 = vmatprep.mubr.bf16.mxu0 0
        %736 = vmatmul.mubr.bf16.gmra.mrb[0].mxu0 %v698
        %v737 = vpop.f32.mrb[0].mxu0
        %v738 = vadd.f32 0.0, %v737
        %v739 = vpop.f32.mrb[0].mxu0
        %v740 = vpop.f32.mrb[0].mxu0
        %v741 = vpop.f32.mrb[0].mxu0
        %742 = vdwg.mxu0
        %743 = vrot.lane.b32.xlu0 %v689, 96
        %v744 = vpop.permute.xlu0 %743
        %v746 = vsel %vm696, %v689, 0
        %v749 = vsel %vm696, %v744, 0
        %751 = vmatprep.subr.bf16.mxu0 0
        %752 = vmatpush1.bf16.xpose.msra.mxu0 %v749
        %753 = vmatprep.subr.bf16.mxu0 0
        %754 = vmatpush1.bf16.xpose.msra.mxu0 0
        %755 = vmatprep.subr.bf16.mxu0 0
        %756 = vmatpush1.bf16.xpose.msra.mxu0 0
        %757 = vmatprep.subr.bf16.mxu0 0
        %758 = vmatpush1.bf16.xpose.msra.mxu0 0
        %759 = vmatprep.subr.bf16.mxu0 0
        %760 = vmatpush1.bf16.xpose.msra.mxu0 0
        %761 = vmatprep.subr.bf16.mxu0 0
        %762 = vmatpush1.bf16.xpose.msra.mxu0 0
        %763 = vmatprep.subr.bf16.mxu0 0
        %764 = vmatpush1.bf16.xpose.msra.mxu0 0
        %765 = vmatprep.subr.bf16.mxu0 0
        %766 = vmatpush1.bf16.xpose.msra.mxu0 0
        %767 = vmatprep.subr.bf16.mxu0 0
        %768 = vmatpush1.bf16.xpose.msra.mxu0 0
        %769 = vmatprep.subr.bf16.mxu0 0
        %770 = vmatpush1.bf16.xpose.msra.mxu0 0
        %771 = vmatprep.subr.bf16.mxu0 0
        %772 = vmatpush1.bf16.xpose.msra.mxu0 0
        %773 = vmatprep.subr.bf16.mxu0 0
        %774 = vmatpush1.bf16.xpose.msra.mxu0 0
        %775 = vmatprep.subr.bf16.mxu0 0
        %776 = vmatpush1.bf16.xpose.msra.mxu0 0
        %777 = vmatprep.subr.bf16.mxu0 0
        %778 = vmatpush1.bf16.xpose.msra.mxu0 0
        %779 = vmatprep.subr.bf16.mxu0 0
        %780 = vmatpush1.bf16.xpose.msra.mxu0 0
        %781 = vmatprep.subr.bf16.mxu0 0
        %782 = vmatpush1.bf16.xpose.msra.mxu0 0
        %783 = vmatprep.mubr.bf16.mxu0 0
        %784 = vmatmul.mubr.bf16.gmra.mrb[0].mxu0 %v746
        %v785 = vpop.f32.mrb[0].mxu0
        %v786 = vadd.f32 0.0, %v785
        %v787 = vpop.f32.mrb[0].mxu0
        %v788 = vpop.f32.mrb[0].mxu0
        %v789 = vpop.f32.mrb[0].mxu0
        %790 = vdwg.mxu0
        %791 = vrot.lane.b32.xlu0 %v691, 96
        %v792 = vpop.permute.xlu0 %791
        %v794 = vsel %vm696, %v691, 0
        %v797 = vsel %vm696, %v792, 0
        %799 = vmatprep.subr.bf16.mxu0 0
        %800 = vmatpush1.bf16.xpose.msra.mxu0 %v797
        %801 = vmatprep.subr.bf16.mxu0 0
        %802 = vmatpush1.bf16.xpose.msra.mxu0 0
        %803 = vmatprep.subr.bf16.mxu0 0
        %804 = vmatpush1.bf16.xpose.msra.mxu0 0
        %805 = vmatprep.subr.bf16.mxu0 0
        %806 = vmatpush1.bf16.xpose.msra.mxu0 0
        %807 = vmatprep.subr.bf16.mxu0 0
        %808 = vmatpush1.bf16.xpose.msra.mxu0 0
        %809 = vmatprep.subr.bf16.mxu0 0
        %810 = vmatpush1.bf16.xpose.msra.mxu0 0
        %811 = vmatprep.subr.bf16.mxu0 0
        %812 = vmatpush1.bf16.xpose.msra.mxu0 0
        %813 = vmatprep.subr.bf16.mxu0 0
        %814 = vmatpush1.bf16.xpose.msra.mxu0 0
        %815 = vmatprep.subr.bf16.mxu0 0
        %816 = vmatpush1.bf16.xpose.msra.mxu0 0
        %817 = vmatprep.subr.bf16.mxu0 0
        %818 = vmatpush1.bf16.xpose.msra.mxu0 0
        %819 = vmatprep.subr.bf16.mxu0 0
        %820 = vmatpush1.bf16.xpose.msra.mxu0 0
        %821 = vmatprep.subr.bf16.mxu0 0
        %822 = vmatpush1.bf16.xpose.msra.mxu0 0
        %823 = vmatprep.subr.bf16.mxu0 0
        %824 = vmatpush1.bf16.xpose.msra.mxu0 0
        %825 = vmatprep.subr.bf16.mxu0 0
        %826 = vmatpush1.bf16.xpose.msra.mxu0 0
        %827 = vmatprep.subr.bf16.mxu0 0
        %828 = vmatpush1.bf16.xpose.msra.mxu0 0
        %829 = vmatprep.subr.bf16.mxu0 0
        %830 = vmatpush1.bf16.xpose.msra.mxu0 0
        %831 = vmatprep.mubr.bf16.mxu0 0
        %832 = vmatmul.mubr.bf16.gmra.mrb[0].mxu0 %v794
        %v833 = vpop.f32.mrb[0].mxu0
        %v834 = vadd.f32 0.0, %v833
        %v835 = vpop.f32.mrb[0].mxu0
        %v836 = vpop.f32.mrb[0].mxu0
        %v837 = vpop.f32.mrb[0].mxu0
        %838 = vdwg.mxu0
        %839 = vrot.lane.b32.xlu0 %v693, 96
        %v840 = vpop.permute.xlu0 %839
        %v842 = vsel %vm696, %v693, 0
        %v845 = vsel %vm696, %v840, 0
        %847 = vmatprep.subr.bf16.mxu0 0
        %848 = vmatpush1.bf16.xpose.msra.mxu0 %v845
        %849 = vmatprep.subr.bf16.mxu0 0
        %850 = vmatpush1.bf16.xpose.msra.mxu0 0
        %851 = vmatprep.subr.bf16.mxu0 0
        %852 = vmatpush1.bf16.xpose.msra.mxu0 0
        %853 = vmatprep.subr.bf16.mxu0 0
        %854 = vmatpush1.bf16.xpose.msra.mxu0 0
        %855 = vmatprep.subr.bf16.mxu0 0
        %856 = vmatpush1.bf16.xpose.msra.mxu0 0
        %857 = vmatprep.subr.bf16.mxu0 0
        %858 = vmatpush1.bf16.xpose.msra.mxu0 0
        %859 = vmatprep.subr.bf16.mxu0 0
        %860 = vmatpush1.bf16.xpose.msra.mxu0 0
        %861 = vmatprep.subr.bf16.mxu0 0
        %862 = vmatpush1.bf16.xpose.msra.mxu0 0
        %863 = vmatprep.subr.bf16.mxu0 0
        %864 = vmatpush1.bf16.xpose.msra.mxu0 0
        %865 = vmatprep.subr.bf16.mxu0 0
        %866 = vmatpush1.bf16.xpose.msra.mxu0 0
        %867 = vmatprep.subr.bf16.mxu0 0
        %868 = vmatpush1.bf16.xpose.msra.mxu0 0
        %869 = vmatprep.subr.bf16.mxu0 0
        %870 = vmatpush1.bf16.xpose.msra.mxu0 0
        %871 = vmatprep.subr.bf16.mxu0 0
        %872 = vmatpush1.bf16.xpose.msra.mxu0 0
        %873 = vmatprep.subr.bf16.mxu0 0
        %874 = vmatpush1.bf16.xpose.msra.mxu0 0
        %875 = vmatprep.subr.bf16.mxu0 0
        %876 = vmatpush1.bf16.xpose.msra.mxu0 0
        %877 = vmatprep.subr.bf16.mxu0 0
        %878 = vmatpush1.bf16.xpose.msra.mxu0 0
        %879 = vmatprep.mubr.bf16.mxu0 0
        %880 = vmatmul.mubr.bf16.gmra.mrb[0].mxu0 %v842
        %v881 = vpop.f32.mrb[0].mxu0
        %v882 = vadd.f32 0.0, %v881
        %v883 = vpop.f32.mrb[0].mxu0
        %v884 = vpop.f32.mrb[0].mxu0
        %v885 = vpop.f32.mrb[0].mxu0
        %886 = vdwg.mxu0
        %v887 = vmul.f32 %v738, 0.35355338
        %v888 = vmul.f32 %v786, 0.35355338
        %v889 = vmul.f32 %v834, 0.35355338
        %v890 = vmul.f32 %v882, 0.35355338
        %v892 = vlaneseq
        %v893 = vshrl.u32 %v892, 7
        %v894 = vsub.s32 0, %v893
        %v895 = vrot.slane %v586, %v894
        %v897 = vadd.f32 %v887, %v895
        %v898 = vadd.f32 %v888, %v895
        %v899 = vadd.f32 %v889, %v895
        %v900 = vadd.f32 %v890, %v895
        %v901 = vsel %vm696, %v897, -inf
        %902 = vmax.xlane.f32.xlu0 %v901
        %v903 = vpop.xlane.xlu0 %902
        %v904 = vsel %vm696, %v898, -inf
        %905 = vmax.xlane.f32.xlu0 %v904
        %v906 = vpop.xlane.xlu0 %905
        %v907 = vsel %vm696, %v899, -inf
        %908 = vmax.xlane.f32.xlu0 %v907
        %v909 = vpop.xlane.xlu0 %908
        %v910 = vsel %vm696, %v900, -inf
        %911 = vmax.xlane.f32.xlu0 %v910
        %v912 = vpop.xlane.xlu0 %911
        %v913 = vsub.f32 %v897, %v903
        %v914 = vsub.f32 %v898, %v906
        %v915 = vsub.f32 %v899, %v909
        %v916 = vsub.f32 %v900, %v912
        %v917 = vmul.f32 %v913, 1.442695
        %v918 = vpow.pop %v917
        %v919 = vmul.f32 %v914, 1.442695
        %v920 = vpow.pop %v919
        %v921 = vmul.f32 %v915, 1.442695
        %v922 = vpow.pop %v921
        %v923 = vmul.f32 %v916, 1.442695
        %v924 = vpow.pop %v923
        %v925 = vsel %vm696, %v918, 0.0
        %926 = vadd.xlane.f32.xlu0 %v925
        %v927 = vpop.xlane.xlu0 %926
        %v928 = vsel %vm696, %v920, 0.0
        %929 = vadd.xlane.f32.xlu0 %v928
        %v930 = vpop.xlane.xlu0 %929
        %v931 = vsel %vm696, %v922, 0.0
        %932 = vadd.xlane.f32.xlu0 %v931
        %v933 = vpop.xlane.xlu0 %932
        %v934 = vsel %vm696, %v924, 0.0
        %935 = vadd.xlane.f32.xlu0 %v934
        %v936 = vpop.xlane.xlu0 %935
        %v937 = vrcp.pop %v927
        %v938 = vrcp.pop %v930
        %v939 = vrcp.pop %v933
        %v940 = vrcp.pop %v936
        %v941 = vmul.f32 %v918, %v937
        %v942 = vmul.f32 %v920, %v938
        %v943 = vmul.f32 %v922, %v939
        %v944 = vmul.f32 %v924, %v940
        %v945 = vpack.c.bf16 %v941, %v941
        %v946 = vpack.c.bf16 %v942, %v942
        %v947 = vpack.c.bf16 %v943, %v943
        %v948 = vpack.c.bf16 %v944, %v944
        %949 = vrot.lane.b32.xlu0 %v686, 64
        %v950 = vpop.permute.xlu0 %949
        %v952 = vsel %vm696, %v945, 0
        %vm954 = vcmask 1043456
        %v956 = vsel %vm954, %v950, 0
        %958 = vmatprep.subr.bf16.mxu0 0
        %959 = vmatpush1.bf16.msra.mxu0 %v956
        %960 = vmatprep.subr.bf16.mxu0 0
        %961 = vmatpush1.bf16.msra.mxu0 0
        %962 = vmatprep.subr.bf16.mxu0 0
        %963 = vmatpush1.bf16.msra.mxu0 0
        %964 = vmatprep.subr.bf16.mxu0 0
        %965 = vmatpush1.bf16.msra.mxu0 0
        %966 = vmatprep.subr.bf16.mxu0 0
        %967 = vmatpush1.bf16.msra.mxu0 0
        %968 = vmatprep.subr.bf16.mxu0 0
        %969 = vmatpush1.bf16.msra.mxu0 0
        %970 = vmatprep.subr.bf16.mxu0 0
        %971 = vmatpush1.bf16.msra.mxu0 0
        %972 = vmatprep.subr.bf16.mxu0 0
        %973 = vmatpush1.bf16.msra.mxu0 0
        %974 = vmatprep.subr.bf16.mxu0 0
        %975 = vmatpush1.bf16.msra.mxu0 0
        %976 = vmatprep.subr.bf16.mxu0 0
        %977 = vmatpush1.bf16.msra.mxu0 0
        %978 = vmatprep.subr.bf16.mxu0 0
        %979 = vmatpush1.bf16.msra.mxu0 0
        %980 = vmatprep.subr.bf16.mxu0 0
        %981 = vmatpush1.bf16.msra.mxu0 0
        %982 = vmatprep.subr.bf16.mxu0 0
        %983 = vmatpush1.bf16.msra.mxu0 0
        %984 = vmatprep.subr.bf16.mxu0 0
        %985 = vmatpush1.bf16.msra.mxu0 0
        %986 = vmatprep.subr.bf16.mxu0 0
        %987 = vmatpush1.bf16.msra.mxu0 0
        %988 = vmatprep.subr.bf16.mxu0 0
        %989 = vmatpush1.bf16.msra.mxu0 0
        %990 = vmatprep.mubr.bf16.mxu0 0
        %991 = vmatmul.mubr.bf16.gmra.mrb[0].mxu0 %v952
        %v992 = vpop.f32.mrb[0].mxu0
        %v993 = vadd.f32 0.0, %v992
        %v994 = vpop.f32.mrb[0].mxu0
        %v995 = vpop.f32.mrb[0].mxu0
        %v996 = vpop.f32.mrb[0].mxu0
        %997 = vdwg.mxu0
        %998 = vrot.lane.b32.xlu0 %v689, 64
        %v999 = vpop.permute.xlu0 %998
        %v1001 = vsel %vm696, %v946, 0
        %v1004 = vsel %vm954, %v999, 0
        %1006 = vmatprep.subr.bf16.mxu0 0
        %1007 = vmatpush1.bf16.msra.mxu0 %v1004
        %1008 = vmatprep.subr.bf16.mxu0 0
        %1009 = vmatpush1.bf16.msra.mxu0 0
        %1010 = vmatprep.subr.bf16.mxu0 0
        %1011 = vmatpush1.bf16.msra.mxu0 0
        %1012 = vmatprep.subr.bf16.mxu0 0
        %1013 = vmatpush1.bf16.msra.mxu0 0
        %1014 = vmatprep.subr.bf16.mxu0 0
        %1015 = vmatpush1.bf16.msra.mxu0 0
        %1016 = vmatprep.subr.bf16.mxu0 0
        %1017 = vmatpush1.bf16.msra.mxu0 0
        %1018 = vmatprep.subr.bf16.mxu0 0
        %1019 = vmatpush1.bf16.msra.mxu0 0
        %1020 = vmatprep.subr.bf16.mxu0 0
        %1021 = vmatpush1.bf16.msra.mxu0 0
        %1022 = vmatprep.subr.bf16.mxu0 0
        %1023 = vmatpush1.bf16.msra.mxu0 0
        %1024 = vmatprep.subr.bf16.mxu0 0
        %1025 = vmatpush1.bf16.msra.mxu0 0
        %1026 = vmatprep.subr.bf16.mxu0 0
        %1027 = vmatpush1.bf16.msra.mxu0 0
        %1028 = vmatprep.subr.bf16.mxu0 0
        %1029 = vmatpush1.bf16.msra.mxu0 0
        %1030 = vmatprep.subr.bf16.mxu0 0
        %1031 = vmatpush1.bf16.msra.mxu0 0
        %1032 = vmatprep.subr.bf16.mxu0 0
        %1033 = vmatpush1.bf16.msra.mxu0 0
        %1034 = vmatprep.subr.bf16.mxu0 0
        %1035 = vmatpush1.bf16.msra.mxu0 0
        %1036 = vmatprep.subr.bf16.mxu0 0
        %1037 = vmatpush1.bf16.msra.mxu0 0
        %1038 = vmatprep.mubr.bf16.mxu0 0
        %1039 = vmatmul.mubr.bf16.gmra.mrb[0].mxu0 %v1001
        %v1040 = vpop.f32.mrb[0].mxu0
        %v1041 = vadd.f32 0.0, %v1040
        %v1042 = vpop.f32.mrb[0].mxu0
        %v1043 = vpop.f32.mrb[0].mxu0
        %v1044 = vpop.f32.mrb[0].mxu0
        %1045 = vdwg.mxu0
        %1046 = vrot.lane.b32.xlu0 %v691, 64
        %v1047 = vpop.permute.xlu0 %1046
        %v1049 = vsel %vm696, %v947, 0
        %v1052 = vsel %vm954, %v1047, 0
        %1054 = vmatprep.subr.bf16.mxu0 0
        %1055 = vmatpush1.bf16.msra.mxu0 %v1052
        %1056 = vmatprep.subr.bf16.mxu0 0
        %1057 = vmatpush1.bf16.msra.mxu0 0
        %1058 = vmatprep.subr.bf16.mxu0 0
        %1059 = vmatpush1.bf16.msra.mxu0 0
        %1060 = vmatprep.subr.bf16.mxu0 0
        %1061 = vmatpush1.bf16.msra.mxu0 0
        %1062 = vmatprep.subr.bf16.mxu0 0
        %1063 = vmatpush1.bf16.msra.mxu0 0
        %1064 = vmatprep.subr.bf16.mxu0 0
        %1065 = vmatpush1.bf16.msra.mxu0 0
        %1066 = vmatprep.subr.bf16.mxu0 0
        %1067 = vmatpush1.bf16.msra.mxu0 0
        %1068 = vmatprep.subr.bf16.mxu0 0
        %1069 = vmatpush1.bf16.msra.mxu0 0
        %1070 = vmatprep.subr.bf16.mxu0 0
        %1071 = vmatpush1.bf16.msra.mxu0 0
        %1072 = vmatprep.subr.bf16.mxu0 0
        %1073 = vmatpush1.bf16.msra.mxu0 0
        %1074 = vmatprep.subr.bf16.mxu0 0
        %1075 = vmatpush1.bf16.msra.mxu0 0
        %1076 = vmatprep.subr.bf16.mxu0 0
        %1077 = vmatpush1.bf16.msra.mxu0 0
        %1078 = vmatprep.subr.bf16.mxu0 0
        %1079 = vmatpush1.bf16.msra.mxu0 0
        %1080 = vmatprep.subr.bf16.mxu0 0
        %1081 = vmatpush1.bf16.msra.mxu0 0
        %1082 = vmatprep.subr.bf16.mxu0 0
        %1083 = vmatpush1.bf16.msra.mxu0 0
        %1084 = vmatprep.subr.bf16.mxu0 0
        %1085 = vmatpush1.bf16.msra.mxu0 0
        %1086 = vmatprep.mubr.bf16.mxu0 0
        %1087 = vmatmul.mubr.bf16.gmra.mrb[0].mxu0 %v1049
        %v1088 = vpop.f32.mrb[0].mxu0
        %v1089 = vadd.f32 0.0, %v1088
        %v1090 = vpop.f32.mrb[0].mxu0
        %v1091 = vpop.f32.mrb[0].mxu0
        %v1092 = vpop.f32.mrb[0].mxu0
        %1093 = vdwg.mxu0
        %1094 = vrot.lane.b32.xlu0 %v693, 64
        %v1095 = vpop.permute.xlu0 %1094
        %v1097 = vsel %vm696, %v948, 0
        %v1100 = vsel %vm954, %v1095, 0
        %1102 = vmatprep.subr.bf16.mxu0 0
        %1103 = vmatpush1.bf16.msra.mxu0 %v1100
        %1104 = vmatprep.subr.bf16.mxu0 0
        %1105 = vmatpush1.bf16.msra.mxu0 0
        %1106 = vmatprep.subr.bf16.mxu0 0
        %1107 = vmatpush1.bf16.msra.mxu0 0
        %1108 = vmatprep.subr.bf16.mxu0 0
        %1109 = vmatpush1.bf16.msra.mxu0 0
        %1110 = vmatprep.subr.bf16.mxu0 0
        %1111 = vmatpush1.bf16.msra.mxu0 0
        %1112 = vmatprep.subr.bf16.mxu0 0
        %1113 = vmatpush1.bf16.msra.mxu0 0
        %1114 = vmatprep.subr.bf16.mxu0 0
        %1115 = vmatpush1.bf16.msra.mxu0 0
        %1116 = vmatprep.subr.bf16.mxu0 0
        %1117 = vmatpush1.bf16.msra.mxu0 0
        %1118 = vmatprep.subr.bf16.mxu0 0
        %1119 = vmatpush1.bf16.msra.mxu0 0
        %1120 = vmatprep.subr.bf16.mxu0 0
        %1121 = vmatpush1.bf16.msra.mxu0 0
        %1122 = vmatprep.subr.bf16.mxu0 0
        %1123 = vmatpush1.bf16.msra.mxu0 0
        %1124 = vmatprep.subr.bf16.mxu0 0
        %1125 = vmatpush1.bf16.msra.mxu0 0
        %1126 = vmatprep.subr.bf16.mxu0 0
        %1127 = vmatpush1.bf16.msra.mxu0 0
        %1128 = vmatprep.subr.bf16.mxu0 0
        %1129 = vmatpush1.bf16.msra.mxu0 0
        %1130 = vmatprep.subr.bf16.mxu0 0
        %1131 = vmatpush1.bf16.msra.mxu0 0
        %1132 = vmatprep.subr.bf16.mxu0 0
        %1133 = vmatpush1.bf16.msra.mxu0 0
        %1134 = vmatprep.mubr.bf16.mxu0 0
        %1135 = vmatmul.mubr.bf16.gmra.mrb[0].mxu0 %v1097
        %v1136 = vpop.f32.mrb[0].mxu0
        %v1137 = vadd.f32 0.0, %v1136
        %v1138 = vpop.f32.mrb[0].mxu0
        %v1139 = vpop.f32.mrb[0].mxu0
        %v1140 = vpop.f32.mrb[0].mxu0
        %1141 = vdwg.mxu0
        %1143 = vrot.lane.b32.xlu0 %v1041, 8
        %v1144 = vpop.permute.xlu0 %1143
        %1147 = vrot.lane.b32.xlu0 %v1089, 16
        %v1148 = vpop.permute.xlu0 %1147
        %1151 = vrot.lane.b32.xlu0 %v1137, 24
        %v1152 = vpop.permute.xlu0 %1151
        %v1154 = vsel %vm696, %v993, %v1144
        %vm1155 = vcmask 130048
        %v1156 = vsel %vm1155, %v1154, %v1148
        %vm1157 = vcmask 195584
        %v1158 = vsel %vm1157, %v1156, %v1152
        %v1159 = vpack.c.bf16 %v1158, %v1158
        %v1160 = vld [vmem:[%s6] sm:$0xf]
        %v1161 = vld [vmem:[%s6 + $0x4] sm:$0xf]
        %v1162 = vld [vmem:[%s6 + $0x8] sm:$0xf]
        %v1163 = vld [vmem:[%s6 + $0xc] sm:$0xf]
        %v1164 = vld [vmem:[%s7] sm:$0x1]
        %v1166 = vlaneseq
        %v1167 = vshrl.u32 %v1166, 7
        %v1168 = vsub.s32 0, %v1167
        %v1169 = vrot.slane %v1164, %v1168
        %v1175 = vunpack.c.l.b16 %v1160
        %v1176 = vunpack.c.l.b16 %v1161
        %v1177 = vunpack.c.l.b16 %v1162
        %v1178 = vunpack.c.l.b16 %v1163
        %v1179 = vpack.c.b16 %v1176, %v1175
        %v1180 = vpack.c.b16 %v1178, %v1177
        %v1184 = vsel %vm590, %v1159, 0
        %1186 = vmatprep.subr.bf16.mxu0 0
        %1187 = vmatpush1.bf16.msra.mxu0 %v1179
        %1188 = vmatprep.subr.bf16.mxu0 0
        %1189 = vmatpush1.bf16.msra.mxu0 %v1180
        %1190 = vmatprep.subr.bf16.mxu0 0
        %1191 = vmatpush1.bf16.msra.mxu0 0
        %1192 = vmatprep.subr.bf16.mxu0 0
        %1193 = vmatpush1.bf16.msra.mxu0 0
        %1194 = vmatprep.subr.bf16.mxu0 0
        %1195 = vmatpush1.bf16.msra.mxu0 0
        %1196 = vmatprep.subr.bf16.mxu0 0
        %1197 = vmatpush1.bf16.msra.mxu0 0
        %1198 = vmatprep.subr.bf16.mxu0 0
        %1199 = vmatpush1.bf16.msra.mxu0 0
        %1200 = vmatprep.subr.bf16.mxu0 0
        %1201 = vmatpush1.bf16.msra.mxu0 0
        %1202 = vmatprep.subr.bf16.mxu0 0
        %1203 = vmatpush1.bf16.msra.mxu0 0
        %1204 = vmatprep.subr.bf16.mxu0 0
        %1205 = vmatpush1.bf16.msra.mxu0 0
        %1206 = vmatprep.subr.bf16.mxu0 0
        %1207 = vmatpush1.bf16.msra.mxu0 0
        %1208 = vmatprep.subr.bf16.mxu0 0
        %1209 = vmatpush1.bf16.msra.mxu0 0
        %1210 = vmatprep.subr.bf16.mxu0 0
        %1211 = vmatpush1.bf16.msra.mxu0 0
        %1212 = vmatprep.subr.bf16.mxu0 0
        %1213 = vmatpush1.bf16.msra.mxu0 0
        %1214 = vmatprep.subr.bf16.mxu0 0
        %1215 = vmatpush1.bf16.msra.mxu0 0
        %1216 = vmatprep.subr.bf16.mxu0 0
        %1217 = vmatpush1.bf16.msra.mxu0 0
        %1218 = vmatprep.mubr.bf16.mxu0 0
        %1219 = vmatmul.mubr.bf16.gmra.mrb[0].mxu0 %v1184
        %v1220 = vpop.f32.mrb[0].mxu0
        %v1221 = vadd.f32 %v1169, %v1220
        %v1222 = vpop.f32.mrb[0].mxu0
        %v1223 = vpop.f32.mrb[0].mxu0
        %v1224 = vpop.f32.mrb[0].mxu0
        %1225 = vdwg.mxu0
        %v1226 = vadd.f32 %v618, %v1221
        %v1227 = vld [vmem:[%s8] sm:$0x1]
        %v1228 = vld [vmem:[%s9] sm:$0x1]
        %v1229 = vsel %vm590, %v1226, 0.0
        %1230 = vadd.xlane.f32.xlu0 %v1229
        %v1231 = vpop.xlane.xlu0 %1230
        %v1232 = vmul.f32 %v1231, %v594
        %v1233 = vsub.f32 %v1226, %v1232
        %v1234 = vmul.f32 %v1233, %v1233
        %v1235 = vsel %vm590, %v1234, 0.0
        %1236 = vadd.xlane.f32.xlu0 %v1235
        %v1237 = vpop.xlane.xlu0 %1236
        %v1238 = vmul.f32 %v1237, %v594
        %v1239 = vadd.f32 %v1238, 1e-12
        %v1240 = vrsqrt.pop %v1239
        %v1241 = vmul.f32 %v1233, %v1240
        %v1243 = vlaneseq
        %v1244 = vshrl.u32 %v1243, 7
        %v1245 = vsub.s32 0, %v1244
        %v1246 = vrot.slane %v1227, %v1245
        %v1248 = vmul.f32 %v1241, %v1246
        %v1250 = vlaneseq
        %v1251 = vshrl.u32 %v1250, 7
        %v1252 = vsub.s32 0, %v1251
        %v1253 = vrot.slane %v1228, %v1252
        %v1255 = vadd.f32 %v1248, %v1253
        %v1256 = vpack.c.bf16 %v1255, %v1255
        %v1257 = vld [vmem:[%s10] sm:$0xf]
        %v1258 = vld [vmem:[%s10 + $0x4] sm:$0xf]
        %v1259 = vld [vmem:[%s10 + $0x8] sm:$0xf]
        %v1260 = vld [vmem:[%s10 + $0xc] sm:$0xf]
        %v1261 = vld [vmem:[%s11] sm:$0x1]
        %v1263 = vlaneseq
        %v1264 = vshrl.u32 %v1263, 7
        %v1265 = vsub.s32 0, %v1264
        %v1266 = vrot.slane %v1261, %v1265
        %v1272 = vunpack.c.l.b16 %v1257
        %v1273 = vunpack.c.l.b16 %v1258
        %v1274 = vunpack.c.l.b16 %v1259
        %v1275 = vunpack.c.l.b16 %v1260
        %v1276 = vpack.c.b16 %v1273, %v1272
        %v1277 = vpack.c.b16 %v1275, %v1274
        %v1281 = vsel %vm590, %v1256, 0
        %1283 = vmatprep.subr.bf16.mxu0 0
        %1284 = vmatpush1.bf16.msra.mxu0 %v1276
        %1285 = vmatprep.subr.bf16.mxu0 0
        %1286 = vmatpush1.bf16.msra.mxu0 %v1277
        %1287 = vmatprep.subr.bf16.mxu0 0
        %1288 = vmatpush1.bf16.msra.mxu0 0
        %1289 = vmatprep.subr.bf16.mxu0 0
        %1290 = vmatpush1.bf16.msra.mxu0 0
        %1291 = vmatprep.subr.bf16.mxu0 0
        %1292 = vmatpush1.bf16.msra.mxu0 0
        %1293 = vmatprep.subr.bf16.mxu0 0
        %1294 = vmatpush1.bf16.msra.mxu0 0
        %1295 = vmatprep.subr.bf16.mxu0 0
        %1296 = vmatpush1.bf16.msra.mxu0 0
        %1297 = vmatprep.subr.bf16.mxu0 0
        %1298 = vmatpush1.bf16.msra.mxu0 0
        %1299 = vmatprep.subr.bf16.mxu0 0
        %1300 = vmatpush1.bf16.msra.mxu0 0
        %1301 = vmatprep.subr.bf16.mxu0 0
        %1302 = vmatpush1.bf16.msra.mxu0 0
        %1303 = vmatprep.subr.bf16.mxu0 0
        %1304 = vmatpush1.bf16.msra.mxu0 0
        %1305 = vmatprep.subr.bf16.mxu0 0
        %1306 = vmatpush1.bf16.msra.mxu0 0
        %1307 = vmatprep.subr.bf16.mxu0 0
        %1308 = vmatpush1.bf16.msra.mxu0 0
        %1309 = vmatprep.subr.bf16.mxu0 0
        %1310 = vmatpush1.bf16.msra.mxu0 0
        %1311 = vmatprep.subr.bf16.mxu0 0
        %1312 = vmatpush1.bf16.msra.mxu0 0
        %1313 = vmatprep.subr.bf16.mxu0 0
        %1314 = vmatpush1.bf16.msra.mxu0 0
        %1315 = vmatprep.mubr.bf16.mxu0 0
        %1316 = vmatmul.mubr.bf16.gmra.mrb[0].mxu0 %v1281
        %v1317 = vpop.f32.mrb[0].mxu0
        %v1318 = vadd.f32 %v1266, %v1317
        %v1319 = vpop.f32.mrb[0].mxu0
        %v1320 = vpop.f32.mrb[0].mxu0
        %v1321 = vpop.f32.mrb[0].mxu0
        %1322 = vdwg.mxu0
        %v1323 = vmul.f32 %v1318, 0.5
        %v1324 = vmul.f32 %v1318, 0.044715
        %v1325 = vmul.f32 %v1324, %v1318
        %v1326 = vmul.f32 %v1325, %v1318
        %v1327 = vadd.f32 %v1318, %v1326
        %v1328 = vmul.f32 %v1327, 0.7978846
        %v1329 = vtanh.pop %v1328
        %v1330 = vadd.f32 %v1329, 1.0
        %v1331 = vmul.f32 %v1323, %v1330
        %v1332 = vpack.c.bf16 %v1331, %v1331
        %v1333 = vld [vmem:[%s12] sm:$0xf]
        %v1334 = vld [vmem:[%s12 + $0x4] sm:$0xf]
        %v1335 = vld [vmem:[%s12 + $0x8] sm:$0xf]
        %v1336 = vld [vmem:[%s12 + $0xc] sm:$0xf]
        %v1337 = vld [vmem:[%s12 + $0x10] sm:$0xf]
        %v1338 = vld [vmem:[%s12 + $0x14] sm:$0xf]
        %v1339 = vld [vmem:[%s12 + $0x18] sm:$0xf]
        %v1340 = vld [vmem:[%s12 + $0x1c] sm:$0xf]
        %v1341 = vld [vmem:[%s13] sm:$0x1]
        %v1343 = vlaneseq
        %v1344 = vshrl.u32 %v1343, 7
        %v1345 = vsub.s32 0, %v1344
        %v1346 = vrot.slane %v1341, %v1345
        %v1356 = vunpack.c.l.b16 %v1333
        %v1357 = vunpack.c.l.b16 %v1334
        %v1358 = vunpack.c.l.b16 %v1335
        %v1359 = vunpack.c.l.b16 %v1336
        %v1360 = vunpack.c.l.b16 %v1337
        %v1361 = vunpack.c.l.b16 %v1338
        %v1362 = vunpack.c.l.b16 %v1339
        %v1363 = vunpack.c.l.b16 %v1340
        %v1364 = vpack.c.b16 %v1357, %v1356
        %v1365 = vpack.c.b16 %v1359, %v1358
        %v1366 = vpack.c.b16 %v1361, %v1360
        %v1367 = vpack.c.b16 %v1363, %v1362
        %vm1372 = vcmask 523264
        %v1374 = vsel %vm1372, %v1332, 0
        %1376 = vmatprep.subr.bf16.mxu0 0
        %1377 = vmatpush1.bf16.msra.mxu0 %v1364
        %1378 = vmatprep.subr.bf16.mxu0 0
        %1379 = vmatpush1.bf16.msra.mxu0 %v1365
        %1380 = vmatprep.subr.bf16.mxu0 0
        %1381 = vmatpush1.bf16.msra.mxu0 %v1366
        %1382 = vmatprep.subr.bf16.mxu0 0
        %1383 = vmatpush1.bf16.msra.mxu0 %v1367
        %1384 = vmatprep.subr.bf16.mxu0 0
        %1385 = vmatpush1.bf16.msra.mxu0 0
        %1386 = vmatprep.subr.bf16.mxu0 0
        %1387 = vmatpush1.bf16.msra.mxu0 0
        %1388 = vmatprep.subr.bf16.mxu0 0
        %1389 = vmatpush1.bf16.msra.mxu0 0
        %1390 = vmatprep.subr.bf16.mxu0 0
        %1391 = vmatpush1.bf16.msra.mxu0 0
        %1392 = vmatprep.subr.bf16.mxu0 0
        %1393 = vmatpush1.bf16.msra.mxu0 0
        %1394 = vmatprep.subr.bf16.mxu0 0
        %1395 = vmatpush1.bf16.msra.mxu0 0
        %1396 = vmatprep.subr.bf16.mxu0 0
        %1397 = vmatpush1.bf16.msra.mxu0 0
        %1398 = vmatprep.subr.bf16.mxu0 0
        %1399 = vmatpush1.bf16.msra.mxu0 0
        %1400 = vmatprep.subr.bf16.mxu0 0
        %1401 = vmatpush1.bf16.msra.mxu0 0
        %1402 = vmatprep.subr.bf16.mxu0 0
        %1403 = vmatpush1.bf16.msra.mxu0 0
        %1404 = vmatprep.subr.bf16.mxu0 0
        %1405 = vmatpush1.bf16.msra.mxu0 0
        %1406 = vmatprep.subr.bf16.mxu0 0
        %1407 = vmatpush1.bf16.msra.mxu0 0
        %1408 = vmatprep.mubr.bf16.mxu0 0
        %1409 = vmatmul.mubr.bf16.gmra.mrb[0].mxu0 %v1374
        %v1410 = vpop.f32.mrb[0].mxu0
        %v1411 = vadd.f32 %v1346, %v1410
        %v1412 = vpop.f32.mrb[0].mxu0
        %v1413 = vpop.f32.mrb[0].mxu0
        %v1414 = vpop.f32.mrb[0].mxu0
        %1415 = vdwg.mxu0
        %v1416 = vadd.f32 %v1255, %v1411
        %v1417 = vld [vmem:[%s14] sm:$0x1]
        %v1418 = vld [vmem:[%s15] sm:$0x1]
        %v1419 = vsel %vm590, %v1416, 0.0
        %1420 = vadd.xlane.f32.xlu0 %v1419
        %v1421 = vpop.xlane.xlu0 %1420
        %v1422 = vmul.f32 %v1421, %v594
        %v1423 = vsub.f32 %v1416, %v1422
        %v1424 = vmul.f32 %v1423, %v1423
        %v1425 = vsel %vm590, %v1424, 0.0
        %1426 = vadd.xlane.f32.xlu0 %v1425
        %v1427 = vpop.xlane.xlu0 %1426
        %v1428 = vmul.f32 %v1427, %v594
        %v1429 = vadd.f32 %v1428, 1e-12
        %v1430 = vrsqrt.pop %v1429
        %v1431 = vmul.f32 %v1423, %v1430
        %v1433 = vlaneseq
        %v1434 = vshrl.u32 %v1433, 7
        %v1435 = vsub.s32 0, %v1434
        %v1436 = vrot.slane %v1417, %v1435
        %v1438 = vmul.f32 %v1431, %v1436
        %v1440 = vlaneseq
        %v1441 = vshrl.u32 %v1440, 7
        %v1442 = vsub.s32 0, %v1441
        %v1443 = vrot.slane %v1418, %v1442
        %v1445 = vadd.f32 %v1438, %v1443
        %v1446 = vpack.c.bf16 %v1445, %v1445
        %s1447 = scalar_lea.vmem %s4, 16
        %v1448 = vld [vmem:[%s1447] sm:$0xf]
        %v1449 = vld [vmem:[%s1447 + $0x4] sm:$0xf]
        %v1450 = vld [vmem:[%s1447 + $0x8] sm:$0xf]
        %v1451 = vld [vmem:[%s1447 + $0xc] sm:$0xf]
        %s1452 = scalar_lea.vmem %s5, 1
        %v1453 = vld [vmem:[%s1452] sm:$0x1]
        %v1455 = vlaneseq
        %v1456 = vshrl.u32 %v1455, 7
        %v1457 = vsub.s32 0, %v1456
        %v1458 = vrot.slane %v1453, %v1457
        %v1464 = vunpack.c.l.b16 %v1448
        %v1465 = vunpack.c.l.b16 %v1449
        %v1466 = vunpack.c.l.b16 %v1450
        %v1467 = vunpack.c.l.b16 %v1451
        %v1468 = vpack.c.b16 %v1465, %v1464
        %v1469 = vpack.c.b16 %v1467, %v1466
        %v1473 = vsel %vm590, %v1446, 0
        %1475 = vmatprep.subr.bf16.mxu0 0
        %1476 = vmatpush1.bf16.msra.mxu0 %v1468
        %1477 = vmatprep.subr.bf16.mxu0 0
        %1478 = vmatpush1.bf16.msra.mxu0 %v1469
        %1479 = vmatprep.subr.bf16.mxu0 0
        %1480 = vmatpush1.bf16.msra.mxu0 0
        %1481 = vmatprep.subr.bf16.mxu0 0
        %1482 = vmatpush1.bf16.msra.mxu0 0
        %1483 = vmatprep.subr.bf16.mxu0 0
        %1484 = vmatpush1.bf16.msra.mxu0 0
        %1485 = vmatprep.subr.bf16.mxu0 0
        %1486 = vmatpush1.bf16.msra.mxu0 0
        %1487 = vmatprep.subr.bf16.mxu0 0
        %1488 = vmatpush1.bf16.msra.mxu0 0
        %1489 = vmatprep.subr.bf16.mxu0 0
        %1490 = vmatpush1.bf16.msra.mxu0 0
        %1491 = vmatprep.subr.bf16.mxu0 0
        %1492 = vmatpush1.bf16.msra.mxu0 0
        %1493 = vmatprep.subr.bf16.mxu0 0
        %1494 = vmatpush1.bf16.msra.mxu0 0
        %1495 = vmatprep.subr.bf16.mxu0 0
        %1496 = vmatpush1.bf16.msra.mxu0 0
        %1497 = vmatprep.subr.bf16.mxu0 0
        %1498 = vmatpush1.bf16.msra.mxu0 0
        %1499 = vmatprep.subr.bf16.mxu0 0
        %1500 = vmatpush1.bf16.msra.mxu0 0
        %1501 = vmatprep.subr.bf16.mxu0 0
        %1502 = vmatpush1.bf16.msra.mxu0 0
        %1503 = vmatprep.subr.bf16.mxu0 0
        %1504 = vmatpush1.bf16.msra.mxu0 0
        %1505 = vmatprep.subr.bf16.mxu0 0
        %1506 = vmatpush1.bf16.msra.mxu0 0
        %1507 = vmatprep.mubr.bf16.mxu0 0
        %1508 = vmatmul.mubr.bf16.gmra.mrb[0].mxu0 %v1473
        %v1509 = vpop.f32.mrb[0].mxu0
        %v1510 = vadd.f32 %v1458, %v1509
        %v1511 = vpop.f32.mrb[0].mxu0
        %v1512 = vpop.f32.mrb[0].mxu0
        %v1513 = vpop.f32.mrb[0].mxu0
        %1514 = vdwg.mxu0
        %v1515 = vpack.c.bf16 %v1510, %v1510
        %1517 = vrot.lane.b32.xlu0 %v1515, 120
        %v1518 = vpop.permute.xlu0 %1517
        %1519 = vrot.lane.b32.xlu0 %v1515, 112
        %v1520 = vpop.permute.xlu0 %1519
        %1521 = vrot.lane.b32.xlu0 %v1515, 104
        %v1522 = vpop.permute.xlu0 %1521
        %1523 = vrot.lane.b32.xlu0 %v1515, 96
        %v1524 = vpop.permute.xlu0 %1523
        %v1526 = vsel %vm696, %v1515, 0
        %v1529 = vsel %vm696, %v1524, 0
        %1531 = vmatprep.subr.bf16.mxu0 0
        %1532 = vmatpush1.bf16.xpose.msra.mxu0 %v1529
        %1533 = vmatprep.subr.bf16.mxu0 0
        %1534 = vmatpush1.bf16.xpose.msra.mxu0 0
        %1535 = vmatprep.subr.bf16.mxu0 0
        %1536 = vmatpush1.bf16.xpose.msra.mxu0 0
        %1537 = vmatprep.subr.bf16.mxu0 0
        %1538 = vmatpush1.bf16.xpose.msra.mxu0 0
        %1539 = vmatprep.subr.bf16.mxu0 0
        %1540 = vmatpush1.bf16.xpose.msra.mxu0 0
        %1541 = vmatprep.subr.bf16.mxu0 0
        %1542 = vmatpush1.bf16.xpose.msra.mxu0 0
        %1543 = vmatprep.subr.bf16.mxu0 0
        %1544 = vmatpush1.bf16.xpose.msra.mxu0 0
        %1545 = vmatprep.subr.bf16.mxu0 0
        %1546 = vmatpush1.bf16.xpose.msra.mxu0 0
        %1547 = vmatprep.subr.bf16.mxu0 0
        %1548 = vmatpush1.bf16.xpose.msra.mxu0 0
        %1549 = vmatprep.subr.bf16.mxu0 0
        %1550 = vmatpush1.bf16.xpose.msra.mxu0 0
        %1551 = vmatprep.subr.bf16.mxu0 0
        %1552 = vmatpush1.bf16.xpose.msra.mxu0 0
        %1553 = vmatprep.subr.bf16.mxu0 0
        %1554 = vmatpush1.bf16.xpose.msra.mxu0 0
        %1555 = vmatprep.subr.bf16.mxu0 0
        %1556 = vmatpush1.bf16.xpose.msra.mxu0 0
        %1557 = vmatprep.subr.bf16.mxu0 0
        %1558 = vmatpush1.bf16.xpose.msra.mxu0 0
        %1559 = vmatprep.subr.bf16.mxu0 0
        %1560 = vmatpush1.bf16.xpose.msra.mxu0 0
        %1561 = vmatprep.subr.bf16.mxu0 0
        %1562 = vmatpush1.bf16.xpose.msra.mxu0 0
        %1563 = vmatprep.mubr.bf16.mxu0 0
        %1564 = vmatmul.mubr.bf16.gmra.mrb[0].mxu0 %v1526
        %v1565 = vpop.f32.mrb[0].mxu0
        %v1566 = vadd.f32 0.0, %v1565
        %v1567 = vpop.f32.mrb[0].mxu0
        %v1568 = vpop.f32.mrb[0].mxu0
        %v1569 = vpop.f32.mrb[0].mxu0
        %1570 = vdwg.mxu0
        %1571 = vrot.lane.b32.xlu0 %v1518, 96
        %v1572 = vpop.permute.xlu0 %1571
        %v1574 = vsel %vm696, %v1518, 0
        %v1577 = vsel %vm696, %v1572, 0
        %1579 = vmatprep.subr.bf16.mxu0 0
        %1580 = vmatpush1.bf16.xpose.msra.mxu0 %v1577
        %1581 = vmatprep.subr.bf16.mxu0 0
        %1582 = vmatpush1.bf16.xpose.msra.mxu0 0
        %1583 = vmatprep.subr.bf16.mxu0 0
        %1584 = vmatpush1.bf16.xpose.msra.mxu0 0
        %1585 = vmatprep.subr.bf16.mxu0 0
        %1586 = vmatpush1.bf16.xpose.msra.mxu0 0
        %1587 = vmatprep.subr.bf16.mxu0 0
        %1588 = vmatpush1.bf16.xpose.msra.mxu0 0
        %1589 = vmatprep.subr.bf16.mxu0 0
        %1590 = vmatpush1.bf16.xpose.msra.mxu0 0
        %1591 = vmatprep.subr.bf16.mxu0 0
        %1592 = vmatpush1.bf16.xpose.msra.mxu0 0
        %1593 = vmatprep.subr.bf16.mxu0 0
        %1594 = vmatpush1.bf16.xpose.msra.mxu0 0
        %1595 = vmatprep.subr.bf16.mxu0 0
        %1596 = vmatpush1.bf16.xpose.msra.mxu0 0
        %1597 = vmatprep.subr.bf16.mxu0 0
        %1598 = vmatpush1.bf16.xpose.msra.mxu0 0
        %1599 = vmatprep.subr.bf16.mxu0 0
        %1600 = vmatpush1.bf16.xpose.msra.mxu0 0
        %1601 = vmatprep.subr.bf16.mxu0 0
        %1602 = vmatpush1.bf16.xpose.msra.mxu0 0
        %1603 = vmatprep.subr.bf16.mxu0 0
        %1604 = vmatpush1.bf16.xpose.msra.mxu0 0
        %1605 = vmatprep.subr.bf16.mxu0 0
        %1606 = vmatpush1.bf16.xpose.msra.mxu0 0
        %1607 = vmatprep.subr.bf16.mxu0 0
        %1608 = vmatpush1.bf16.xpose.msra.mxu0 0
        %1609 = vmatprep.subr.bf16.mxu0 0
        %1610 = vmatpush1.bf16.xpose.msra.mxu0 0
        %1611 = vmatprep.mubr.bf16.mxu0 0
        %1612 = vmatmul.mubr.bf16.gmra.mrb[0].mxu0 %v1574
        %v1613 = vpop.f32.mrb[0].mxu0
        %v1614 = vadd.f32 0.0, %v1613
        %v1615 = vpop.f32.mrb[0].mxu0
        %v1616 = vpop.f32.mrb[0].mxu0
        %v1617 = vpop.f32.mrb[0].mxu0
        %1618 = vdwg.mxu0
        %1619 = vrot.lane.b32.xlu0 %v1520, 96
        %v1620 = vpop.permute.xlu0 %1619
        %v1622 = vsel %vm696, %v1520, 0
        %v1625 = vsel %vm696, %v1620, 0
        %1627 = vmatprep.subr.bf16.mxu0 0
        %1628 = vmatpush1.bf16.xpose.msra.mxu0 %v1625
        %1629 = vmatprep.subr.bf16.mxu0 0
        %1630 = vmatpush1.bf16.xpose.msra.mxu0 0
        %1631 = vmatprep.subr.bf16.mxu0 0
        %1632 = vmatpush1.bf16.xpose.msra.mxu0 0
        %1633 = vmatprep.subr.bf16.mxu0 0
        %1634 = vmatpush1.bf16.xpose.msra.mxu0 0
        %1635 = vmatprep.subr.bf16.mxu0 0
        %1636 = vmatpush1.bf16.xpose.msra.mxu0 0
        %1637 = vmatprep.subr.bf16.mxu0 0
        %1638 = vmatpush1.bf16.xpose.msra.mxu0 0
        %1639 = vmatprep.subr.bf16.mxu0 0
        %1640 = vmatpush1.bf16.xpose.msra.mxu0 0
        %1641 = vmatprep.subr.bf16.mxu0 0
        %1642 = vmatpush1.bf16.xpose.msra.mxu0 0
        %1643 = vmatprep.subr.bf16.mxu0 0
        %1644 = vmatpush1.bf16.xpose.msra.mxu0 0
        %1645 = vmatprep.subr.bf16.mxu0 0
        %1646 = vmatpush1.bf16.xpose.msra.mxu0 0
        %1647 = vmatprep.subr.bf16.mxu0 0
        %1648 = vmatpush1.bf16.xpose.msra.mxu0 0
        %1649 = vmatprep.subr.bf16.mxu0 0
        %1650 = vmatpush1.bf16.xpose.msra.mxu0 0
        %1651 = vmatprep.subr.bf16.mxu0 0
        %1652 = vmatpush1.bf16.xpose.msra.mxu0 0
        %1653 = vmatprep.subr.bf16.mxu0 0
        %1654 = vmatpush1.bf16.xpose.msra.mxu0 0
        %1655 = vmatprep.subr.bf16.mxu0 0
        %1656 = vmatpush1.bf16.xpose.msra.mxu0 0
        %1657 = vmatprep.subr.bf16.mxu0 0
        %1658 = vmatpush1.bf16.xpose.msra.mxu0 0
        %1659 = vmatprep.mubr.bf16.mxu0 0
        %1660 = vmatmul.mubr.bf16.gmra.mrb[0].mxu0 %v1622
        %v1661 = vpop.f32.mrb[0].mxu0
        %v1662 = vadd.f32 0.0, %v1661
        %v1663 = vpop.f32.mrb[0].mxu0
        %v1664 = vpop.f32.mrb[0].mxu0
        %v1665 = vpop.f32.mrb[0].mxu0
        %1666 = vdwg.mxu0
        %1667 = vrot.lane.b32.xlu0 %v1522, 96
        %v1668 = vpop.permute.xlu0 %1667
        %v1670 = vsel %vm696, %v1522, 0
        %v1673 = vsel %vm696, %v1668, 0
        %1675 = vmatprep.subr.bf16.mxu0 0
        %1676 = vmatpush1.bf16.xpose.msra.mxu0 %v1673
        %1677 = vmatprep.subr.bf16.mxu0 0
        %1678 = vmatpush1.bf16.xpose.msra.mxu0 0
        %1679 = vmatprep.subr.bf16.mxu0 0
        %1680 = vmatpush1.bf16.xpose.msra.mxu0 0
        %1681 = vmatprep.subr.bf16.mxu0 0
        %1682 = vmatpush1.bf16.xpose.msra.mxu0 0
        %1683 = vmatprep.subr.bf16.mxu0 0
        %1684 = vmatpush1.bf16.xpose.msra.mxu0 0
        %1685 = vmatprep.subr.bf16.mxu0 0
        %1686 = vmatpush1.bf16.xpose.msra.mxu0 0
        %1687 = vmatprep.subr.bf16.mxu0 0
        %1688 = vmatpush1.bf16.xpose.msra.mxu0 0
        %1689 = vmatprep.subr.bf16.mxu0 0
        %1690 = vmatpush1.bf16.xpose.msra.mxu0 0
        %1691 = vmatprep.subr.bf16.mxu0 0
        %1692 = vmatpush1.bf16.xpose.msra.mxu0 0
        %1693 = vmatprep.subr.bf16.mxu0 0
        %1694 = vmatpush1.bf16.xpose.msra.mxu0 0
        %1695 = vmatprep.subr.bf16.mxu0 0
        %1696 = vmatpush1.bf16.xpose.msra.mxu0 0
        %1697 = vmatprep.subr.bf16.mxu0 0
        %1698 = vmatpush1.bf16.xpose.msra.mxu0 0
        %1699 = vmatprep.subr.bf16.mxu0 0
        %1700 = vmatpush1.bf16.xpose.msra.mxu0 0
        %1701 = vmatprep.subr.bf16.mxu0 0
        %1702 = vmatpush1.bf16.xpose.msra.mxu0 0
        %1703 = vmatprep.subr.bf16.mxu0 0
        %1704 = vmatpush1.bf16.xpose.msra.mxu0 0
        %1705 = vmatprep.subr.bf16.mxu0 0
        %1706 = vmatpush1.bf16.xpose.msra.mxu0 0
        %1707 = vmatprep.mubr.bf16.mxu0 0
        %1708 = vmatmul.mubr.bf16.gmra.mrb[0].mxu0 %v1670
        %v1709 = vpop.f32.mrb[0].mxu0
        %v1710 = vadd.f32 0.0, %v1709
        %v1711 = vpop.f32.mrb[0].mxu0
        %v1712 = vpop.f32.mrb[0].mxu0
        %v1713 = vpop.f32.mrb[0].mxu0
        %1714 = vdwg.mxu0
        %v1715 = vmul.f32 %v1566, 0.35355338
        %v1716 = vmul.f32 %v1614, 0.35355338
        %v1717 = vmul.f32 %v1662, 0.35355338
        %v1718 = vmul.f32 %v1710, 0.35355338
        %v1719 = vadd.f32 %v1715, %v895
        %v1720 = vadd.f32 %v1716, %v895
        %v1721 = vadd.f32 %v1717, %v895
        %v1722 = vadd.f32 %v1718, %v895
        %v1723 = vsel %vm696, %v1719, -inf
        %1724 = vmax.xlane.f32.xlu0 %v1723
        %v1725 = vpop.xlane.xlu0 %1724
        %v1726 = vsel %vm696, %v1720, -inf
        %1727 = vmax.xlane.f32.xlu0 %v1726
        %v1728 = vpop.xlane.xlu0 %1727
        %v1729 = vsel %vm696, %v1721, -inf
        %1730 = vmax.xlane.f32.xlu0 %v1729
        %v1731 = vpop.xlane.xlu0 %1730
        %v1732 = vsel %vm696, %v1722, -inf
        %1733 = vmax.xlane.f32.xlu0 %v1732
        %v1734 = vpop.xlane.xlu0 %1733
        %v1735 = vsub.f32 %v1719, %v1725
        %v1736 = vsub.f32 %v1720, %v1728
        %v1737 = vsub.f32 %v1721, %v1731
        %v1738 = vsub.f32 %v1722, %v1734
        %v1739 = vmul.f32 %v1735, 1.442695
        %v1740 = vpow.pop %v1739
        %v1741 = vmul.f32 %v1736, 1.442695
        %v1742 = vpow.pop %v1741
        %v1743 = vmul.f32 %v1737, 1.442695
        %v1744 = vpow.pop %v1743
        %v1745 = vmul.f32 %v1738, 1.442695
        %v1746 = vpow.pop %v1745
        %v1747 = vsel %vm696, %v1740, 0.0
        %1748 = vadd.xlane.f32.xlu0 %v1747
        %v1749 = vpop.xlane.xlu0 %1748
        %v1750 = vsel %vm696, %v1742, 0.0
        %1751 = vadd.xlane.f32.xlu0 %v1750
        %v1752 = vpop.xlane.xlu0 %1751
        %v1753 = vsel %vm696, %v1744, 0.0
        %1754 = vadd.xlane.f32.xlu0 %v1753
        %v1755 = vpop.xlane.xlu0 %1754
        %v1756 = vsel %vm696, %v1746, 0.0
        %1757 = vadd.xlane.f32.xlu0 %v1756
        %v1758 = vpop.xlane.xlu0 %1757
        %v1759 = vrcp.pop %v1749
        %v1760 = vrcp.pop %v1752
        %v1761 = vrcp.pop %v1755
        %v1762 = vrcp.pop %v1758
        %v1763 = vmul.f32 %v1740, %v1759
        %v1764 = vmul.f32 %v1742, %v1760
        %v1765 = vmul.f32 %v1744, %v1761
        %v1766 = vmul.f32 %v1746, %v1762
        %v1767 = vpack.c.bf16 %v1763, %v1763
        %v1768 = vpack.c.bf16 %v1764, %v1764
        %v1769 = vpack.c.bf16 %v1765, %v1765
        %v1770 = vpack.c.bf16 %v1766, %v1766
        %1771 = vrot.lane.b32.xlu0 %v1515, 64
        %v1772 = vpop.permute.xlu0 %1771
        %v1774 = vsel %vm696, %v1767, 0
        %v1777 = vsel %vm954, %v1772, 0
        %1779 = vmatprep.subr.bf16.mxu0 0
        %1780 = vmatpush1.bf16.msra.mxu0 %v1777
        %1781 = vmatprep.subr.bf16.mxu0 0
        %1782 = vmatpush1.bf16.msra.mxu0 0
        %1783 = vmatprep.subr.bf16.mxu0 0
        %1784 = vmatpush1.bf16.msra.mxu0 0
        %1785 = vmatprep.subr.bf16.mxu0 0
        %1786 = vmatpush1.bf16.msra.mxu0 0
        %1787 = vmatprep.subr.bf16.mxu0 0
        %1788 = vmatpush1.bf16.msra.mxu0 0
        %1789 = vmatprep.subr.bf16.mxu0 0
        %1790 = vmatpush1.bf16.msra.mxu0 0
        %1791 = vmatprep.subr.bf16.mxu0 0
        %1792 = vmatpush1.bf16.msra.mxu0 0
        %1793 = vmatprep.subr.bf16.mxu0 0
        %1794 = vmatpush1.bf16.msra.mxu0 0
        %1795 = vmatprep.subr.bf16.mxu0 0
        %1796 = vmatpush1.bf16.msra.mxu0 0
        %1797 = vmatprep.subr.bf16.mxu0 0
        %1798 = vmatpush1.bf16.msra.mxu0 0
        %1799 = vmatprep.subr.bf16.mxu0 0
        %1800 = vmatpush1.bf16.msra.mxu0 0
        %1801 = vmatprep.subr.bf16.mxu0 0
        %1802 = vmatpush1.bf16.msra.mxu0 0
        %1803 = vmatprep.subr.bf16.mxu0 0
        %1804 = vmatpush1.bf16.msra.mxu0 0
        %1805 = vmatprep.subr.bf16.mxu0 0
        %1806 = vmatpush1.bf16.msra.mxu0 0
        %1807 = vmatprep.subr.bf16.mxu0 0
        %1808 = vmatpush1.bf16.msra.mxu0 0
        %1809 = vmatprep.subr.bf16.mxu0 0
        %1810 = vmatpush1.bf16.msra.mxu0 0
        %1811 = vmatprep.mubr.bf16.mxu0 0
        %1812 = vmatmul.mubr.bf16.gmra.mrb[0].mxu0 %v1774
        %v1813 = vpop.f32.mrb[0].mxu0
        %v1814 = vadd.f32 0.0, %v1813
        %v1815 = vpop.f32.mrb[0].mxu0
        %v1816 = vpop.f32.mrb[0].mxu0
        %v1817 = vpop.f32.mrb[0].mxu0
        %1818 = vdwg.mxu0
        %1819 = vrot.lane.b32.xlu0 %v1518, 64
        %v1820 = vpop.permute.xlu0 %1819
        %v1822 = vsel %vm696, %v1768, 0
        %v1825 = vsel %vm954, %v1820, 0
        %1827 = vmatprep.subr.bf16.mxu0 0
        %1828 = vmatpush1.bf16.msra.mxu0 %v1825
        %1829 = vmatprep.subr.bf16.mxu0 0
        %1830 = vmatpush1.bf16.msra.mxu0 0
        %1831 = vmatprep.subr.bf16.mxu0 0
        %1832 = vmatpush1.bf16.msra.mxu0 0
        %1833 = vmatprep.subr.bf16.mxu0 0
        %1834 = vmatpush1.bf16.msra.mxu0 0
        %1835 = vmatprep.subr.bf16.mxu0 0
        %1836 = vmatpush1.bf16.msra.mxu0 0
        %1837 = vmatprep.subr.bf16.mxu0 0
        %1838 = vmatpush1.bf16.msra.mxu0 0
        %1839 = vmatprep.subr.bf16.mxu0 0
        %1840 = vmatpush1.bf16.msra.mxu0 0
        %1841 = vmatprep.subr.bf16.mxu0 0
        %1842 = vmatpush1.bf16.msra.mxu0 0
        %1843 = vmatprep.subr.bf16.mxu0 0
        %1844 = vmatpush1.bf16.msra.mxu0 0
        %1845 = vmatprep.subr.bf16.mxu0 0
        %1846 = vmatpush1.bf16.msra.mxu0 0
        %1847 = vmatprep.subr.bf16.mxu0 0
        %1848 = vmatpush1.bf16.msra.mxu0 0
        %1849 = vmatprep.subr.bf16.mxu0 0
        %1850 = vmatpush1.bf16.msra.mxu0 0
        %1851 = vmatprep.subr.bf16.mxu0 0
        %1852 = vmatpush1.bf16.msra.mxu0 0
        %1853 = vmatprep.subr.bf16.mxu0 0
        %1854 = vmatpush1.bf16.msra.mxu0 0
        %1855 = vmatprep.subr.bf16.mxu0 0
        %1856 = vmatpush1.bf16.msra.mxu0 0
        %1857 = vmatprep.subr.bf16.mxu0 0
        %1858 = vmatpush1.bf16.msra.mxu0 0
        %1859 = vmatprep.mubr.bf16.mxu0 0
        %1860 = vmatmul.mubr.bf16.gmra.mrb[0].mxu0 %v1822
        %v1861 = vpop.f32.mrb[0].mxu0
        %v1862 = vadd.f32 0.0, %v1861
        %v1863 = vpop.f32.mrb[0].mxu0
        %v1864 = vpop.f32.mrb[0].mxu0
        %v1865 = vpop.f32.mrb[0].mxu0
        %1866 = vdwg.mxu0
        %1867 = vrot.lane.b32.xlu0 %v1520, 64
        %v1868 = vpop.permute.xlu0 %1867
        %v1870 = vsel %vm696, %v1769, 0
        %v1873 = vsel %vm954, %v1868, 0
        %1875 = vmatprep.subr.bf16.mxu0 0
        %1876 = vmatpush1.bf16.msra.mxu0 %v1873
        %1877 = vmatprep.subr.bf16.mxu0 0
        %1878 = vmatpush1.bf16.msra.mxu0 0
        %1879 = vmatprep.subr.bf16.mxu0 0
        %1880 = vmatpush1.bf16.msra.mxu0 0
        %1881 = vmatprep.subr.bf16.mxu0 0
        %1882 = vmatpush1.bf16.msra.mxu0 0
        %1883 = vmatprep.subr.bf16.mxu0 0
        %1884 = vmatpush1.bf16.msra.mxu0 0
        %1885 = vmatprep.subr.bf16.mxu0 0
        %1886 = vmatpush1.bf16.msra.mxu0 0
        %1887 = vmatprep.subr.bf16.mxu0 0
        %1888 = vmatpush1.bf16.msra.mxu0 0
        %1889 = vmatprep.subr.bf16.mxu0 0
        %1890 = vmatpush1.bf16.msra.mxu0 0
        %1891 = vmatprep.subr.bf16.mxu0 0
        %1892 = vmatpush1.bf16.msra.mxu0 0
        %1893 = vmatprep.subr.bf16.mxu0 0
        %1894 = vmatpush1.bf16.msra.mxu0 0
        %1895 = vmatprep.subr.bf16.mxu0 0
        %1896 = vmatpush1.bf16.msra.mxu0 0
        %1897 = vmatprep.subr.bf16.mxu0 0
        %1898 = vmatpush1.bf16.msra.mxu0 0
        %1899 = vmatprep.subr.bf16.mxu0 0
        %1900 = vmatpush1.bf16.msra.mxu0 0
        %1901 = vmatprep.subr.bf16.mxu0 0
        %1902 = vmatpush1.bf16.msra.mxu0 0
        %1903 = vmatprep.subr.bf16.mxu0 0
        %1904 = vmatpush1.bf16.msra.mxu0 0
        %1905 = vmatprep.subr.bf16.mxu0 0
        %1906 = vmatpush1.bf16.msra.mxu0 0
        %1907 = vmatprep.mubr.bf16.mxu0 0
        %1908 = vmatmul.mubr.bf16.gmra.mrb[0].mxu0 %v1870
        %v1909 = vpop.f32.mrb[0].mxu0
        %v1910 = vadd.f32 0.0, %v1909
        %v1911 = vpop.f32.mrb[0].mxu0
        %v1912 = vpop.f32.mrb[0].mxu0
        %v1913 = vpop.f32.mrb[0].mxu0
        %1914 = vdwg.mxu0
        %1915 = vrot.lane.b32.xlu0 %v1522, 64
        %v1916 = vpop.permute.xlu0 %1915
        %v1918 = vsel %vm696, %v1770, 0
        %v1921 = vsel %vm954, %v1916, 0
        %1923 = vmatprep.subr.bf16.mxu0 0
        %1924 = vmatpush1.bf16.msra.mxu0 %v1921
        %1925 = vmatprep.subr.bf16.mxu0 0
        %1926 = vmatpush1.bf16.msra.mxu0 0
        %1927 = vmatprep.subr.bf16.mxu0 0
        %1928 = vmatpush1.bf16.msra.mxu0 0
        %1929 = vmatprep.subr.bf16.mxu0 0
        %1930 = vmatpush1.bf16.msra.mxu0 0
        %1931 = vmatprep.subr.bf16.mxu0 0
        %1932 = vmatpush1.bf16.msra.mxu0 0
        %1933 = vmatprep.subr.bf16.mxu0 0
        %1934 = vmatpush1.bf16.msra.mxu0 0
        %1935 = vmatprep.subr.bf16.mxu0 0
        %1936 = vmatpush1.bf16.msra.mxu0 0
        %1937 = vmatprep.subr.bf16.mxu0 0
        %1938 = vmatpush1.bf16.msra.mxu0 0
        %1939 = vmatprep.subr.bf16.mxu0 0
        %1940 = vmatpush1.bf16.msra.mxu0 0
        %1941 = vmatprep.subr.bf16.mxu0 0
        %1942 = vmatpush1.bf16.msra.mxu0 0
        %1943 = vmatprep.subr.bf16.mxu0 0
        %1944 = vmatpush1.bf16.msra.mxu0 0
        %1945 = vmatprep.subr.bf16.mxu0 0
        %1946 = vmatpush1.bf16.msra.mxu0 0
        %1947 = vmatprep.subr.bf16.mxu0 0
        %1948 = vmatpush1.bf16.msra.mxu0 0
        %1949 = vmatprep.subr.bf16.mxu0 0
        %1950 = vmatpush1.bf16.msra.mxu0 0
        %1951 = vmatprep.subr.bf16.mxu0 0
        %1952 = vmatpush1.bf16.msra.mxu0 0
        %1953 = vmatprep.subr.bf16.mxu0 0
        %1954 = vmatpush1.bf16.msra.mxu0 0
        %1955 = vmatprep.mubr.bf16.mxu0 0
        %1956 = vmatmul.mubr.bf16.gmra.mrb[0].mxu0 %v1918
        %v1957 = vpop.f32.mrb[0].mxu0
        %v1958 = vadd.f32 0.0, %v1957
        %v1959 = vpop.f32.mrb[0].mxu0
        %v1960 = vpop.f32.mrb[0].mxu0
        %v1961 = vpop.f32.mrb[0].mxu0
        %1962 = vdwg.mxu0
        %1964 = vrot.lane.b32.xlu0 %v1862, 8
        %v1965 = vpop.permute.xlu0 %1964
        %1968 = vrot.lane.b32.xlu0 %v1910, 16
        %v1969 = vpop.permute.xlu0 %1968
        %1972 = vrot.lane.b32.xlu0 %v1958, 24
        %v1973 = vpop.permute.xlu0 %1972
        %v1975 = vsel %vm696, %v1814, %v1965
        %v1976 = vsel %vm1155, %v1975, %v1969
        %v1977 = vsel %vm1157, %v1976, %v1973
        %v1978 = vpack.c.bf16 %v1977, %v1977
        %s1979 = scalar_lea.vmem %s6, 16
        %v1980 = vld [vmem:[%s1979] sm:$0xf]
        %v1981 = vld [vmem:[%s1979 + $0x4] sm:$0xf]
        %v1982 = vld [vmem:[%s1979 + $0x8] sm:$0xf]
        %v1983 = vld [vmem:[%s1979 + $0xc] sm:$0xf]
        %s1984 = scalar_lea.vmem %s7, 1
        %v1985 = vld [vmem:[%s1984] sm:$0x1]
        %v1987 = vlaneseq
        %v1988 = vshrl.u32 %v1987, 7
        %v1989 = vsub.s32 0, %v1988
        %v1990 = vrot.slane %v1985, %v1989
        %v1996 = vunpack.c.l.b16 %v1980
        %v1997 = vunpack.c.l.b16 %v1981
        %v1998 = vunpack.c.l.b16 %v1982
        %v1999 = vunpack.c.l.b16 %v1983
        %v2000 = vpack.c.b16 %v1997, %v1996
        %v2001 = vpack.c.b16 %v1999, %v1998
        %v2005 = vsel %vm590, %v1978, 0
        %2007 = vmatprep.subr.bf16.mxu0 0
        %2008 = vmatpush1.bf16.msra.mxu0 %v2000
        %2009 = vmatprep.subr.bf16.mxu0 0
        %2010 = vmatpush1.bf16.msra.mxu0 %v2001
        %2011 = vmatprep.subr.bf16.mxu0 0
        %2012 = vmatpush1.bf16.msra.mxu0 0
        %2013 = vmatprep.subr.bf16.mxu0 0
        %2014 = vmatpush1.bf16.msra.mxu0 0
        %2015 = vmatprep.subr.bf16.mxu0 0
        %2016 = vmatpush1.bf16.msra.mxu0 0
        %2017 = vmatprep.subr.bf16.mxu0 0
        %2018 = vmatpush1.bf16.msra.mxu0 0
        %2019 = vmatprep.subr.bf16.mxu0 0
        %2020 = vmatpush1.bf16.msra.mxu0 0
        %2021 = vmatprep.subr.bf16.mxu0 0
        %2022 = vmatpush1.bf16.msra.mxu0 0
        %2023 = vmatprep.subr.bf16.mxu0 0
        %2024 = vmatpush1.bf16.msra.mxu0 0
        %2025 = vmatprep.subr.bf16.mxu0 0
        %2026 = vmatpush1.bf16.msra.mxu0 0
        %2027 = vmatprep.subr.bf16.mxu0 0
        %2028 = vmatpush1.bf16.msra.mxu0 0
        %2029 = vmatprep.subr.bf16.mxu0 0
        %2030 = vmatpush1.bf16.msra.mxu0 0
        %2031 = vmatprep.subr.bf16.mxu0 0
        %2032 = vmatpush1.bf16.msra.mxu0 0
        %2033 = vmatprep.subr.bf16.mxu0 0
        %2034 = vmatpush1.bf16.msra.mxu0 0
        %2035 = vmatprep.subr.bf16.mxu0 0
        %2036 = vmatpush1.bf16.msra.mxu0 0
        %2037 = vmatprep.subr.bf16.mxu0 0
        %2038 = vmatpush1.bf16.msra.mxu0 0
        %2039 = vmatprep.mubr.bf16.mxu0 0
        %2040 = vmatmul.mubr.bf16.gmra.mrb[0].mxu0 %v2005
        %v2041 = vpop.f32.mrb[0].mxu0
        %v2042 = vadd.f32 %v1990, %v2041
        %v2043 = vpop.f32.mrb[0].mxu0
        %v2044 = vpop.f32.mrb[0].mxu0
        %v2045 = vpop.f32.mrb[0].mxu0
        %2046 = vdwg.mxu0
        %v2047 = vadd.f32 %v1445, %v2042
        %s2048 = scalar_lea.vmem %s8, 1
        %v2049 = vld [vmem:[%s2048] sm:$0x1]
        %s2050 = scalar_lea.vmem %s9, 1
        %v2051 = vld [vmem:[%s2050] sm:$0x1]
        %v2052 = vsel %vm590, %v2047, 0.0
        %2053 = vadd.xlane.f32.xlu0 %v2052
        %v2054 = vpop.xlane.xlu0 %2053
        %v2055 = vmul.f32 %v2054, %v594
        %v2056 = vsub.f32 %v2047, %v2055
        %v2057 = vmul.f32 %v2056, %v2056
        %v2058 = vsel %vm590, %v2057, 0.0
        %2059 = vadd.xlane.f32.xlu0 %v2058
        %v2060 = vpop.xlane.xlu0 %2059
        %v2061 = vmul.f32 %v2060, %v594
        %v2062 = vadd.f32 %v2061, 1e-12
        %v2063 = vrsqrt.pop %v2062
        %v2064 = vmul.f32 %v2056, %v2063
        %v2066 = vlaneseq
        %v2067 = vshrl.u32 %v2066, 7
        %v2068 = vsub.s32 0, %v2067
        %v2069 = vrot.slane %v2049, %v2068
        %v2071 = vmul.f32 %v2064, %v2069
        %v2073 = vlaneseq
        %v2074 = vshrl.u32 %v2073, 7
        %v2075 = vsub.s32 0, %v2074
        %v2076 = vrot.slane %v2051, %v2075
        %v2078 = vadd.f32 %v2071, %v2076
        %v2079 = vpack.c.bf16 %v2078, %v2078
        %s2080 = scalar_lea.vmem %s10, 16
        %v2081 = vld [vmem:[%s2080] sm:$0xf]
        %v2082 = vld [vmem:[%s2080 + $0x4] sm:$0xf]
        %v2083 = vld [vmem:[%s2080 + $0x8] sm:$0xf]
        %v2084 = vld [vmem:[%s2080 + $0xc] sm:$0xf]
        %s2085 = scalar_lea.vmem %s11, 1
        %v2086 = vld [vmem:[%s2085] sm:$0x1]
        %v2088 = vlaneseq
        %v2089 = vshrl.u32 %v2088, 7
        %v2090 = vsub.s32 0, %v2089
        %v2091 = vrot.slane %v2086, %v2090
        %v2097 = vunpack.c.l.b16 %v2081
        %v2098 = vunpack.c.l.b16 %v2082
        %v2099 = vunpack.c.l.b16 %v2083
        %v2100 = vunpack.c.l.b16 %v2084
        %v2101 = vpack.c.b16 %v2098, %v2097
        %v2102 = vpack.c.b16 %v2100, %v2099
        %v2106 = vsel %vm590, %v2079, 0
        %2108 = vmatprep.subr.bf16.mxu0 0
        %2109 = vmatpush1.bf16.msra.mxu0 %v2101
        %2110 = vmatprep.subr.bf16.mxu0 0
        %2111 = vmatpush1.bf16.msra.mxu0 %v2102
        %2112 = vmatprep.subr.bf16.mxu0 0
        %2113 = vmatpush1.bf16.msra.mxu0 0
        %2114 = vmatprep.subr.bf16.mxu0 0
        %2115 = vmatpush1.bf16.msra.mxu0 0
        %2116 = vmatprep.subr.bf16.mxu0 0
        %2117 = vmatpush1.bf16.msra.mxu0 0
        %2118 = vmatprep.subr.bf16.mxu0 0
        %2119 = vmatpush1.bf16.msra.mxu0 0
        %2120 = vmatprep.subr.bf16.mxu0 0
        %2121 = vmatpush1.bf16.msra.mxu0 0
        %2122 = vmatprep.subr.bf16.mxu0 0
        %2123 = vmatpush1.bf16.msra.mxu0 0
        %2124 = vmatprep.subr.bf16.mxu0 0
        %2125 = vmatpush1.bf16.msra.mxu0 0
        %2126 = vmatprep.subr.bf16.mxu0 0
        %2127 = vmatpush1.bf16.msra.mxu0 0
        %2128 = vmatprep.subr.bf16.mxu0 0
        %2129 = vmatpush1.bf16.msra.mxu0 0
        %2130 = vmatprep.subr.bf16.mxu0 0
        %2131 = vmatpush1.bf16.msra.mxu0 0
        %2132 = vmatprep.subr.bf16.mxu0 0
        %2133 = vmatpush1.bf16.msra.mxu0 0
        %2134 = vmatprep.subr.bf16.mxu0 0
        %2135 = vmatpush1.bf16.msra.mxu0 0
        %2136 = vmatprep.subr.bf16.mxu0 0
        %2137 = vmatpush1.bf16.msra.mxu0 0
        %2138 = vmatprep.subr.bf16.mxu0 0
        %2139 = vmatpush1.bf16.msra.mxu0 0
        %2140 = vmatprep.mubr.bf16.mxu0 0
        %2141 = vmatmul.mubr.bf16.gmra.mrb[0].mxu0 %v2106
        %v2142 = vpop.f32.mrb[0].mxu0
        %v2143 = vadd.f32 %v2091, %v2142
        %v2144 = vpop.f32.mrb[0].mxu0
        %v2145 = vpop.f32.mrb[0].mxu0
        %v2146 = vpop.f32.mrb[0].mxu0
        %2147 = vdwg.mxu0
        %v2148 = vmul.f32 %v2143, 0.5
        %v2149 = vmul.f32 %v2143, 0.044715
        %v2150 = vmul.f32 %v2149, %v2143
        %v2151 = vmul.f32 %v2150, %v2143
        %v2152 = vadd.f32 %v2143, %v2151
        %v2153 = vmul.f32 %v2152, 0.7978846
        %v2154 = vtanh.pop %v2153
        %v2155 = vadd.f32 %v2154, 1.0
        %v2156 = vmul.f32 %v2148, %v2155
        %v2157 = vpack.c.bf16 %v2156, %v2156
        %s2158 = scalar_lea.vmem %s12, 32
        %v2159 = vld [vmem:[%s2158] sm:$0xf]
        %v2160 = vld [vmem:[%s2158 + $0x4] sm:$0xf]
        %v2161 = vld [vmem:[%s2158 + $0x8] sm:$0xf]
        %v2162 = vld [vmem:[%s2158 + $0xc] sm:$0xf]
        %v2163 = vld [vmem:[%s2158 + $0x10] sm:$0xf]
        %v2164 = vld [vmem:[%s2158 + $0x14] sm:$0xf]
        %v2165 = vld [vmem:[%s2158 + $0x18] sm:$0xf]
        %v2166 = vld [vmem:[%s2158 + $0x1c] sm:$0xf]
        %s2167 = scalar_lea.vmem %s13, 1
        %v2168 = vld [vmem:[%s2167] sm:$0x1]
        %v2170 = vlaneseq
        %v2171 = vshrl.u32 %v2170, 7
        %v2172 = vsub.s32 0, %v2171
        %v2173 = vrot.slane %v2168, %v2172
        %v2183 = vunpack.c.l.b16 %v2159
        %v2184 = vunpack.c.l.b16 %v2160
        %v2185 = vunpack.c.l.b16 %v2161
        %v2186 = vunpack.c.l.b16 %v2162
        %v2187 = vunpack.c.l.b16 %v2163
        %v2188 = vunpack.c.l.b16 %v2164
        %v2189 = vunpack.c.l.b16 %v2165
        %v2190 = vunpack.c.l.b16 %v2166
        %v2191 = vpack.c.b16 %v2184, %v2183
        %v2192 = vpack.c.b16 %v2186, %v2185
        %v2193 = vpack.c.b16 %v2188, %v2187
        %v2194 = vpack.c.b16 %v2190, %v2189
        %v2200 = vsel %vm1372, %v2157, 0
        %2202 = vmatprep.subr.bf16.mxu0 0
        %2203 = vmatpush1.bf16.msra.mxu0 %v2191
        %2204 = vmatprep.subr.bf16.mxu0 0
        %2205 = vmatpush1.bf16.msra.mxu0 %v2192
        %2206 = vmatprep.subr.bf16.mxu0 0
        %2207 = vmatpush1.bf16.msra.mxu0 %v2193
        %2208 = vmatprep.subr.bf16.mxu0 0
        %2209 = vmatpush1.bf16.msra.mxu0 %v2194
        %2210 = vmatprep.subr.bf16.mxu0 0
        %2211 = vmatpush1.bf16.msra.mxu0 0
        %2212 = vmatprep.subr.bf16.mxu0 0
        %2213 = vmatpush1.bf16.msra.mxu0 0
        %2214 = vmatprep.subr.bf16.mxu0 0
        %2215 = vmatpush1.bf16.msra.mxu0 0
        %2216 = vmatprep.subr.bf16.mxu0 0
        %2217 = vmatpush1.bf16.msra.mxu0 0
        %2218 = vmatprep.subr.bf16.mxu0 0
        %2219 = vmatpush1.bf16.msra.mxu0 0
        %2220 = vmatprep.subr.bf16.mxu0 0
        %2221 = vmatpush1.bf16.msra.mxu0 0
        %2222 = vmatprep.subr.bf16.mxu0 0
        %2223 = vmatpush1.bf16.msra.mxu0 0
        %2224 = vmatprep.subr.bf16.mxu0 0
        %2225 = vmatpush1.bf16.msra.mxu0 0
        %2226 = vmatprep.subr.bf16.mxu0 0
        %2227 = vmatpush1.bf16.msra.mxu0 0
        %2228 = vmatprep.subr.bf16.mxu0 0
        %2229 = vmatpush1.bf16.msra.mxu0 0
        %2230 = vmatprep.subr.bf16.mxu0 0
        %2231 = vmatpush1.bf16.msra.mxu0 0
        %2232 = vmatprep.subr.bf16.mxu0 0
        %2233 = vmatpush1.bf16.msra.mxu0 0
        %2234 = vmatprep.mubr.bf16.mxu0 0
        %2235 = vmatmul.mubr.bf16.gmra.mrb[0].mxu0 %v2200
        %v2236 = vpop.f32.mrb[0].mxu0
        %v2237 = vadd.f32 %v2173, %v2236
        %v2238 = vpop.f32.mrb[0].mxu0
        %v2239 = vpop.f32.mrb[0].mxu0
        %v2240 = vpop.f32.mrb[0].mxu0
        %2241 = vdwg.mxu0
        %v2242 = vadd.f32 %v2078, %v2237
        %s2243 = scalar_lea.vmem %s14, 1
        %v2244 = vld [vmem:[%s2243] sm:$0x1]
        %s2245 = scalar_lea.vmem %s15, 1
        %v2246 = vld [vmem:[%s2245] sm:$0x1]
        %v2247 = vsel %vm590, %v2242, 0.0
        %2248 = vadd.xlane.f32.xlu0 %v2247
        %v2249 = vpop.xlane.xlu0 %2248
        %v2250 = vmul.f32 %v2249, %v594
        %v2251 = vsub.f32 %v2242, %v2250
        %v2252 = vmul.f32 %v2251, %v2251
        %v2253 = vsel %vm590, %v2252, 0.0
        %2254 = vadd.xlane.f32.xlu0 %v2253
        %v2255 = vpop.xlane.xlu0 %2254
        %v2256 = vmul.f32 %v2255, %v594
        %v2257 = vadd.f32 %v2256, 1e-12
        %v2258 = vrsqrt.pop %v2257
        %v2259 = vmul.f32 %v2251, %v2258
        %v2261 = vlaneseq
        %v2262 = vshrl.u32 %v2261, 7
        %v2263 = vsub.s32 0, %v2262
        %v2264 = vrot.slane %v2244, %v2263
        %v2266 = vmul.f32 %v2259, %v2264
        %v2268 = vlaneseq
        %v2269 = vshrl.u32 %v2268, 7
        %v2270 = vsub.s32 0, %v2269
        %v2271 = vrot.slane %v2246, %v2270
        %v2273 = vadd.f32 %v2266, %v2271
        %v2274 = vpack.c.bf16 %v2273, %v2273
        %v2275 = vld [vmem:[%s16] sm:$0xf]
        %v2276 = vld [vmem:[%s16 + $0x4] sm:$0xf]
        %v2277 = vld [vmem:[%s16 + $0x8] sm:$0xf]
        %v2278 = vld [vmem:[%s16 + $0xc] sm:$0xf]
        %v2279 = vld [vmem:[%s17] sm:$0x1]
        %v2281 = vlaneseq
        %v2282 = vshrl.u32 %v2281, 7
        %v2283 = vsub.s32 0, %v2282
        %v2284 = vrot.slane %v2279, %v2283
        %v2290 = vunpack.c.l.b16 %v2275
        %v2291 = vunpack.c.l.b16 %v2276
        %v2292 = vunpack.c.l.b16 %v2277
        %v2293 = vunpack.c.l.b16 %v2278
        %v2294 = vpack.c.b16 %v2291, %v2290
        %v2295 = vpack.c.b16 %v2293, %v2292
        %v2299 = vsel %vm590, %v2274, 0
        %2301 = vmatprep.subr.bf16.mxu0 0
        %2302 = vmatpush1.bf16.msra.mxu0 %v2294
        %2303 = vmatprep.subr.bf16.mxu0 0
        %2304 = vmatpush1.bf16.msra.mxu0 %v2295
        %2305 = vmatprep.subr.bf16.mxu0 0
        %2306 = vmatpush1.bf16.msra.mxu0 0
        %2307 = vmatprep.subr.bf16.mxu0 0
        %2308 = vmatpush1.bf16.msra.mxu0 0
        %2309 = vmatprep.subr.bf16.mxu0 0
        %2310 = vmatpush1.bf16.msra.mxu0 0
        %2311 = vmatprep.subr.bf16.mxu0 0
        %2312 = vmatpush1.bf16.msra.mxu0 0
        %2313 = vmatprep.subr.bf16.mxu0 0
        %2314 = vmatpush1.bf16.msra.mxu0 0
        %2315 = vmatprep.subr.bf16.mxu0 0
        %2316 = vmatpush1.bf16.msra.mxu0 0
        %2317 = vmatprep.subr.bf16.mxu0 0
        %2318 = vmatpush1.bf16.msra.mxu0 0
        %2319 = vmatprep.subr.bf16.mxu0 0
        %2320 = vmatpush1.bf16.msra.mxu0 0
        %2321 = vmatprep.subr.bf16.mxu0 0
        %2322 = vmatpush1.bf16.msra.mxu0 0
        %2323 = vmatprep.subr.bf16.mxu0 0
        %2324 = vmatpush1.bf16.msra.mxu0 0
        %2325 = vmatprep.subr.bf16.mxu0 0
        %2326 = vmatpush1.bf16.msra.mxu0 0
        %2327 = vmatprep.subr.bf16.mxu0 0
        %2328 = vmatpush1.bf16.msra.mxu0 0
        %2329 = vmatprep.subr.bf16.mxu0 0
        %2330 = vmatpush1.bf16.msra.mxu0 0
        %2331 = vmatprep.subr.bf16.mxu0 0
        %2332 = vmatpush1.bf16.msra.mxu0 0
        %2333 = vmatprep.mubr.bf16.mxu0 0
        %2334 = vmatmul.mubr.bf16.gmra.mrb[0].mxu0 %v2299
        %v2335 = vpop.f32.mrb[0].mxu0
        %v2336 = vadd.f32 %v2284, %v2335
        %v2337 = vpop.f32.mrb[0].mxu0
        %v2338 = vpop.f32.mrb[0].mxu0
        %v2339 = vpop.f32.mrb[0].mxu0
        %2340 = vdwg.mxu0
        %2341 = vst [vmem:[%s577] sm:$0xff] %v2336
        %s2342 = sand.u32 %s428, 1
        %s2343 = scalar_lea.sflag [#allocation3], %s2342
        %s2344 = sand.u32 %s428, 1
        %s2345 = smul.addr %s2344, 8
        %s2346 = scalar_lea.vmem [#allocation2], %s2345
        // Predicated region
        $region93: #{_lambda_.1} parent=91 // pred_check
          %p2347 = pneg %p438
        $region94: #{_lambda_.1} parent=91 // pred_check_branch
          %2349 = sbr.rel (%p2347) target = $region96
        $region95: #{_lambda_.1} parent=91 // pred_region
          %s2351 = ssub.s32 128, 128
          %2352 = vsyncadd %s2343, %s2351
          %s2353 = smul.addr %s32, 128
          %s2354 = scalar_lea.hbm %s18, %s2353
          %s2356 = sshll.u32 %s2346, 4
          %s2357 = int_to_ptr.vmem [resolvable:$true] %s2356
          %2359 = dma.vmem_to_hbm [thread:$0]  %s2357, 128, %s2354, %s2343
        $region96: #{_lambda_.1} parent=91 // pred_fallthru
          _
      $region92: #{_lambda_.1} parent=5 // pred_fallthru
        _
      %p2360 = scmp.le.s32.totalorder 2, %s27
      // Predicated region
      $region97: #{_lambda_.1} parent=5 // pred_check
        %p2361 = pneg %p2360
      $region98: #{_lambda_.1} parent=5 // pred_check_branch
        %2363 = sbr.rel (%p2361) target = $region100
      $region99: #{_lambda_.1} parent=5 // pred_region
        %s2364 = ssub.s32 %s27, 2
        // Predicated region
        $region101: #{_lambda_.1} parent=99 // pred_check
          %p2365 = pneg %p444
        $region102: #{_lambda_.1} parent=99 // pred_check_branch
          %2367 = sbr.rel (%p2365) target = $region104
        $region103: #{_lambda_.1} parent=99 // pred_region
          %s2368 = sand.u32 %s429, 1
          %s2369 = scalar_lea.sflag [#allocation3], %s2368
          %s2370 = sand.u32 %s429, 1
          %s2371 = smul.addr %s2370, 8
          %s2372 = scalar_lea.vmem [#allocation2], %s2371
          %2373 = dma.done %s2369, 128
        $region104: #{_lambda_.1} parent=99 // pred_fallthru
          _
      $region100: #{_lambda_.1} parent=5 // pred_fallthru
        _
    $region6: #{_lambda_.1} parent=1 // loop_footer
      %s31 = sadd.s32 1, %s27
    $region7: #{_lambda_.1} parent=1 // loop_footer_branch
      %26 = sbr.rel target = $region3
    $region8: #{_lambda_.1} parent=1 // loop_exit
      _
    %2374 = vsyncpa [#allocation3], 1
    %s2375 = scalar_lea.sflag [#allocation3], 1
    %2376 = vsyncpa %s2375, 1

</llo_original>
